<compile_context>
chip_gen: v5e
topology: v5e:2x2
jax: 0.10.0
libtpu: 0.0.40
codegen_flags: <defaults>
</compile_context>

<pallas_src>
import functools
import math

import jax
import jax.numpy as jnp
import numpy as np
from jax import lax, random
from jax.experimental import pallas as pl
from jax.experimental.pallas import tpu as pltpu

# eval-mode BatchNorm with default running stats (mean=0, var=1, gamma=1, beta=0)
_BN_SCALE = 1.0 / math.sqrt(1.0 + 1e-5)

VOLUME_SIZE = 24  # cost_vol_type == 'even'


def _ceil_to(v, m):
    return ((v + m - 1) // m) * m


def _apply_act(y, act):
    if act == "relu":
        return jnp.maximum(y, 0.0)
    if act == "sigmoid":
        return jax.nn.sigmoid(y)
    return y


# ----------------------------- Pallas kernels -----------------------------
def _feat_chain_kernel(x_ref, w0_ref, b0_ref, w1_ref, w2_ref, w3_ref, b3_ref, o_ref):
    """Fused feature-extraction + preconv11 chain for one M tile.

    bf16 x (TM, 48) -> 160 -> 128 -> 64 -> 32, ReLU between layers, bias on the first
    and last layer.  All weights are VMEM resident; intermediates never touch HBM; the
    only HBM write is the final bf16 (TM, 32) tile.
    """
    h = jnp.dot(x_ref[...], w0_ref[...], preferred_element_type=jnp.float32)
    h = jnp.maximum(h + b0_ref[...], 0.0).astype(jnp.bfloat16)
    h = jnp.dot(h, w1_ref[...], preferred_element_type=jnp.float32)
    h = jnp.maximum(h, 0.0).astype(jnp.bfloat16)
    h = jnp.dot(h, w2_ref[...], preferred_element_type=jnp.float32)
    h = jnp.maximum(h, 0.0).astype(jnp.bfloat16)
    h = jnp.dot(h, w3_ref[...], preferred_element_type=jnp.float32)
    o_ref[...] = (h + b3_ref[...]).astype(o_ref.dtype)


def _gemm_bias_act_kernel(x_ref, w_ref, b_ref, o_ref, *, act):
    """Single-K-step fused GEMM: o = act(x @ w + b), f32 MXU accumulation, one store."""
    r = jnp.dot(x_ref[...], w_ref[...], preferred_element_type=jnp.float32) + b_ref[...]
    if act == "relu":
        r = jnp.maximum(r, 0.0)
    elif act == "sigmoid":
        r = jax.nn.sigmoid(r)
    o_ref[...] = r.astype(o_ref.dtype)


def pallas_matmul(x, w, b=None, act=None, out_dtype=jnp.float32):
    """y = act(x @ w + b); x:(M,K), w:(K,N), b:(N,).

    Pallas path only for large-M, single-K-step GEMMs (everything this model produces);
    tiny GEMMs fall back to plain jnp.dot (review: launch/pad overhead dominates there).
    """
    M, K = x.shape
    K2, N = w.shape
    assert K == K2
    if b is None:
        b = jnp.zeros((N,), jnp.float32)

    flops = 2 * M * K * N
    if M < 512 or flops < (64 << 20) or K > 2048:
        y = jnp.dot(x.astype(jnp.float32), w.astype(jnp.float32)) + b[None, :].astype(jnp.float32)
        return _apply_act(y, act).astype(out_dtype)

    xb = x.astype(jnp.bfloat16)
    wb = w.astype(jnp.bfloat16)

    # Single K step (K <= 2048 guaranteed above); even M-tile count for v7x 2-TC balance.
    Kp = _ceil_to(K, 8)
    nt = -(-M // 512)
    if nt > 1 and nt % 2:
        nt += 1
    TM = _ceil_to(-(-M // nt), 8)
    Mp = nt * TM
    Np = _ceil_to(max(N, 128), 128)           # lane-dense output
    TN = Np if Np <= 512 else 256             # 256-multiples suit v6e/v7x MXU width

    if (Mp, Kp) != (M, K):
        xb = jnp.pad(xb, ((0, Mp - M), (0, Kp - K)))
    if (Kp, Np) != (K, N):
        wb = jnp.pad(wb, ((0, Kp - K), (0, Np - N)))
    bp = b.astype(jnp.float32)
    if Np != N:
        bp = jnp.pad(bp, ((0, Np - N),))
    bp = bp.reshape(1, Np)

    grid = (Mp // TM, Np // TN)
    out = pl.pallas_call(
        functools.partial(_gemm_bias_act_kernel, act=act),
        out_shape=jax.ShapeDtypeStruct((Mp, Np), out_dtype),
        grid_spec=pltpu.PrefetchScalarGridSpec(
            num_scalar_prefetch=0,
            grid=grid,
            in_specs=[
                pl.BlockSpec((TM, Kp), lambda i, j: (i, 0)),
                pl.BlockSpec((Kp, TN), lambda i, j: (0, j)),
                pl.BlockSpec((1, TN), lambda i, j: (0, j)),
            ],
            out_specs=pl.BlockSpec((TM, TN), lambda i, j: (i, j)),
        ),
        compiler_params=pltpu.CompilerParams(
            dimension_semantics=("parallel", "parallel")),
    )(xb, wb, bp)
    if (Mp, Np) != (M, N):
        out = out[:M, :N]
    return out


def fused_feature_preconv(x, p):
    """feature_extraction stand-in (4x4/s4 conv, 3->160, ReLU) fused with the full
    preconv11 chain (1x1: 160->128->64->32) in ONE Pallas kernel.  Returns NCHW bf16."""
    N, C, H0, W0 = x.shape
    assert H0 % 4 == 0 and W0 % 4 == 0
    Ho, Wo = H0 // 4, W0 // 4
    # stride == kernel: im2col is a pure reshape/transpose, K order = (Cin, kh, kw).
    xm = (x.reshape(N, C, Ho, 4, Wo, 4)
            .transpose(0, 2, 4, 1, 3, 5)
            .reshape(N * Ho * Wo, C * 16)
            .astype(jnp.bfloat16))
    M = N * Ho * Wo
    TM = 512
    Mp = _ceil_to(M, TM)
    if Mp != M:
        xm = jnp.pad(xm, ((0, Mp - M), (0, 0)))

    w0 = p["fe"]["w"].reshape(160, C * 16).T.astype(jnp.bfloat16)   # (48, 160)
    b0 = p["fe"]["b"].reshape(1, 160).astype(jnp.float32)
    w1 = p["pc1"]["w"].reshape(128, 160).T.astype(jnp.bfloat16)     # (160, 128)
    w2 = p["pc2"]["w"].reshape(64, 128).T.astype(jnp.bfloat16)      # (128, 64)
    w3 = p["pc3"]["w"].reshape(32, 64).T.astype(jnp.bfloat16)       # (64, 32)
    b3 = p["pc3"]["b"].reshape(1, 32).astype(jnp.float32)

    out = pl.pallas_call(
        _feat_chain_kernel,
        out_shape=jax.ShapeDtypeStruct((Mp, 32), jnp.bfloat16),
        grid_spec=pltpu.PrefetchScalarGridSpec(
            num_scalar_prefetch=0,
            grid=(Mp // TM,),
            in_specs=[
                pl.BlockSpec((TM, C * 16), lambda i: (i, 0)),
                pl.BlockSpec((C * 16, 160), lambda i: (0, 0)),
                pl.BlockSpec((1, 160), lambda i: (0, 0)),
                pl.BlockSpec((160, 128), lambda i: (0, 0)),
                pl.BlockSpec((128, 64), lambda i: (0, 0)),
                pl.BlockSpec((64, 32), lambda i: (0, 0)),
                pl.BlockSpec((1, 32), lambda i: (0, 0)),
            ],
            out_specs=pl.BlockSpec((TM, 32), lambda i: (i, 0)),
        ),
        compiler_params=pltpu.CompilerParams(dimension_semantics=("parallel",)),
    )(xm, w0, b0, w1, w2, w3, b3)

    feat = out[:M].reshape(N, Ho, Wo, 32).transpose(0, 3, 1, 2)     # NCHW bf16
    return feat


# ----------------------------- XLA conv helpers -----------------------------
def _conv2d_xla(x, w, stride=1, pad=1):
    """3x3 2-D conv, NCHW, bf16 operands, f32 accumulation/output."""
    return lax.conv_general_dilated(
        x, w.astype(x.dtype),
        window_strides=(stride, stride),
        padding=[(pad, pad), (pad, pad)],
        dimension_numbers=("NCHW", "OIHW", "NCHW"),
        preferred_element_type=jnp.float32)


def conv3d_xla(x, w, b, stride, padding, act=None):
    out = lax.conv_general_dilated(
        x, w,
        window_strides=tuple(stride),
        padding=[(pp, pp) for pp in padding],
        dimension_numbers=("NCDHW", "OIDHW", "NCDHW"),
        preferred_element_type=jnp.float32)
    if b is not None:
        out = out + b.reshape((1, -1, 1, 1, 1))
    return _apply_act(out, act)


def conv_transpose3d_xla(x, w, b, stride, padding, act=None):
    """PyTorch ConvTranspose3d via input dilation + flipped, channel-swapped kernel."""
    k = w.shape[2:]
    w2 = jnp.swapaxes(jnp.flip(w, axis=(2, 3, 4)), 0, 1)
    out = lax.conv_general_dilated(
        x, w2,
        window_strides=(1, 1, 1),
        padding=[(k[i] - 1 - padding[i], k[i] - 1 - padding[i]) for i in range(3)],
        lhs_dilation=tuple(stride),
        dimension_numbers=("NCDHW", "OIDHW", "NCDHW"),
        preferred_element_type=jnp.float32)
    if b is not None:
        out = out + b.reshape((1, -1, 1, 1, 1))
    return _apply_act(out, act)


# ----------------------------- im2col helpers -----------------------------
def _im2col_nchw(x, kh, kw, sh, sw, ph, pw):
    B, C, H, W = x.shape
    Ho = (H + 2 * ph - kh) // sh + 1
    Wo = (W + 2 * pw - kw) // sw + 1
    xp = jnp.pad(x, ((0, 0), (0, 0), (ph, ph), (pw, pw)))
    cols = []
    for i in range(kh):
        for j in range(kw):
            cols.append(xp[:, :, i:i + (Ho - 1) * sh + 1:sh, j:j + (Wo - 1) * sw + 1:sw])
    patches = jnp.stack(cols, axis=2)                       # (B, C, kh*kw, Ho, Wo)
    xm = patches.transpose(0, 3, 4, 1, 2).reshape(B * Ho * Wo, C * kh * kw)
    return xm, Ho, Wo


def _im2col_keqs_nhwc(x, k):
    """stride == kernel im2col for NHWC input: pure reshape/transpose."""
    B, H, W, C = x.shape
    Ho, Wo = H // k, W // k
    xm = (x.reshape(B, Ho, k, Wo, k, C)
            .transpose(0, 1, 3, 5, 2, 4)
            .reshape(B * Ho * Wo, C * k * k))
    return xm, Ho, Wo


# ----------------------------- deterministic parameters -----------------------------
def make_params(key):
    ks = iter(random.split(key, 48))

    def nrm(shape, std):
        return (std * random.normal(next(ks), shape)).astype(jnp.float32)

    def conv(cout, cin, k, bias, bn):
        k = tuple(k)
        n = int(np.prod(k)) * cout
        w = nrm((cout, cin) + k, math.sqrt(2.0 / n))
        if bn:
            w = w * _BN_SCALE  # fold eval-mode BatchNorm scale; shift is 0
        bvec = nrm((cout,), 0.01) if bias else jnp.zeros((cout,), jnp.float32)
        return {"w": w, "b": bvec}

    def convT(cin, cout, k, bias, bn):
        k = tuple(k)
        w = nrm((cin, cout) + k, math.sqrt(2.0 / (cin * int(np.prod(k)))))
        if bn:
            w = w * _BN_SCALE
        bvec = nrm((cout,), 0.01) if bias else jnp.zeros((cout,), jnp.float32)
        return {"w": w, "b": bvec}

    def linear(cout, cin):
        return {"w": nrm((cout, cin), 1.0 / math.sqrt(cin)),
                "b": jnp.zeros((cout,), jnp.float32)}  # Linear bias zeroed in __init__

    p = {}
    # TODO(synk): feature_extraction(add_relus=True) source is not provided in the
    # reference; deterministic stand-in (stride-4 conv 3->160 + ReLU) reproducing its
    # interface (160-channel features at 1/4 input resolution).
    p["fe"] = conv(160, 3, (4, 4), bias=True, bn=False)
    # preconv11: convbn(160,128)+ReLU, convbn(128,64)+ReLU, Conv2d(64,32)
    p["pc1"] = conv(128, 160, (1, 1), bias=False, bn=True)
    p["pc2"] = conv(64, 128, (1, 1), bias=False, bn=True)
    p["pc3"] = conv(32, 64, (1, 1), bias=True, bn=False)
    # conv3d stack
    p["c3d1"] = conv(8, 1, (8, 3, 3), bias=False, bn=True)
    p["c3d2"] = conv(16, 8, (4, 3, 3), bias=False, bn=True)
    p["c3d3"] = conv(8, 16, (2, 3, 3), bias=False, bn=True)
    # volume11: convbn(8,1,1)+ReLU
    p["v11"] = conv(1, 8, (1, 1), bias=False, bn=True)
    # UNet encoder
    p["u1"] = conv(64, 24, (6, 6), bias=True, bn=False)
    p["u2"] = conv(128, 64, (4, 4), bias=True, bn=False)
    p["u3"] = conv(256, 128, (4, 4), bias=True, bn=False)
    p["l1"] = linear(512, 256 * 3 * 7)
    p["l2"] = linear(512, 512)
    p["l3"] = linear(128, 512)
    # UNet decoder
    p["d1t"] = convT(128, 64, (5, 5, 5), bias=False, bn=True)
    p["d1c"] = conv(64, 64, (2, 2, 2), bias=False, bn=True)
    p["d2t"] = convT(64, 32, (5, 5, 5), bias=False, bn=True)
    p["d2c"] = conv(32, 32, (2, 2, 2), bias=False, bn=True)
    p["d3t"] = convT(32, 16, (6, 6, 6), bias=False, bn=True)
    p["d3c"] = conv(16, 16, (3, 3, 3), bias=False, bn=True)
    p["d4t"] = convT(16, 8, (6, 6, 6), bias=False, bn=True)
    p["d4c"] = conv(8, 8, (3, 3, 3), bias=False, bn=True)
    p["d5t"] = convT(8, 1, (6, 6, 6), bias=True, bn=False)
    return p


# ----------------------------- Voxel2D forward -----------------------------
@jax.jit
def voxel2d_forward(p, L, R):
    B = L.shape[0]
    bf16 = jnp.bfloat16

    # ---- feature_extraction + preconv11: ONE fused Pallas kernel over both images ----
    x = jnp.concatenate([L, R], axis=0)                    # (2B, 3, H0, W0)
    feat = fused_feature_preconv(x, p)                     # (2B, 32, H, W) bf16 NCHW
    featL, featR = feat[:B], feat[B:]
    _, C, H, W = featL.shape                               # 32, 96, 208

    # ---- cost volume ('even': 24 shifts, j = 2*i), batched over disparity ----
    iters = VOLUME_SIZE
    wcol = jnp.arange(W)
    # TODO(synk): interweave_tensors source not provided; assumed channel interleave
    # (even channels = left, odd channels = right).
    xs = []
    for i in range(iters):
        j = 2 * i
        m = (wcol >= j).astype(bf16)
        a = featL * m                              # featL[:, :, :, j:] at cols >= j
        r = jnp.roll(featR, j, axis=3) * m         # featR[:, :, :, :-j] at cols >= j
        xs.append(jnp.stack([a, r], axis=2).reshape(B, 2 * C, H, W))
    X = jnp.stack(xs, axis=0)                      # (iters, B, 64, H, W) bf16

    mask = (wcol[None, :] >= 2 * jnp.arange(iters)[:, None]).astype(jnp.float32)  # (iters, W)

    def relu_mask_bf16(h, group):
        # one elementwise epilogue per conv: ReLU + re-zero cols < j + bf16 cast
        mk = jnp.repeat(mask, B * group, axis=0)[:, None, None, :]
        return (jnp.maximum(h, 0.0) * mk).astype(bf16)

    # The Conv3d stack has kd == stride_d everywhere, so each layer is a depth-blocked
    # 3x3 2-D conv; the depth axis is folded into the batch and the (Cin, kd) reduction
    # is folded into the 2-D channel axis (weights permuted to match the batch layout).
    w1r = p["c3d1"]["w"].reshape(8, 8, 3, 3)                                     # (Cout, kd*1, 3, 3)
    w2r = jnp.transpose(p["c3d2"]["w"], (0, 2, 1, 3, 4)).reshape(16, 32, 3, 3)   # (Cout, kd*Cin, 3, 3)
    w3r = jnp.transpose(p["c3d3"]["w"], (0, 2, 1, 3, 4)).reshape(8, 32, 3, 3)

    h = _conv2d_xla(X.reshape(iters * B * 8, 8, H, W), w1r)     # (iters*B*8, 8, H, W) f32
    h = relu_mask_bf16(h, 8)
    h = _conv2d_xla(h.reshape(iters * B * 2, 32, H, W), w2r)    # (iters*B*2, 16, H, W)
    h = relu_mask_bf16(h, 2)
    h = _conv2d_xla(h.reshape(iters * B, 32, H, W), w3r)        # (iters*B, 8, H, W)
    h = relu_mask_bf16(h, 1)

    # volume11: 1x1 conv (8 -> 1) + ReLU; K=8 contraction -> plain einsum; then re-zero
    # cols < j so the volume matches the per-shift writes of the reference.
    wv = p["v11"]["w"].reshape(8).astype(bf16)
    vol = jnp.einsum("nchw,c->nhw", h, wv, preferred_element_type=jnp.float32)
    vol = jnp.maximum(vol, 0.0) * jnp.repeat(mask, B, axis=0)[:, None, :]
    volume = vol.reshape(iters, B, H, W).transpose(1, 0, 2, 3)   # (B, 24, H, W) f32

    # ---- UNet encoder ----
    u1w = p["u1"]["w"].reshape(64, 24 * 36).T                    # (864, 64)
    x1, Ho1, Wo1 = _im2col_nchw(volume.astype(bf16), 6, 6, 2, 2, 2, 10)
    c1 = pallas_matmul(x1, u1w, p["u1"]["b"], "relu", out_dtype=jnp.float32)
    c1 = c1.reshape(B, Ho1, Wo1, 64)                             # NHWC f32

    x2, Ho2, Wo2 = _im2col_keqs_nhwc(c1, 4)
    u2w = p["u2"]["w"].reshape(128, 64 * 16).T
    c2 = _apply_act(jnp.dot(x2, u2w) + p["u2"]["b"][None, :], "relu").reshape(B, Ho2, Wo2, 128)

    x3, Ho3, Wo3 = _im2col_keqs_nhwc(c2, 4)
    u3w = p["u3"]["w"].reshape(256, 128 * 16).T
    c3 = _apply_act(jnp.dot(x3, u3w) + p["u3"]["b"][None, :], "relu").reshape(B, Ho3, Wo3, 256)

    flat = c3.transpose(0, 3, 1, 2).reshape(B, -1)               # NCHW flatten (matches torch)
    l1 = _apply_act(jnp.dot(flat, p["l1"]["w"].T) + p["l1"]["b"][None, :], "relu")
    l2 = _apply_act(jnp.dot(l1, p["l2"]["w"].T) + p["l2"]["b"][None, :], "relu")
    latent = _apply_act(jnp.dot(l2, p["l3"]["w"].T) + p["l3"]["b"][None, :], "relu")
    d = latent.reshape(B, 128, 1, 1, 1)

    # ---- UNet decoder (tiny; XLA convs, f32) ----
    d = conv_transpose3d_xla(d, p["d1t"]["w"], None, (2, 2, 2), (0, 0, 0), "relu")
    d = conv3d_xla(d, p["d1c"]["w"], None, (1, 1, 1), (0, 0, 0), "relu")
    d = conv_transpose3d_xla(d, p["d2t"]["w"], None, (2, 2, 2), (1, 1, 1), "relu")
    d = conv3d_xla(d, p["d2c"]["w"], None, (1, 1, 1), (0, 0, 0), "relu")
    d = conv_transpose3d_xla(d, p["d3t"]["w"], None, (2, 2, 2), (1, 1, 1), "relu")
    d = conv3d_xla(d, p["d3c"]["w"], None, (1, 1, 1), (0, 0, 0), "relu")
    d = conv_transpose3d_xla(d, p["d4t"]["w"], None, (2, 2, 2), (1, 1, 1), "relu")
    d = conv3d_xla(d, p["d4c"]["w"], None, (1, 1, 1), (0, 0, 0), "relu")
    d = conv_transpose3d_xla(d, p["d5t"]["w"], p["d5t"]["b"], (2, 2, 2), (2, 2, 2), "sigmoid")
    return d[:, 0]   # torch.squeeze(out, 1): (B, 64, 64, 64); module returns [out]


if __name__ == "__main__":
    key = random.PRNGKey(0)
    kp, kL, kR = random.split(key, 3)
    params = make_params(kp)

    # Smallest input consistent with the hard-coded Linear(256*3*7, ...) in the UNet:
    # the 1/4-resolution feature maps must be 96 x 208, i.e. stereo images of 384 x 832.
    L = random.normal(kL, (1, 3, 384, 832), jnp.float32)
    R = random.normal(kR, (1, 3, 384, 832), jnp.float32)

    out = jax.block_until_ready(voxel2d_forward(params, L, R))
    assert out.shape == (1, 64, 64, 64), out.shape
    assert bool(jnp.all(jnp.isfinite(out)))
    print("KERNEL_OK")
</pallas_src>

<mosaic_0001>
module attributes {stable_mosaic.version = 11 : i64} {
  func.func @_feat_chain_kernel(%arg0: i32, %arg1: memref<512x48xbf16, #tpu.memory_space<vmem>>, %arg2: memref<48x160xbf16, #tpu.memory_space<vmem>>, %arg3: memref<1x160xf32, #tpu.memory_space<vmem>>, %arg4: memref<160x128xbf16, #tpu.memory_space<vmem>>, %arg5: memref<128x64xbf16, #tpu.memory_space<vmem>>, %arg6: memref<64x32xbf16, #tpu.memory_space<vmem>>, %arg7: memref<1x32xf32, #tpu.memory_space<vmem>>, %arg8: memref<512x32xbf16, #tpu.memory_space<vmem>>) attributes {dimension_semantics = [#tpu.dimension_semantics<parallel>], iteration_bounds = array<i64: 78>, scalar_prefetch = 0 : i64, scratch_operands = 0 : i64, tpu.core_type = #tpu.core_type<tc>, window_params = [{transform_indices = @transform_0, window_bounds = array<i64: 512, 48>}, {pipeline_mode = #tpu.pipeline_mode<synchronous>, transform_indices = @transform_1, window_bounds = array<i64: 48, 160>}, {pipeline_mode = #tpu.pipeline_mode<synchronous>, transform_indices = @transform_2, window_bounds = array<i64: 1, 160>}, {pipeline_mode = #tpu.pipeline_mode<synchronous>, transform_indices = @transform_3, window_bounds = array<i64: 160, 128>}, {pipeline_mode = #tpu.pipeline_mode<synchronous>, transform_indices = @transform_4, window_bounds = array<i64: 128, 64>}, {pipeline_mode = #tpu.pipeline_mode<synchronous>, transform_indices = @transform_5, window_bounds = array<i64: 64, 32>}, {pipeline_mode = #tpu.pipeline_mode<synchronous>, transform_indices = @transform_6, window_bounds = array<i64: 1, 32>}, {transform_indices = @transform_7, window_bounds = array<i64: 512, 32>}]} {
    %c0 = arith.constant 0 : index
    %c0_0 = arith.constant 0 : index
    %0 = vector.load %arg1[%c0, %c0_0] : memref<512x48xbf16, #tpu.memory_space<vmem>>, vector<512x48xbf16>
    %c0_1 = arith.constant 0 : index
    %c0_2 = arith.constant 0 : index
    %1 = vector.load %arg2[%c0_1, %c0_2] : memref<48x160xbf16, #tpu.memory_space<vmem>>, vector<48x160xbf16>
    %cst = arith.constant dense<0.000000e+00> : vector<512x160xf32>
    %2 = tpu.matmul %0, %1, %cst {dimension_numbers = #tpu.dot_dimension_numbers<[1], [0], [0], [1], [0, 0, 1, 1], [], []>} : vector<512x48xbf16>, vector<48x160xbf16>, vector<512x160xf32> -> vector<512x160xf32>
    %c0_3 = arith.constant 0 : index
    %c0_4 = arith.constant 0 : index
    %3 = vector.load %arg3[%c0_3, %c0_4] : memref<1x160xf32, #tpu.memory_space<vmem>>, vector<1x160xf32>
    %4 = vector.broadcast %3 : vector<1x160xf32> to vector<512x160xf32>
    %5 = arith.addf %2, %4 : vector<512x160xf32>
    %cst_5 = arith.constant 0.000000e+00 : f32
    %6 = vector.broadcast %cst_5 : f32 to vector<512x160xf32>
    %7 = arith.maximumf %5, %6 : vector<512x160xf32>
    %8 = arith.truncf %7 : vector<512x160xf32> to vector<512x160xbf16>
    %c0_6 = arith.constant 0 : index
    %c0_7 = arith.constant 0 : index
    %9 = vector.load %arg4[%c0_6, %c0_7] : memref<160x128xbf16, #tpu.memory_space<vmem>>, vector<160x128xbf16>
    %cst_8 = arith.constant dense<0.000000e+00> : vector<512x128xf32>
    %10 = tpu.matmul %8, %9, %cst_8 {dimension_numbers = #tpu.dot_dimension_numbers<[1], [0], [0], [1], [0, 0, 1, 1], [], []>} : vector<512x160xbf16>, vector<160x128xbf16>, vector<512x128xf32> -> vector<512x128xf32>
    %cst_9 = arith.constant 0.000000e+00 : f32
    %11 = vector.broadcast %cst_9 : f32 to vector<512x128xf32>
    %12 = arith.maximumf %10, %11 : vector<512x128xf32>
    %13 = arith.truncf %12 : vector<512x128xf32> to vector<512x128xbf16>
    %c0_10 = arith.constant 0 : index
    %c0_11 = arith.constant 0 : index
    %14 = vector.load %arg5[%c0_10, %c0_11] : memref<128x64xbf16, #tpu.memory_space<vmem>>, vector<128x64xbf16>
    %cst_12 = arith.constant dense<0.000000e+00> : vector<512x64xf32>
    %15 = tpu.matmul %13, %14, %cst_12 {dimension_numbers = #tpu.dot_dimension_numbers<[1], [0], [0], [1], [0, 0, 1, 1], [], []>} : vector<512x128xbf16>, vector<128x64xbf16>, vector<512x64xf32> -> vector<512x64xf32>
    %cst_13 = arith.constant 0.000000e+00 : f32
    %16 = vector.broadcast %cst_13 : f32 to vector<512x64xf32>
    %17 = arith.maximumf %15, %16 : vector<512x64xf32>
    %18 = arith.truncf %17 : vector<512x64xf32> to vector<512x64xbf16>
    %c0_14 = arith.constant 0 : index
    %c0_15 = arith.constant 0 : index
    %19 = vector.load %arg6[%c0_14, %c0_15] : memref<64x32xbf16, #tpu.memory_space<vmem>>, vector<64x32xbf16>
    %cst_16 = arith.constant dense<0.000000e+00> : vector<512x32xf32>
    %20 = tpu.matmul %18, %19, %cst_16 {dimension_numbers = #tpu.dot_dimension_numbers<[1], [0], [0], [1], [0, 0, 1, 1], [], []>} : vector<512x64xbf16>, vector<64x32xbf16>, vector<512x32xf32> -> vector<512x32xf32>
    %c0_17 = arith.constant 0 : index
    %c0_18 = arith.constant 0 : index
    %21 = vector.load %arg7[%c0_17, %c0_18] : memref<1x32xf32, #tpu.memory_space<vmem>>, vector<1x32xf32>
    %22 = vector.broadcast %21 : vector<1x32xf32> to vector<512x32xf32>
    %23 = arith.addf %20, %22 : vector<512x32xf32>
    %24 = arith.truncf %23 : vector<512x32xf32> to vector<512x32xbf16>
    %c0_19 = arith.constant 0 : index
    %c0_20 = arith.constant 0 : index
    %25 = vector.load %arg8[%c0_19, %c0_20] : memref<512x32xbf16, #tpu.memory_space<vmem>>, vector<512x32xbf16>
    tpu.vector_store %arg8[%c0_19, %c0_20], %24 {strides = array<i32>} : memref<512x32xbf16, #tpu.memory_space<vmem>>, vector<512x32xbf16>,
    return
  }
  func.func @transform_0(%arg0: i32) -> (i32, i32) {
    %c0_i32 = arith.constant 0 : i32
    %c0_i32_0 = arith.constant 0 : i32
    return %arg0, %c0_i32 : i32, i32
  }
  func.func @transform_1(%arg0: i32) -> (i32, i32) {
    %c0_i32 = arith.constant 0 : i32
    %c0_i32_0 = arith.constant 0 : i32
    %c0_i32_1 = arith.constant 0 : i32
    return %c0_i32, %c0_i32_0 : i32, i32
  }
  func.func @transform_2(%arg0: i32) -> (i32, i32) {
    %c0_i32 = arith.constant 0 : i32
    %c0_i32_0 = arith.constant 0 : i32
    %c0_i32_1 = arith.constant 0 : i32
    return %c0_i32, %c0_i32_0 : i32, i32
  }
  func.func @transform_3(%arg0: i32) -> (i32, i32) {
    %c0_i32 = arith.constant 0 : i32
    %c0_i32_0 = arith.constant 0 : i32
    %c0_i32_1 = arith.constant 0 : i32
    return %c0_i32, %c0_i32_0 : i32, i32
  }
  func.func @transform_4(%arg0: i32) -> (i32, i32) {
    %c0_i32 = arith.constant 0 : i32
    %c0_i32_0 = arith.constant 0 : i32
    %c0_i32_1 = arith.constant 0 : i32
    return %c0_i32, %c0_i32_0 : i32, i32
  }
  func.func @transform_5(%arg0: i32) -> (i32, i32) {
    %c0_i32 = arith.constant 0 : i32
    %c0_i32_0 = arith.constant 0 : i32
    %c0_i32_1 = arith.constant 0 : i32
    return %c0_i32, %c0_i32_0 : i32, i32
  }
  func.func @transform_6(%arg0: i32) -> (i32, i32) {
    %c0_i32 = arith.constant 0 : i32
    %c0_i32_0 = arith.constant 0 : i32
    %c0_i32_1 = arith.constant 0 : i32
    return %c0_i32, %c0_i32_0 : i32, i32
  }
  func.func @transform_7(%arg0: i32) -> (i32, i32) {
    %c0_i32 = arith.constant 0 : i32
    %c0_i32_0 = arith.constant 0 : i32
    return %arg0, %c0_i32 : i32, i32
  }
}

module attributes {stable_mosaic.version = 11 : i64} {
  func.func @_gemm_bias_act_kernel(%arg0: i32, %arg1: i32, %arg2: memref<448x864xbf16, #tpu.memory_space<vmem>>, %arg3: memref<864x128xbf16, #tpu.memory_space<vmem>>, %arg4: memref<1x128xf32, #tpu.memory_space<vmem>>, %arg5: memref<448x128xf32, #tpu.memory_space<vmem>>) attributes {dimension_semantics = [#tpu.dimension_semantics<parallel>, #tpu.dimension_semantics<parallel>], iteration_bounds = array<i64: 12, 1>, scalar_prefetch = 0 : i64, scratch_operands = 0 : i64, tpu.core_type = #tpu.core_type<tc>, window_params = [{transform_indices = @transform_0, window_bounds = array<i64: 448, 864>}, {transform_indices = @transform_1, window_bounds = array<i64: 864, 128>}, {transform_indices = @transform_2, window_bounds = array<i64: 1, 128>}, {transform_indices = @transform_3, window_bounds = array<i64: 448, 128>}]} {
    %c0 = arith.constant 0 : index
    %c0_0 = arith.constant 0 : index
    %0 = vector.load %arg2[%c0, %c0_0] : memref<448x864xbf16, #tpu.memory_space<vmem>>, vector<448x864xbf16>
    %c0_1 = arith.constant 0 : index
    %c0_2 = arith.constant 0 : index
    %1 = vector.load %arg3[%c0_1, %c0_2] : memref<864x128xbf16, #tpu.memory_space<vmem>>, vector<864x128xbf16>
    %cst = arith.constant dense<0.000000e+00> : vector<448x128xf32>
    %2 = tpu.matmul %0, %1, %cst {dimension_numbers = #tpu.dot_dimension_numbers<[1], [0], [0], [1], [0, 0, 1, 1], [], []>} : vector<448x864xbf16>, vector<864x128xbf16>, vector<448x128xf32> -> vector<448x128xf32>
    %c0_3 = arith.constant 0 : index
    %c0_4 = arith.constant 0 : index
    %3 = vector.load %arg4[%c0_3, %c0_4] : memref<1x128xf32, #tpu.memory_space<vmem>>, vector<1x128xf32>
    %4 = vector.broadcast %3 : vector<1x128xf32> to vector<448x128xf32>
    %5 = arith.addf %2, %4 : vector<448x128xf32>
    %cst_5 = arith.constant 0.000000e+00 : f32
    %6 = vector.broadcast %cst_5 : f32 to vector<448x128xf32>
    %7 = arith.maximumf %5, %6 : vector<448x128xf32>
    %c0_6 = arith.constant 0 : index
    %c0_7 = arith.constant 0 : index
    %8 = vector.load %arg5[%c0_6, %c0_7] : memref<448x128xf32, #tpu.memory_space<vmem>>, vector<448x128xf32>
    tpu.vector_store %arg5[%c0_6, %c0_7], %7 {strides = array<i32>} : memref<448x128xf32, #tpu.memory_space<vmem>>, vector<448x128xf32>,
    return
  }
  func.func @transform_0(%arg0: i32, %arg1: i32) -> (i32, i32) {
    %c0_i32 = arith.constant 0 : i32
    %c0_i32_0 = arith.constant 0 : i32
    return %arg0, %c0_i32 : i32, i32
  }
  func.func @transform_1(%arg0: i32, %arg1: i32) -> (i32, i32) {
    %c0_i32 = arith.constant 0 : i32
    %c0_i32_0 = arith.constant 0 : i32
    return %c0_i32, %arg1 : i32, i32
  }
  func.func @transform_2(%arg0: i32, %arg1: i32) -> (i32, i32) {
    %c0_i32 = arith.constant 0 : i32
    %c0_i32_0 = arith.constant 0 : i32
    return %c0_i32, %arg1 : i32, i32
  }
  func.func @transform_3(%arg0: i32, %arg1: i32) -> (i32, i32) {
    %c0_i32 = arith.constant 0 : i32
    return %arg0, %arg1 : i32, i32
  }
}

</mosaic_0001>

<llo_original>
// kernel: voxel2d_forward.2
$region0: #{voxel2d_forward.2}
  #allocation0 [shape = 'u32[]', space=smem, size = 0x4, offset = 0x4, fixed_abs, tag = 'smem constant byte address 0x4 - core index']
  #allocation1 [shape = 'u32[72,128]{1,0:T(1,128)}', space=vmem, size = 0x9000, scoped, tag = 'internal scratch']
  %s0 = inlined_call_operand.vmem [shape: bf16[39936,48], index: 0, kind: input, shape index: {}]
  %s1 = inlined_call_operand.vmem [shape: bf16[48,160], index: 1, kind: input, shape index: {}]
  %s2 = inlined_call_operand.vmem [shape: f32[1,160], index: 2, kind: input, shape index: {}]
  %s3 = inlined_call_operand.vmem [shape: bf16[160,128], index: 3, kind: input, shape index: {}]
  %s4 = inlined_call_operand.vmem [shape: bf16[128,64], index: 4, kind: input, shape index: {}]
  %s5 = inlined_call_operand.vmem [shape: bf16[64,32], index: 5, kind: input, shape index: {}]
  %s6 = inlined_call_operand.vmem [shape: f32[1,32], index: 6, kind: input, shape index: {}]
  %s7 = inlined_call_operand.vmem [shape: bf16[39936,32], index: 7, kind: output, shape index: {}]
  %s8 = sld [smem:[#allocation0]]
  $region61: #{voxel2d_forward.2} parent=0
    _
  %s10 = ssub.s32 1, %s8
  %s11 = scalar_select 0, %s10, %s8
  loop: start=0, step=1, limit=80
  $region2: #{voxel2d_forward.2} parent=0 // loop_pre_header
    _
  $region3: #{voxel2d_forward.2} parent=0 // loop_header
    %s13 = sphi 0, %s17
    %p14 = scmp.ge.s32.totalorder %s13, 80
    %s23 = sphi 0, %s25
    %s26 = sphi 0, %s23
    %s27 = sphi 0, %s26
    %s43 = sphi 0, %s27
    %s47 = sphi 0, %s47
    %s49 = sphi 0, %s47
    %s50 = sphi 0, %s49
    %s64 = sphi 0, %s50
    %s68 = sphi 0, %s68
    %s70 = sphi 0, %s68
    %s71 = sphi 0, %s70
    %s85 = sphi 0, %s71
    %s89 = sphi 0, %s89
    %s91 = sphi 0, %s89
    %s92 = sphi 0, %s91
    %s106 = sphi 0, %s92
    %s110 = sphi 0, %s110
    %s112 = sphi 0, %s110
    %s113 = sphi 0, %s112
    %s127 = sphi 0, %s113
    %s131 = sphi 0, %s131
    %s133 = sphi 0, %s131
    %s134 = sphi 0, %s133
    %s148 = sphi 0, %s134
    %s152 = sphi 0, %s152
    %s154 = sphi 0, %s152
    %s155 = sphi 0, %s154
    %s169 = sphi 0, %s155
    %s175 = sphi 0, %s177
    %s178 = sphi 0, %s175
    %s179 = sphi 0, %s178
    %s195 = sphi 0, %s179
  $region4: #{voxel2d_forward.2} parent=0 // loop_header_branch
    %16 = sbr.rel (%p14) target = $region8
  $region5: #{voxel2d_forward.2} parent=0 // loop_body
    %s18 = ssub.s32 %s13, 1
    %s19 = ssub.s32 %s13, 2
    %s20 = sadd.s32 %s13, 1
    %s21 = ssub.s32 %s13, %s20
    %p22 = scmp.eq.s32.totalorder %s21, 0
    %s24 = sadd.s32 %s23, 1
    %s25 = scalar_select %p22, %s23, %s24
    %p28 = pneg %p22
    %p29 = scmp.eq.s32.totalorder %s13, 77
    %p30 = por %p28, %p29
    %p31 = scmp.ne.s32.totalorder %s23, %s26
    %p32 = scmp.eq.s32.totalorder %s13, 0
    %p33 = por %p31, %p32
    %p34 = scmp.ne.s32.totalorder %s23, %s26
    %p35 = scmp.eq.s32.totalorder %s18, 77
    %p36 = por %p34, %p35
    %p37 = scmp.ne.s32.totalorder %s26, %s27
    %p38 = scmp.eq.s32.totalorder %s18, 0
    %p39 = por %p37, %p38
    %p40 = scmp.ne.s32.totalorder %s26, %s27
    %p41 = scmp.eq.s32.totalorder %s19, 77
    %p42 = por %p40, %p41
    %p44 = scmp.ne.s32.totalorder %s27, %s43
    %p45 = scmp.eq.s32.totalorder %s19, 0
    %p46 = por %p44, %p45
    %s48 = sadd.s32 %s47, 1
    %p51 = scmp.eq.s32.totalorder %s13, 77
    %p52 = scmp.ne.s32.totalorder %s47, %s49
    %p53 = scmp.eq.s32.totalorder %s13, 0
    %p54 = por %p52, %p53
    %p55 = scmp.ne.s32.totalorder %s47, %s49
    %p56 = scmp.eq.s32.totalorder %s18, 77
    %p57 = por %p55, %p56
    %p58 = scmp.ne.s32.totalorder %s49, %s50
    %p59 = scmp.eq.s32.totalorder %s18, 0
    %p60 = por %p58, %p59
    %p61 = scmp.ne.s32.totalorder %s49, %s50
    %p62 = scmp.eq.s32.totalorder %s19, 77
    %p63 = por %p61, %p62
    %p65 = scmp.ne.s32.totalorder %s50, %s64
    %p66 = scmp.eq.s32.totalorder %s19, 0
    %p67 = por %p65, %p66
    %s69 = sadd.s32 %s68, 1
    %p72 = scmp.eq.s32.totalorder %s13, 77
    %p73 = scmp.ne.s32.totalorder %s68, %s70
    %p74 = scmp.eq.s32.totalorder %s13, 0
    %p75 = por %p73, %p74
    %p76 = scmp.ne.s32.totalorder %s68, %s70
    %p77 = scmp.eq.s32.totalorder %s18, 77
    %p78 = por %p76, %p77
    %p79 = scmp.ne.s32.totalorder %s70, %s71
    %p80 = scmp.eq.s32.totalorder %s18, 0
    %p81 = por %p79, %p80
    %p82 = scmp.ne.s32.totalorder %s70, %s71
    %p83 = scmp.eq.s32.totalorder %s19, 77
    %p84 = por %p82, %p83
    %p86 = scmp.ne.s32.totalorder %s71, %s85
    %p87 = scmp.eq.s32.totalorder %s19, 0
    %p88 = por %p86, %p87
    %s90 = sadd.s32 %s89, 1
    %p93 = scmp.eq.s32.totalorder %s13, 77
    %p94 = scmp.ne.s32.totalorder %s89, %s91
    %p95 = scmp.eq.s32.totalorder %s13, 0
    %p96 = por %p94, %p95
    %p97 = scmp.ne.s32.totalorder %s89, %s91
    %p98 = scmp.eq.s32.totalorder %s18, 77
    %p99 = por %p97, %p98
    %p100 = scmp.ne.s32.totalorder %s91, %s92
    %p101 = scmp.eq.s32.totalorder %s18, 0
    %p102 = por %p100, %p101
    %p103 = scmp.ne.s32.totalorder %s91, %s92
    %p104 = scmp.eq.s32.totalorder %s19, 77
    %p105 = por %p103, %p104
    %p107 = scmp.ne.s32.totalorder %s92, %s106
    %p108 = scmp.eq.s32.totalorder %s19, 0
    %p109 = por %p107, %p108
    %s111 = sadd.s32 %s110, 1
    %p114 = scmp.eq.s32.totalorder %s13, 77
    %p115 = scmp.ne.s32.totalorder %s110, %s112
    %p116 = scmp.eq.s32.totalorder %s13, 0
    %p117 = por %p115, %p116
    %p118 = scmp.ne.s32.totalorder %s110, %s112
    %p119 = scmp.eq.s32.totalorder %s18, 77
    %p120 = por %p118, %p119
    %p121 = scmp.ne.s32.totalorder %s112, %s113
    %p122 = scmp.eq.s32.totalorder %s18, 0
    %p123 = por %p121, %p122
    %p124 = scmp.ne.s32.totalorder %s112, %s113
    %p125 = scmp.eq.s32.totalorder %s19, 77
    %p126 = por %p124, %p125
    %p128 = scmp.ne.s32.totalorder %s113, %s127
    %p129 = scmp.eq.s32.totalorder %s19, 0
    %p130 = por %p128, %p129
    %s132 = sadd.s32 %s131, 1
    %p135 = scmp.eq.s32.totalorder %s13, 77
    %p136 = scmp.ne.s32.totalorder %s131, %s133
    %p137 = scmp.eq.s32.totalorder %s13, 0
    %p138 = por %p136, %p137
    %p139 = scmp.ne.s32.totalorder %s131, %s133
    %p140 = scmp.eq.s32.totalorder %s18, 77
    %p141 = por %p139, %p140
    %p142 = scmp.ne.s32.totalorder %s133, %s134
    %p143 = scmp.eq.s32.totalorder %s18, 0
    %p144 = por %p142, %p143
    %p145 = scmp.ne.s32.totalorder %s133, %s134
    %p146 = scmp.eq.s32.totalorder %s19, 77
    %p147 = por %p145, %p146
    %p149 = scmp.ne.s32.totalorder %s134, %s148
    %p150 = scmp.eq.s32.totalorder %s19, 0
    %p151 = por %p149, %p150
    %s153 = sadd.s32 %s152, 1
    %p156 = scmp.eq.s32.totalorder %s13, 77
    %p157 = scmp.ne.s32.totalorder %s152, %s154
    %p158 = scmp.eq.s32.totalorder %s13, 0
    %p159 = por %p157, %p158
    %p160 = scmp.ne.s32.totalorder %s152, %s154
    %p161 = scmp.eq.s32.totalorder %s18, 77
    %p162 = por %p160, %p161
    %p163 = scmp.ne.s32.totalorder %s154, %s155
    %p164 = scmp.eq.s32.totalorder %s18, 0
    %p165 = por %p163, %p164
    %p166 = scmp.ne.s32.totalorder %s154, %s155
    %p167 = scmp.eq.s32.totalorder %s19, 77
    %p168 = por %p166, %p167
    %p170 = scmp.ne.s32.totalorder %s155, %s169
    %p171 = scmp.eq.s32.totalorder %s19, 0
    %p172 = por %p170, %p171
    %s173 = ssub.s32 %s13, %s20
    %p174 = scmp.eq.s32.totalorder %s173, 0
    %s176 = sadd.s32 %s175, 1
    %s177 = scalar_select %p174, %s175, %s176
    %p180 = pneg %p174
    %p181 = scmp.eq.s32.totalorder %s13, 77
    %p182 = por %p180, %p181
    %p183 = scmp.ne.s32.totalorder %s175, %s178
    %p184 = scmp.eq.s32.totalorder %s13, 0
    %p185 = por %p183, %p184
    %p186 = scmp.ne.s32.totalorder %s175, %s178
    %p187 = scmp.eq.s32.totalorder %s18, 77
    %p188 = por %p186, %p187
    %p189 = scmp.ne.s32.totalorder %s178, %s179
    %p190 = scmp.eq.s32.totalorder %s18, 0
    %p191 = por %p189, %p190
    %p192 = scmp.ne.s32.totalorder %s178, %s179
    %p193 = scmp.eq.s32.totalorder %s19, 77
    %p194 = por %p192, %p193
    %p196 = scmp.ne.s32.totalorder %s179, %s195
    %p197 = scmp.eq.s32.totalorder %s19, 0
    %p198 = por %p196, %p197
    %p199 = scmp.le.s32.totalorder 1, %s13
    %p200 = scmp.lt.s32.totalorder %s13, 79
    %p201 = pnand %p199, %p200
    %p202 = pneg %p201
    // Predicated region
    $region9: #{voxel2d_forward.2} parent=5 // pred_check
      _
    $region10: #{voxel2d_forward.2} parent=5 // pred_check_branch
      %204 = sbr.rel (%p201) target = $region12
    $region11: #{voxel2d_forward.2} parent=5 // pred_region
      %s205 = ssub.s32 %s13, 1
      // Predicated region
      $region13: #{voxel2d_forward.2} parent=11 // pred_check
        %p206 = pneg %p60
      $region14: #{voxel2d_forward.2} parent=11 // pred_check_branch
        %208 = sbr.rel (%p206) target = $region16
      $region15: #{voxel2d_forward.2} parent=11 // pred_region
        _
      $region16: #{voxel2d_forward.2} parent=11 // pred_fallthru
        _
      // Predicated region
      $region17: #{voxel2d_forward.2} parent=11 // pred_check
        %p209 = pneg %p81
      $region18: #{voxel2d_forward.2} parent=11 // pred_check_branch
        %211 = sbr.rel (%p209) target = $region20
      $region19: #{voxel2d_forward.2} parent=11 // pred_region
        _
      $region20: #{voxel2d_forward.2} parent=11 // pred_fallthru
        _
      // Predicated region
      $region21: #{voxel2d_forward.2} parent=11 // pred_check
        %p212 = pneg %p102
      $region22: #{voxel2d_forward.2} parent=11 // pred_check_branch
        %214 = sbr.rel (%p212) target = $region24
      $region23: #{voxel2d_forward.2} parent=11 // pred_region
        _
      $region24: #{voxel2d_forward.2} parent=11 // pred_fallthru
        _
      // Predicated region
      $region25: #{voxel2d_forward.2} parent=11 // pred_check
        %p215 = pneg %p123
      $region26: #{voxel2d_forward.2} parent=11 // pred_check_branch
        %217 = sbr.rel (%p215) target = $region28
      $region27: #{voxel2d_forward.2} parent=11 // pred_region
        _
      $region28: #{voxel2d_forward.2} parent=11 // pred_fallthru
        _
      // Predicated region
      $region29: #{voxel2d_forward.2} parent=11 // pred_check
        %p218 = pneg %p144
      $region30: #{voxel2d_forward.2} parent=11 // pred_check_branch
        %220 = sbr.rel (%p218) target = $region32
      $region31: #{voxel2d_forward.2} parent=11 // pred_region
        _
      $region32: #{voxel2d_forward.2} parent=11 // pred_fallthru
        _
      // Predicated region
      $region33: #{voxel2d_forward.2} parent=11 // pred_check
        %p221 = pneg %p165
      $region34: #{voxel2d_forward.2} parent=11 // pred_check_branch
        %223 = sbr.rel (%p221) target = $region36
      $region35: #{voxel2d_forward.2} parent=11 // pred_region
        _
      $region36: #{voxel2d_forward.2} parent=11 // pred_fallthru
        _
    $region12: #{voxel2d_forward.2} parent=5 // pred_fallthru
      _
    %p224 = scmp.lt.s32.totalorder %s13, 78
    // Predicated region
    $region37: #{voxel2d_forward.2} parent=5 // pred_check
      %p225 = pneg %p224
    $region38: #{voxel2d_forward.2} parent=5 // pred_check_branch
      %227 = sbr.rel (%p225) target = $region40
    $region39: #{voxel2d_forward.2} parent=5 // pred_region
      // Predicated region
      $region41: #{voxel2d_forward.2} parent=39 // pred_check
        %p228 = pneg %p33
      $region42: #{voxel2d_forward.2} parent=39 // pred_check_branch
        %230 = sbr.rel (%p228) target = $region44
      $region43: #{voxel2d_forward.2} parent=39 // pred_region
        %s231 = smul.u32 64, %s13
        %p232 = scmp.lt.s32.totalorder %s231, 4991
        %s233 = scalar_select %p232, %s231, 4991
        %s234 = smul.addr %s233, 4
        %s235 = scalar_lea.vmem %s0, %s234
        %s236 = smul.u32 64, %s13
      $region44: #{voxel2d_forward.2} parent=39 // pred_fallthru
        _
    $region40: #{voxel2d_forward.2} parent=5 // pred_fallthru
      _
    %p237 = scmp.le.s32.totalorder 1, %s13
    %p238 = scmp.lt.s32.totalorder %s13, 79
    %p239 = pnand %p237, %p238
    %p240 = pneg %p239
    // Predicated region
    $region45: #{voxel2d_forward.2} parent=5 // pred_check
      _
    $region46: #{voxel2d_forward.2} parent=5 // pred_check_branch
      %242 = sbr.rel (%p239) target = $region48
    $region47: #{voxel2d_forward.2} parent=5 // pred_region
      %s243 = ssub.s32 %s13, 1
      %s244 = smul.u32 64, %s18
      %p245 = scmp.lt.s32.totalorder %s244, 4991
      %s246 = scalar_select %p245, %s244, 4991
      %s247 = smul.addr %s246, 4
      %s248 = scalar_lea.vmem %s0, %s247
      %p249 = pneg %p39
      %p250 = pneg %p36
      %p251 = pneg %p60
      %p252 = pneg %p57
      %p253 = pneg %p81
      %p254 = pneg %p78
      %p255 = pneg %p102
      %p256 = pneg %p99
      %p257 = pneg %p123
      %p258 = pneg %p120
      %p259 = pneg %p144
      %p260 = pneg %p141
      %p261 = pneg %p165
      %p262 = pneg %p162
      %p263 = pneg %p191
      %p264 = pneg %p188
      %s265 = smul.u32 64, %s18
      %p266 = scmp.lt.s32.totalorder %s265, 4991
      %s267 = scalar_select %p266, %s265, 4991
      %s268 = smul.addr %s267, 4
      %s269 = scalar_lea.vmem %s7, %s268
      %s270 = smul.u32 64, %s18
      %p271 = scmp.lt.s32.totalorder %s270, 4991
      %s272 = scalar_select %p271, %s270, 4991
      %s273 = smul.addr %s272, 4
      %s274 = scalar_lea.vmem %s0, %s273
      %s275 = smul.u32 64, %s18
      %s276 = smul.u32 64, %s18
      %p277 = scmp.lt.s32.totalorder %s276, 4991
      %s278 = scalar_select %p277, %s276, 4991
      %s279 = smul.addr %s278, 4
      %s280 = scalar_lea.vmem %s7, %s279
      %s281 = smul.u32 64, %s18
      %v283 = vld [vmem:[%s274] sm:$0xf]
      %v284 = vld [vmem:[%s274 + $0x4] sm:$0xf]
      %v285 = vld [vmem:[%s274 + $0x8] sm:$0xf]
      %v286 = vld [vmem:[%s274 + $0xc] sm:$0xf]
      %v287 = vld [vmem:[%s274 + $0x10] sm:$0xf]
      %v288 = vld [vmem:[%s274 + $0x14] sm:$0xf]
      %v289 = vld [vmem:[%s274 + $0x18] sm:$0xf]
      %v290 = vld [vmem:[%s274 + $0x1c] sm:$0xf]
      %v291 = vld [vmem:[%s274 + $0x20] sm:$0xf]
      %v292 = vld [vmem:[%s274 + $0x24] sm:$0xf]
      %v293 = vld [vmem:[%s274 + $0x28] sm:$0xf]
      %v294 = vld [vmem:[%s274 + $0x2c] sm:$0xf]
      %v295 = vld [vmem:[%s274 + $0x30] sm:$0xf]
      %v296 = vld [vmem:[%s274 + $0x34] sm:$0xf]
      %v297 = vld [vmem:[%s274 + $0x38] sm:$0xf]
      %v298 = vld [vmem:[%s274 + $0x3c] sm:$0xf]
      %v299 = vld [vmem:[%s274 + $0x40] sm:$0xf]
      %v300 = vld [vmem:[%s274 + $0x44] sm:$0xf]
      %v301 = vld [vmem:[%s274 + $0x48] sm:$0xf]
      %v302 = vld [vmem:[%s274 + $0x4c] sm:$0xf]
      %v303 = vld [vmem:[%s274 + $0x50] sm:$0xf]
      %v304 = vld [vmem:[%s274 + $0x54] sm:$0xf]
      %v305 = vld [vmem:[%s274 + $0x58] sm:$0xf]
      %v306 = vld [vmem:[%s274 + $0x5c] sm:$0xf]
      %v307 = vld [vmem:[%s274 + $0x60] sm:$0xf]
      %v308 = vld [vmem:[%s274 + $0x64] sm:$0xf]
      %v309 = vld [vmem:[%s274 + $0x68] sm:$0xf]
      %v310 = vld [vmem:[%s274 + $0x6c] sm:$0xf]
      %v311 = vld [vmem:[%s274 + $0x70] sm:$0xf]
      %v312 = vld [vmem:[%s274 + $0x74] sm:$0xf]
      %v313 = vld [vmem:[%s274 + $0x78] sm:$0xf]
      %v314 = vld [vmem:[%s274 + $0x7c] sm:$0xf]
      %v315 = vld [vmem:[%s274 + $0x80] sm:$0xf]
      %v316 = vld [vmem:[%s274 + $0x84] sm:$0xf]
      %v317 = vld [vmem:[%s274 + $0x88] sm:$0xf]
      %v318 = vld [vmem:[%s274 + $0x8c] sm:$0xf]
      %v319 = vld [vmem:[%s274 + $0x90] sm:$0xf]
      %v320 = vld [vmem:[%s274 + $0x94] sm:$0xf]
      %v321 = vld [vmem:[%s274 + $0x98] sm:$0xf]
      %v322 = vld [vmem:[%s274 + $0x9c] sm:$0xf]
      %v323 = vld [vmem:[%s274 + $0xa0] sm:$0xf]
      %v324 = vld [vmem:[%s274 + $0xa4] sm:$0xf]
      %v325 = vld [vmem:[%s274 + $0xa8] sm:$0xf]
      %v326 = vld [vmem:[%s274 + $0xac] sm:$0xf]
      %v327 = vld [vmem:[%s274 + $0xb0] sm:$0xf]
      %v328 = vld [vmem:[%s274 + $0xb4] sm:$0xf]
      %v329 = vld [vmem:[%s274 + $0xb8] sm:$0xf]
      %v330 = vld [vmem:[%s274 + $0xbc] sm:$0xf]
      %v331 = vld [vmem:[%s274 + $0xc0] sm:$0xf]
      %v332 = vld [vmem:[%s274 + $0xc4] sm:$0xf]
      %v333 = vld [vmem:[%s274 + $0xc8] sm:$0xf]
      %v334 = vld [vmem:[%s274 + $0xcc] sm:$0xf]
      %v335 = vld [vmem:[%s274 + $0xd0] sm:$0xf]
      %v336 = vld [vmem:[%s274 + $0xd4] sm:$0xf]
      %v337 = vld [vmem:[%s274 + $0xd8] sm:$0xf]
      %v338 = vld [vmem:[%s274 + $0xdc] sm:$0xf]
      %v339 = vld [vmem:[%s274 + $0xe0] sm:$0xf]
      %v340 = vld [vmem:[%s274 + $0xe4] sm:$0xf]
      %v341 = vld [vmem:[%s274 + $0xe8] sm:$0xf]
      %v342 = vld [vmem:[%s274 + $0xec] sm:$0xf]
      %v343 = vld [vmem:[%s274 + $0xf0] sm:$0xf]
      %v344 = vld [vmem:[%s274 + $0xf4] sm:$0xf]
      %v345 = vld [vmem:[%s274 + $0xf8] sm:$0xf]
      %v346 = vld [vmem:[%s274 + $0xfc] sm:$0xf]
      %v347 = vld [vmem:[%s1] sm:$0xff]
      %v348 = vld [vmem:[%s1 + $0x8] sm:$0xff]
      %v349 = vld [vmem:[%s1 + $0x10] sm:$0xff]
      %v350 = vld [vmem:[%s1 + $0x18] sm:$0xff]
      %v351 = vld [vmem:[%s1 + $0x20] sm:$0xff]
      %v352 = vld [vmem:[%s1 + $0x28] sm:$0xff]
      %v353 = vld [vmem:[%s2] sm:$0x3]
      %v355 = vperm.slane %v353, 0
      %v356 = vperm.slane %v353, 1
      %v423 = vunpack.c.l.b16 %v283
      %v424 = vunpack.c.l.b16 %v284
      %v425 = vunpack.c.l.b16 %v285
      %v426 = vunpack.c.l.b16 %v286
      %v427 = vunpack.c.l.b16 %v287
      %v428 = vunpack.c.l.b16 %v288
      %v429 = vunpack.c.l.b16 %v289
      %v430 = vunpack.c.l.b16 %v290
      %v431 = vunpack.c.l.b16 %v291
      %v432 = vunpack.c.l.b16 %v292
      %v433 = vunpack.c.l.b16 %v293
      %v434 = vunpack.c.l.b16 %v294
      %v435 = vunpack.c.l.b16 %v295
      %v436 = vunpack.c.l.b16 %v296
      %v437 = vunpack.c.l.b16 %v297
      %v438 = vunpack.c.l.b16 %v298
      %v439 = vunpack.c.l.b16 %v299
      %v440 = vunpack.c.l.b16 %v300
      %v441 = vunpack.c.l.b16 %v301
      %v442 = vunpack.c.l.b16 %v302
      %v443 = vunpack.c.l.b16 %v303
      %v444 = vunpack.c.l.b16 %v304
      %v445 = vunpack.c.l.b16 %v305
      %v446 = vunpack.c.l.b16 %v306
      %v447 = vunpack.c.l.b16 %v307
      %v448 = vunpack.c.l.b16 %v308
      %v449 = vunpack.c.l.b16 %v309
      %v450 = vunpack.c.l.b16 %v310
      %v451 = vunpack.c.l.b16 %v311
      %v452 = vunpack.c.l.b16 %v312
      %v453 = vunpack.c.l.b16 %v313
      %v454 = vunpack.c.l.b16 %v314
      %v455 = vunpack.c.l.b16 %v315
      %v456 = vunpack.c.l.b16 %v316
      %v457 = vunpack.c.l.b16 %v317
      %v458 = vunpack.c.l.b16 %v318
      %v459 = vunpack.c.l.b16 %v319
      %v460 = vunpack.c.l.b16 %v320
      %v461 = vunpack.c.l.b16 %v321
      %v462 = vunpack.c.l.b16 %v322
      %v463 = vunpack.c.l.b16 %v323
      %v464 = vunpack.c.l.b16 %v324
      %v465 = vunpack.c.l.b16 %v325
      %v466 = vunpack.c.l.b16 %v326
      %v467 = vunpack.c.l.b16 %v327
      %v468 = vunpack.c.l.b16 %v328
      %v469 = vunpack.c.l.b16 %v329
      %v470 = vunpack.c.l.b16 %v330
      %v471 = vunpack.c.l.b16 %v331
      %v472 = vunpack.c.l.b16 %v332
      %v473 = vunpack.c.l.b16 %v333
      %v474 = vunpack.c.l.b16 %v334
      %v475 = vunpack.c.l.b16 %v335
      %v476 = vunpack.c.l.b16 %v336
      %v477 = vunpack.c.l.b16 %v337
      %v478 = vunpack.c.l.b16 %v338
      %v479 = vunpack.c.l.b16 %v339
      %v480 = vunpack.c.l.b16 %v340
      %v481 = vunpack.c.l.b16 %v341
      %v482 = vunpack.c.l.b16 %v342
      %v483 = vunpack.c.l.b16 %v343
      %v484 = vunpack.c.l.b16 %v344
      %v485 = vunpack.c.l.b16 %v345
      %v486 = vunpack.c.l.b16 %v346
      %v487 = vpack.c.b16 %v424, %v423
      %v488 = vpack.c.b16 %v426, %v425
      %v489 = vpack.c.b16 %v428, %v427
      %v490 = vpack.c.b16 %v430, %v429
      %v491 = vpack.c.b16 %v432, %v431
      %v492 = vpack.c.b16 %v434, %v433
      %v493 = vpack.c.b16 %v436, %v435
      %v494 = vpack.c.b16 %v438, %v437
      %v495 = vpack.c.b16 %v440, %v439
      %v496 = vpack.c.b16 %v442, %v441
      %v497 = vpack.c.b16 %v444, %v443
      %v498 = vpack.c.b16 %v446, %v445
      %v499 = vpack.c.b16 %v448, %v447
      %v500 = vpack.c.b16 %v450, %v449
      %v501 = vpack.c.b16 %v452, %v451
      %v502 = vpack.c.b16 %v454, %v453
      %v503 = vpack.c.b16 %v456, %v455
      %v504 = vpack.c.b16 %v458, %v457
      %v505 = vpack.c.b16 %v460, %v459
      %v506 = vpack.c.b16 %v462, %v461
      %v507 = vpack.c.b16 %v464, %v463
      %v508 = vpack.c.b16 %v466, %v465
      %v509 = vpack.c.b16 %v468, %v467
      %v510 = vpack.c.b16 %v470, %v469
      %v511 = vpack.c.b16 %v472, %v471
      %v512 = vpack.c.b16 %v474, %v473
      %v513 = vpack.c.b16 %v476, %v475
      %v514 = vpack.c.b16 %v478, %v477
      %v515 = vpack.c.b16 %v480, %v479
      %v516 = vpack.c.b16 %v482, %v481
      %v517 = vpack.c.b16 %v484, %v483
      %v518 = vpack.c.b16 %v486, %v485
      %v525 = vunpack.c.l.b16 %v347
      %v526 = vunpack.c.h.b16 %v347
      %v527 = vunpack.c.l.b16 %v348
      %v528 = vunpack.c.h.b16 %v348
      %v529 = vunpack.c.l.b16 %v349
      %v530 = vunpack.c.h.b16 %v349
      %v531 = vunpack.c.l.b16 %v350
      %v532 = vunpack.c.h.b16 %v350
      %v533 = vunpack.c.l.b16 %v351
      %v534 = vunpack.c.h.b16 %v351
      %v535 = vunpack.c.l.b16 %v352
      %v536 = vunpack.c.h.b16 %v352
      %v537 = vpack.c.b16 %v527, %v525
      %v538 = vpack.c.b16 %v528, %v526
      %v539 = vpack.c.b16 %v531, %v529
      %v540 = vpack.c.b16 %v532, %v530
      %v541 = vpack.c.b16 %v535, %v533
      %v542 = vpack.c.b16 %v536, %v534
      %vm549 = vcmask 392192
      %v551 = vsel %vm549, %v487, 0
      %v554 = vsel %vm549, %v488, 0
      %v557 = vsel %vm549, %v489, 0
      %v560 = vsel %vm549, %v490, 0
      %v563 = vsel %vm549, %v491, 0
      %v566 = vsel %vm549, %v492, 0
      %v569 = vsel %vm549, %v493, 0
      %v572 = vsel %vm549, %v494, 0
      %v575 = vsel %vm549, %v495, 0
      %v578 = vsel %vm549, %v496, 0
      %v581 = vsel %vm549, %v497, 0
      %v584 = vsel %vm549, %v498, 0
      %v587 = vsel %vm549, %v499, 0
      %v590 = vsel %vm549, %v500, 0
      %v593 = vsel %vm549, %v501, 0
      %v596 = vsel %vm549, %v502, 0
      %v599 = vsel %vm549, %v503, 0
      %v602 = vsel %vm549, %v504, 0
      %v605 = vsel %vm549, %v505, 0
      %v608 = vsel %vm549, %v506, 0
      %v611 = vsel %vm549, %v507, 0
      %v614 = vsel %vm549, %v508, 0
      %v617 = vsel %vm549, %v509, 0
      %v620 = vsel %vm549, %v510, 0
      %v623 = vsel %vm549, %v511, 0
      %v626 = vsel %vm549, %v512, 0
      %v629 = vsel %vm549, %v513, 0
      %v632 = vsel %vm549, %v514, 0
      %v635 = vsel %vm549, %v515, 0
      %v638 = vsel %vm549, %v516, 0
      %v641 = vsel %vm549, %v517, 0
      %v644 = vsel %vm549, %v518, 0
      %646 = vmatpush.bf16.msra.mxu0 0
      %647 = vmatpush.bf16.msra.mxu0 0
      %648 = vmatpush.bf16.msra.mxu0 0
      %649 = vmatpush.bf16.msra.mxu0 0
      %650 = vmatpush.bf16.msra.mxu0 0
      %651 = vmatpush.bf16.msra.mxu0 %v541
      %652 = vmatpush.bf16.msra.mxu0 %v539
      %653 = vmatpush.bf16.msra.mxu0 %v537
      %654 = vmatmul.bf16.gmra.mxu0 %v551
      %v655 = vpop.f32.mrf.mxu0
      %v656 = vadd.f32 %v355, %v655
      %v657 = vpop.f32.mrf.mxu0
      %v658 = vadd.f32 %v355, %v657
      %659 = vmatmul.bf16.gmra.mxu0 %v554
      %v660 = vpop.f32.mrf.mxu0
      %v661 = vadd.f32 %v355, %v660
      %v662 = vpop.f32.mrf.mxu0
      %v663 = vadd.f32 %v355, %v662
      %664 = vmatmul.bf16.gmra.mxu0 %v557
      %v665 = vpop.f32.mrf.mxu0
      %v666 = vadd.f32 %v355, %v665
      %v667 = vpop.f32.mrf.mxu0
      %v668 = vadd.f32 %v355, %v667
      %669 = vmatmul.bf16.gmra.mxu0 %v560
      %v670 = vpop.f32.mrf.mxu0
      %v671 = vadd.f32 %v355, %v670
      %v672 = vpop.f32.mrf.mxu0
      %v673 = vadd.f32 %v355, %v672
      %674 = vmatmul.bf16.gmra.mxu0 %v563
      %v675 = vpop.f32.mrf.mxu0
      %v676 = vadd.f32 %v355, %v675
      %v677 = vpop.f32.mrf.mxu0
      %v678 = vadd.f32 %v355, %v677
      %679 = vmatmul.bf16.gmra.mxu0 %v566
      %v680 = vpop.f32.mrf.mxu0
      %v681 = vadd.f32 %v355, %v680
      %v682 = vpop.f32.mrf.mxu0
      %v683 = vadd.f32 %v355, %v682
      %684 = vmatmul.bf16.gmra.mxu0 %v569
      %v685 = vpop.f32.mrf.mxu0
      %v686 = vadd.f32 %v355, %v685
      %v687 = vpop.f32.mrf.mxu0
      %v688 = vadd.f32 %v355, %v687
      %689 = vmatmul.bf16.gmra.mxu0 %v572
      %v690 = vpop.f32.mrf.mxu0
      %v691 = vadd.f32 %v355, %v690
      %v692 = vpop.f32.mrf.mxu0
      %v693 = vadd.f32 %v355, %v692
      %694 = vmatmul.bf16.gmra.mxu0 %v575
      %v695 = vpop.f32.mrf.mxu0
      %v696 = vadd.f32 %v355, %v695
      %v697 = vpop.f32.mrf.mxu0
      %v698 = vadd.f32 %v355, %v697
      %699 = vmatmul.bf16.gmra.mxu0 %v578
      %v700 = vpop.f32.mrf.mxu0
      %v701 = vadd.f32 %v355, %v700
      %v702 = vpop.f32.mrf.mxu0
      %v703 = vadd.f32 %v355, %v702
      %704 = vmatmul.bf16.gmra.mxu0 %v581
      %v705 = vpop.f32.mrf.mxu0
      %v706 = vadd.f32 %v355, %v705
      %v707 = vpop.f32.mrf.mxu0
      %v708 = vadd.f32 %v355, %v707
      %709 = vmatmul.bf16.gmra.mxu0 %v584
      %v710 = vpop.f32.mrf.mxu0
      %v711 = vadd.f32 %v355, %v710
      %v712 = vpop.f32.mrf.mxu0
      %v713 = vadd.f32 %v355, %v712
      %714 = vmatmul.bf16.gmra.mxu0 %v587
      %v715 = vpop.f32.mrf.mxu0
      %v716 = vadd.f32 %v355, %v715
      %v717 = vpop.f32.mrf.mxu0
      %v718 = vadd.f32 %v355, %v717
      %719 = vmatmul.bf16.gmra.mxu0 %v590
      %v720 = vpop.f32.mrf.mxu0
      %v721 = vadd.f32 %v355, %v720
      %v722 = vpop.f32.mrf.mxu0
      %v723 = vadd.f32 %v355, %v722
      %724 = vmatmul.bf16.gmra.mxu0 %v593
      %v725 = vpop.f32.mrf.mxu0
      %v726 = vadd.f32 %v355, %v725
      %v727 = vpop.f32.mrf.mxu0
      %v728 = vadd.f32 %v355, %v727
      %729 = vmatmul.bf16.gmra.mxu0 %v596
      %v730 = vpop.f32.mrf.mxu0
      %v731 = vadd.f32 %v355, %v730
      %v732 = vpop.f32.mrf.mxu0
      %v733 = vadd.f32 %v355, %v732
      %734 = vmatmul.bf16.gmra.mxu0 %v599
      %v735 = vpop.f32.mrf.mxu0
      %v736 = vadd.f32 %v355, %v735
      %v737 = vpop.f32.mrf.mxu0
      %v738 = vadd.f32 %v355, %v737
      %739 = vmatmul.bf16.gmra.mxu0 %v602
      %v740 = vpop.f32.mrf.mxu0
      %v741 = vadd.f32 %v355, %v740
      %v742 = vpop.f32.mrf.mxu0
      %v743 = vadd.f32 %v355, %v742
      %744 = vmatmul.bf16.gmra.mxu0 %v605
      %v745 = vpop.f32.mrf.mxu0
      %v746 = vadd.f32 %v355, %v745
      %v747 = vpop.f32.mrf.mxu0
      %v748 = vadd.f32 %v355, %v747
      %749 = vmatmul.bf16.gmra.mxu0 %v608
      %v750 = vpop.f32.mrf.mxu0
      %v751 = vadd.f32 %v355, %v750
      %v752 = vpop.f32.mrf.mxu0
      %v753 = vadd.f32 %v355, %v752
      %754 = vmatmul.bf16.gmra.mxu0 %v611
      %v755 = vpop.f32.mrf.mxu0
      %v756 = vadd.f32 %v355, %v755
      %v757 = vpop.f32.mrf.mxu0
      %v758 = vadd.f32 %v355, %v757
      %759 = vmatmul.bf16.gmra.mxu0 %v614
      %v760 = vpop.f32.mrf.mxu0
      %v761 = vadd.f32 %v355, %v760
      %v762 = vpop.f32.mrf.mxu0
      %v763 = vadd.f32 %v355, %v762
      %764 = vmatmul.bf16.gmra.mxu0 %v617
      %v765 = vpop.f32.mrf.mxu0
      %v766 = vadd.f32 %v355, %v765
      %v767 = vpop.f32.mrf.mxu0
      %v768 = vadd.f32 %v355, %v767
      %769 = vmatmul.bf16.gmra.mxu0 %v620
      %v770 = vpop.f32.mrf.mxu0
      %v771 = vadd.f32 %v355, %v770
      %v772 = vpop.f32.mrf.mxu0
      %v773 = vadd.f32 %v355, %v772
      %774 = vmatmul.bf16.gmra.mxu0 %v623
      %v775 = vpop.f32.mrf.mxu0
      %v776 = vadd.f32 %v355, %v775
      %v777 = vpop.f32.mrf.mxu0
      %v778 = vadd.f32 %v355, %v777
      %779 = vmatmul.bf16.gmra.mxu0 %v626
      %v780 = vpop.f32.mrf.mxu0
      %v781 = vadd.f32 %v355, %v780
      %v782 = vpop.f32.mrf.mxu0
      %v783 = vadd.f32 %v355, %v782
      %784 = vmatmul.bf16.gmra.mxu0 %v629
      %v785 = vpop.f32.mrf.mxu0
      %v786 = vadd.f32 %v355, %v785
      %v787 = vpop.f32.mrf.mxu0
      %v788 = vadd.f32 %v355, %v787
      %789 = vmatmul.bf16.gmra.mxu0 %v632
      %v790 = vpop.f32.mrf.mxu0
      %v791 = vadd.f32 %v355, %v790
      %v792 = vpop.f32.mrf.mxu0
      %v793 = vadd.f32 %v355, %v792
      %794 = vmatmul.bf16.gmra.mxu0 %v635
      %v795 = vpop.f32.mrf.mxu0
      %v796 = vadd.f32 %v355, %v795
      %v797 = vpop.f32.mrf.mxu0
      %v798 = vadd.f32 %v355, %v797
      %799 = vmatmul.bf16.gmra.mxu0 %v638
      %v800 = vpop.f32.mrf.mxu0
      %v801 = vadd.f32 %v355, %v800
      %v802 = vpop.f32.mrf.mxu0
      %v803 = vadd.f32 %v355, %v802
      %804 = vmatmul.bf16.gmra.mxu0 %v641
      %v805 = vpop.f32.mrf.mxu0
      %v806 = vadd.f32 %v355, %v805
      %v807 = vpop.f32.mrf.mxu0
      %v808 = vadd.f32 %v355, %v807
      %809 = vmatmul.bf16.gmra.mxu0 %v644
      %v810 = vpop.f32.mrf.mxu0
      %v811 = vadd.f32 %v355, %v810
      %v812 = vpop.f32.mrf.mxu0
      %v813 = vadd.f32 %v355, %v812
      %814 = vdwg.mxu0
      %815 = vmatpush.bf16.msra.mxu0 0
      %816 = vmatpush.bf16.msra.mxu0 0
      %817 = vmatpush.bf16.msra.mxu0 0
      %818 = vmatpush.bf16.msra.mxu0 0
      %819 = vmatpush.bf16.msra.mxu0 0
      %820 = vmatpush.bf16.msra.mxu0 %v542
      %821 = vmatpush.bf16.msra.mxu0 %v540
      %822 = vmatpush.bf16.msra.mxu0 %v538
      %823 = vmatmul.bf16.gmra.mxu0 %v551
      %v824 = vpop.f32.mrf.mxu0
      %v825 = vadd.f32 %v356, %v824
      %v826 = vpop.f32.mrf.mxu0
      %v827 = vadd.f32 %v356, %v826
      %828 = vmatmul.bf16.gmra.mxu0 %v554
      %v829 = vpop.f32.mrf.mxu0
      %v830 = vadd.f32 %v356, %v829
      %v831 = vpop.f32.mrf.mxu0
      %v832 = vadd.f32 %v356, %v831
      %833 = vmatmul.bf16.gmra.mxu0 %v557
      %v834 = vpop.f32.mrf.mxu0
      %v835 = vadd.f32 %v356, %v834
      %v836 = vpop.f32.mrf.mxu0
      %v837 = vadd.f32 %v356, %v836
      %838 = vmatmul.bf16.gmra.mxu0 %v560
      %v839 = vpop.f32.mrf.mxu0
      %v840 = vadd.f32 %v356, %v839
      %v841 = vpop.f32.mrf.mxu0
      %v842 = vadd.f32 %v356, %v841
      %843 = vmatmul.bf16.gmra.mxu0 %v563
      %v844 = vpop.f32.mrf.mxu0
      %v845 = vadd.f32 %v356, %v844
      %v846 = vpop.f32.mrf.mxu0
      %v847 = vadd.f32 %v356, %v846
      %848 = vmatmul.bf16.gmra.mxu0 %v566
      %v849 = vpop.f32.mrf.mxu0
      %v850 = vadd.f32 %v356, %v849
      %v851 = vpop.f32.mrf.mxu0
      %v852 = vadd.f32 %v356, %v851
      %853 = vmatmul.bf16.gmra.mxu0 %v569
      %v854 = vpop.f32.mrf.mxu0
      %v855 = vadd.f32 %v356, %v854
      %v856 = vpop.f32.mrf.mxu0
      %v857 = vadd.f32 %v356, %v856
      %858 = vmatmul.bf16.gmra.mxu0 %v572
      %v859 = vpop.f32.mrf.mxu0
      %v860 = vadd.f32 %v356, %v859
      %v861 = vpop.f32.mrf.mxu0
      %v862 = vadd.f32 %v356, %v861
      %863 = vmatmul.bf16.gmra.mxu0 %v575
      %v864 = vpop.f32.mrf.mxu0
      %v865 = vadd.f32 %v356, %v864
      %v866 = vpop.f32.mrf.mxu0
      %v867 = vadd.f32 %v356, %v866
      %868 = vmatmul.bf16.gmra.mxu0 %v578
      %v869 = vpop.f32.mrf.mxu0
      %v870 = vadd.f32 %v356, %v869
      %v871 = vpop.f32.mrf.mxu0
      %v872 = vadd.f32 %v356, %v871
      %873 = vmatmul.bf16.gmra.mxu0 %v581
      %v874 = vpop.f32.mrf.mxu0
      %v875 = vadd.f32 %v356, %v874
      %v876 = vpop.f32.mrf.mxu0
      %v877 = vadd.f32 %v356, %v876
      %878 = vmatmul.bf16.gmra.mxu0 %v584
      %v879 = vpop.f32.mrf.mxu0
      %v880 = vadd.f32 %v356, %v879
      %v881 = vpop.f32.mrf.mxu0
      %v882 = vadd.f32 %v356, %v881
      %883 = vmatmul.bf16.gmra.mxu0 %v587
      %v884 = vpop.f32.mrf.mxu0
      %v885 = vadd.f32 %v356, %v884
      %v886 = vpop.f32.mrf.mxu0
      %v887 = vadd.f32 %v356, %v886
      %888 = vmatmul.bf16.gmra.mxu0 %v590
      %v889 = vpop.f32.mrf.mxu0
      %v890 = vadd.f32 %v356, %v889
      %v891 = vpop.f32.mrf.mxu0
      %v892 = vadd.f32 %v356, %v891
      %893 = vmatmul.bf16.gmra.mxu0 %v593
      %v894 = vpop.f32.mrf.mxu0
      %v895 = vadd.f32 %v356, %v894
      %v896 = vpop.f32.mrf.mxu0
      %v897 = vadd.f32 %v356, %v896
      %898 = vmatmul.bf16.gmra.mxu0 %v596
      %v899 = vpop.f32.mrf.mxu0
      %v900 = vadd.f32 %v356, %v899
      %v901 = vpop.f32.mrf.mxu0
      %v902 = vadd.f32 %v356, %v901
      %903 = vmatmul.bf16.gmra.mxu0 %v599
      %v904 = vpop.f32.mrf.mxu0
      %v905 = vadd.f32 %v356, %v904
      %v906 = vpop.f32.mrf.mxu0
      %v907 = vadd.f32 %v356, %v906
      %908 = vmatmul.bf16.gmra.mxu0 %v602
      %v909 = vpop.f32.mrf.mxu0
      %v910 = vadd.f32 %v356, %v909
      %v911 = vpop.f32.mrf.mxu0
      %v912 = vadd.f32 %v356, %v911
      %913 = vmatmul.bf16.gmra.mxu0 %v605
      %v914 = vpop.f32.mrf.mxu0
      %v915 = vadd.f32 %v356, %v914
      %v916 = vpop.f32.mrf.mxu0
      %v917 = vadd.f32 %v356, %v916
      %918 = vmatmul.bf16.gmra.mxu0 %v608
      %v919 = vpop.f32.mrf.mxu0
      %v920 = vadd.f32 %v356, %v919
      %v921 = vpop.f32.mrf.mxu0
      %v922 = vadd.f32 %v356, %v921
      %923 = vmatmul.bf16.gmra.mxu0 %v611
      %v924 = vpop.f32.mrf.mxu0
      %v925 = vadd.f32 %v356, %v924
      %v926 = vpop.f32.mrf.mxu0
      %v927 = vadd.f32 %v356, %v926
      %928 = vmatmul.bf16.gmra.mxu0 %v614
      %v929 = vpop.f32.mrf.mxu0
      %v930 = vadd.f32 %v356, %v929
      %v931 = vpop.f32.mrf.mxu0
      %v932 = vadd.f32 %v356, %v931
      %933 = vmatmul.bf16.gmra.mxu0 %v617
      %v934 = vpop.f32.mrf.mxu0
      %v935 = vadd.f32 %v356, %v934
      %v936 = vpop.f32.mrf.mxu0
      %v937 = vadd.f32 %v356, %v936
      %938 = vmatmul.bf16.gmra.mxu0 %v620
      %v939 = vpop.f32.mrf.mxu0
      %v940 = vadd.f32 %v356, %v939
      %v941 = vpop.f32.mrf.mxu0
      %v942 = vadd.f32 %v356, %v941
      %943 = vmatmul.bf16.gmra.mxu0 %v623
      %v944 = vpop.f32.mrf.mxu0
      %v945 = vadd.f32 %v356, %v944
      %v946 = vpop.f32.mrf.mxu0
      %v947 = vadd.f32 %v356, %v946
      %948 = vmatmul.bf16.gmra.mxu0 %v626
      %v949 = vpop.f32.mrf.mxu0
      %v950 = vadd.f32 %v356, %v949
      %v951 = vpop.f32.mrf.mxu0
      %v952 = vadd.f32 %v356, %v951
      %953 = vmatmul.bf16.gmra.mxu0 %v629
      %v954 = vpop.f32.mrf.mxu0
      %v955 = vadd.f32 %v356, %v954
      %v956 = vpop.f32.mrf.mxu0
      %v957 = vadd.f32 %v356, %v956
      %958 = vmatmul.bf16.gmra.mxu0 %v632
      %v959 = vpop.f32.mrf.mxu0
      %v960 = vadd.f32 %v356, %v959
      %v961 = vpop.f32.mrf.mxu0
      %v962 = vadd.f32 %v356, %v961
      %963 = vmatmul.bf16.gmra.mxu0 %v635
      %v964 = vpop.f32.mrf.mxu0
      %v965 = vadd.f32 %v356, %v964
      %v966 = vpop.f32.mrf.mxu0
      %v967 = vadd.f32 %v356, %v966
      %968 = vmatmul.bf16.gmra.mxu0 %v638
      %v969 = vpop.f32.mrf.mxu0
      %v970 = vadd.f32 %v356, %v969
      %v971 = vpop.f32.mrf.mxu0
      %v972 = vadd.f32 %v356, %v971
      %973 = vmatmul.bf16.gmra.mxu0 %v641
      %v974 = vpop.f32.mrf.mxu0
      %v975 = vadd.f32 %v356, %v974
      %v976 = vpop.f32.mrf.mxu0
      %v977 = vadd.f32 %v356, %v976
      %978 = vmatmul.bf16.gmra.mxu0 %v644
      %v979 = vpop.f32.mrf.mxu0
      %v980 = vadd.f32 %v356, %v979
      %v981 = vpop.f32.mrf.mxu0
      %v982 = vadd.f32 %v356, %v981
      %983 = vdwg.mxu0
      %v984 = vmax.f32 %v656, 0.0
      %v985 = vmax.f32 %v825, 0.0
      %v986 = vmax.f32 %v658, 0.0
      %v987 = vmax.f32 %v827, 0.0
      %v988 = vmax.f32 %v661, 0.0
      %v989 = vmax.f32 %v830, 0.0
      %v990 = vmax.f32 %v663, 0.0
      %v991 = vmax.f32 %v832, 0.0
      %v992 = vmax.f32 %v666, 0.0
      %v993 = vmax.f32 %v835, 0.0
      %v994 = vmax.f32 %v668, 0.0
      %v995 = vmax.f32 %v837, 0.0
      %v996 = vmax.f32 %v671, 0.0
      %v997 = vmax.f32 %v840, 0.0
      %v998 = vmax.f32 %v673, 0.0
      %v999 = vmax.f32 %v842, 0.0
      %v1000 = vmax.f32 %v676, 0.0
      %v1001 = vmax.f32 %v845, 0.0
      %v1002 = vmax.f32 %v678, 0.0
      %v1003 = vmax.f32 %v847, 0.0
      %v1004 = vmax.f32 %v681, 0.0
      %v1005 = vmax.f32 %v850, 0.0
      %v1006 = vmax.f32 %v683, 0.0
      %v1007 = vmax.f32 %v852, 0.0
      %v1008 = vmax.f32 %v686, 0.0
      %v1009 = vmax.f32 %v855, 0.0
      %v1010 = vmax.f32 %v688, 0.0
      %v1011 = vmax.f32 %v857, 0.0
      %v1012 = vmax.f32 %v691, 0.0
      %v1013 = vmax.f32 %v860, 0.0
      %v1014 = vmax.f32 %v693, 0.0
      %v1015 = vmax.f32 %v862, 0.0
      %v1016 = vmax.f32 %v696, 0.0
      %v1017 = vmax.f32 %v865, 0.0
      %v1018 = vmax.f32 %v698, 0.0
      %v1019 = vmax.f32 %v867, 0.0
      %v1020 = vmax.f32 %v701, 0.0
      %v1021 = vmax.f32 %v870, 0.0
      %v1022 = vmax.f32 %v703, 0.0
      %v1023 = vmax.f32 %v872, 0.0
      %v1024 = vmax.f32 %v706, 0.0
      %v1025 = vmax.f32 %v875, 0.0
      %v1026 = vmax.f32 %v708, 0.0
      %v1027 = vmax.f32 %v877, 0.0
      %v1028 = vmax.f32 %v711, 0.0
      %v1029 = vmax.f32 %v880, 0.0
      %v1030 = vmax.f32 %v713, 0.0
      %v1031 = vmax.f32 %v882, 0.0
      %v1032 = vmax.f32 %v716, 0.0
      %v1033 = vmax.f32 %v885, 0.0
      %v1034 = vmax.f32 %v718, 0.0
      %v1035 = vmax.f32 %v887, 0.0
      %v1036 = vmax.f32 %v721, 0.0
      %v1037 = vmax.f32 %v890, 0.0
      %v1038 = vmax.f32 %v723, 0.0
      %v1039 = vmax.f32 %v892, 0.0
      %v1040 = vmax.f32 %v726, 0.0
      %v1041 = vmax.f32 %v895, 0.0
      %v1042 = vmax.f32 %v728, 0.0
      %v1043 = vmax.f32 %v897, 0.0
      %v1044 = vmax.f32 %v731, 0.0
      %v1045 = vmax.f32 %v900, 0.0
      %v1046 = vmax.f32 %v733, 0.0
      %v1047 = vmax.f32 %v902, 0.0
      %v1048 = vmax.f32 %v736, 0.0
      %v1049 = vmax.f32 %v905, 0.0
      %v1050 = vmax.f32 %v738, 0.0
      %v1051 = vmax.f32 %v907, 0.0
      %v1052 = vmax.f32 %v741, 0.0
      %v1053 = vmax.f32 %v910, 0.0
      %v1054 = vmax.f32 %v743, 0.0
      %v1055 = vmax.f32 %v912, 0.0
      %v1056 = vmax.f32 %v746, 0.0
      %v1057 = vmax.f32 %v915, 0.0
      %v1058 = vmax.f32 %v748, 0.0
      %v1059 = vmax.f32 %v917, 0.0
      %v1060 = vmax.f32 %v751, 0.0
      %v1061 = vmax.f32 %v920, 0.0
      %v1062 = vmax.f32 %v753, 0.0
      %v1063 = vmax.f32 %v922, 0.0
      %v1064 = vmax.f32 %v756, 0.0
      %v1065 = vmax.f32 %v925, 0.0
      %v1066 = vmax.f32 %v758, 0.0
      %v1067 = vmax.f32 %v927, 0.0
      %v1068 = vmax.f32 %v761, 0.0
      %v1069 = vmax.f32 %v930, 0.0
      %v1070 = vmax.f32 %v763, 0.0
      %v1071 = vmax.f32 %v932, 0.0
      %v1072 = vmax.f32 %v766, 0.0
      %v1073 = vmax.f32 %v935, 0.0
      %v1074 = vmax.f32 %v768, 0.0
      %v1075 = vmax.f32 %v937, 0.0
      %v1076 = vmax.f32 %v771, 0.0
      %v1077 = vmax.f32 %v940, 0.0
      %v1078 = vmax.f32 %v773, 0.0
      %v1079 = vmax.f32 %v942, 0.0
      %v1080 = vmax.f32 %v776, 0.0
      %v1081 = vmax.f32 %v945, 0.0
      %v1082 = vmax.f32 %v778, 0.0
      %v1083 = vmax.f32 %v947, 0.0
      %v1084 = vmax.f32 %v781, 0.0
      %v1085 = vmax.f32 %v950, 0.0
      %v1086 = vmax.f32 %v783, 0.0
      %v1087 = vmax.f32 %v952, 0.0
      %v1088 = vmax.f32 %v786, 0.0
      %v1089 = vmax.f32 %v955, 0.0
      %v1090 = vmax.f32 %v788, 0.0
      %v1091 = vmax.f32 %v957, 0.0
      %v1092 = vmax.f32 %v791, 0.0
      %v1093 = vmax.f32 %v960, 0.0
      %v1094 = vmax.f32 %v793, 0.0
      %v1095 = vmax.f32 %v962, 0.0
      %v1096 = vmax.f32 %v796, 0.0
      %v1097 = vmax.f32 %v965, 0.0
      %v1098 = vmax.f32 %v798, 0.0
      %v1099 = vmax.f32 %v967, 0.0
      %v1100 = vmax.f32 %v801, 0.0
      %v1101 = vmax.f32 %v970, 0.0
      %v1102 = vmax.f32 %v803, 0.0
      %v1103 = vmax.f32 %v972, 0.0
      %v1104 = vmax.f32 %v806, 0.0
      %v1105 = vmax.f32 %v975, 0.0
      %v1106 = vmax.f32 %v808, 0.0
      %v1107 = vmax.f32 %v977, 0.0
      %v1108 = vmax.f32 %v811, 0.0
      %v1109 = vmax.f32 %v980, 0.0
      %v1110 = vmax.f32 %v813, 0.0
      %v1111 = vmax.f32 %v982, 0.0
      %v1112 = vpack.c.bf16 %v986, %v984
      %v1113 = vpack.c.bf16 %v987, %v985
      %v1114 = vpack.c.bf16 %v990, %v988
      %v1115 = vpack.c.bf16 %v991, %v989
      %v1116 = vpack.c.bf16 %v994, %v992
      %v1117 = vpack.c.bf16 %v995, %v993
      %v1118 = vpack.c.bf16 %v998, %v996
      %v1119 = vpack.c.bf16 %v999, %v997
      %v1120 = vpack.c.bf16 %v1002, %v1000
      %v1121 = vpack.c.bf16 %v1003, %v1001
      %v1122 = vpack.c.bf16 %v1006, %v1004
      %v1123 = vpack.c.bf16 %v1007, %v1005
      %v1124 = vpack.c.bf16 %v1010, %v1008
      %v1125 = vpack.c.bf16 %v1011, %v1009
      %v1126 = vpack.c.bf16 %v1014, %v1012
      %v1127 = vpack.c.bf16 %v1015, %v1013
      %v1128 = vpack.c.bf16 %v1018, %v1016
      %v1129 = vpack.c.bf16 %v1019, %v1017
      %v1130 = vpack.c.bf16 %v1022, %v1020
      %v1131 = vpack.c.bf16 %v1023, %v1021
      %v1132 = vpack.c.bf16 %v1026, %v1024
      %v1133 = vpack.c.bf16 %v1027, %v1025
      %v1134 = vpack.c.bf16 %v1030, %v1028
      %v1135 = vpack.c.bf16 %v1031, %v1029
      %v1136 = vpack.c.bf16 %v1034, %v1032
      %v1137 = vpack.c.bf16 %v1035, %v1033
      %v1138 = vpack.c.bf16 %v1038, %v1036
      %v1139 = vpack.c.bf16 %v1039, %v1037
      %v1140 = vpack.c.bf16 %v1042, %v1040
      %v1141 = vpack.c.bf16 %v1043, %v1041
      %v1142 = vpack.c.bf16 %v1046, %v1044
      %v1143 = vpack.c.bf16 %v1047, %v1045
      %v1144 = vpack.c.bf16 %v1050, %v1048
      %v1145 = vpack.c.bf16 %v1051, %v1049
      %v1146 = vpack.c.bf16 %v1054, %v1052
      %v1147 = vpack.c.bf16 %v1055, %v1053
      %v1148 = vpack.c.bf16 %v1058, %v1056
      %v1149 = vpack.c.bf16 %v1059, %v1057
      %v1150 = vpack.c.bf16 %v1062, %v1060
      %v1151 = vpack.c.bf16 %v1063, %v1061
      %v1152 = vpack.c.bf16 %v1066, %v1064
      %v1153 = vpack.c.bf16 %v1067, %v1065
      %v1154 = vpack.c.bf16 %v1070, %v1068
      %v1155 = vpack.c.bf16 %v1071, %v1069
      %v1156 = vpack.c.bf16 %v1074, %v1072
      %v1157 = vpack.c.bf16 %v1075, %v1073
      %v1158 = vpack.c.bf16 %v1078, %v1076
      %v1159 = vpack.c.bf16 %v1079, %v1077
      %v1160 = vpack.c.bf16 %v1082, %v1080
      %v1161 = vpack.c.bf16 %v1083, %v1081
      %v1162 = vpack.c.bf16 %v1086, %v1084
      %v1163 = vpack.c.bf16 %v1087, %v1085
      %v1164 = vpack.c.bf16 %v1090, %v1088
      %v1165 = vpack.c.bf16 %v1091, %v1089
      %v1166 = vpack.c.bf16 %v1094, %v1092
      %v1167 = vpack.c.bf16 %v1095, %v1093
      %v1168 = vpack.c.bf16 %v1098, %v1096
      %v1169 = vpack.c.bf16 %v1099, %v1097
      %v1170 = vpack.c.bf16 %v1102, %v1100
      %v1171 = vpack.c.bf16 %v1103, %v1101
      %v1172 = vpack.c.bf16 %v1106, %v1104
      %v1173 = vpack.c.bf16 %v1107, %v1105
      %v1174 = vpack.c.bf16 %v1110, %v1108
      %v1175 = vpack.c.bf16 %v1111, %v1109
      %v1176 = vld [vmem:[%s3] sm:$0xf]
      %v1177 = vld [vmem:[%s3 + $0x4] sm:$0xf]
      %v1178 = vld [vmem:[%s3 + $0x8] sm:$0xf]
      %v1179 = vld [vmem:[%s3 + $0xc] sm:$0xf]
      %v1180 = vld [vmem:[%s3 + $0x10] sm:$0xf]
      %v1181 = vld [vmem:[%s3 + $0x14] sm:$0xf]
      %v1182 = vld [vmem:[%s3 + $0x18] sm:$0xf]
      %v1183 = vld [vmem:[%s3 + $0x1c] sm:$0xf]
      %v1184 = vld [vmem:[%s3 + $0x20] sm:$0xf]
      %v1185 = vld [vmem:[%s3 + $0x24] sm:$0xf]
      %v1186 = vld [vmem:[%s3 + $0x28] sm:$0xf]
      %v1187 = vld [vmem:[%s3 + $0x2c] sm:$0xf]
      %v1188 = vld [vmem:[%s3 + $0x30] sm:$0xf]
      %v1189 = vld [vmem:[%s3 + $0x34] sm:$0xf]
      %v1190 = vld [vmem:[%s3 + $0x38] sm:$0xf]
      %v1191 = vld [vmem:[%s3 + $0x3c] sm:$0xf]
      %v1192 = vld [vmem:[%s3 + $0x40] sm:$0xf]
      %v1193 = vld [vmem:[%s3 + $0x44] sm:$0xf]
      %v1194 = vld [vmem:[%s3 + $0x48] sm:$0xf]
      %v1195 = vld [vmem:[%s3 + $0x4c] sm:$0xf]
      %v1216 = vunpack.c.l.b16 %v1176
      %v1217 = vunpack.c.l.b16 %v1177
      %v1218 = vunpack.c.l.b16 %v1178
      %v1219 = vunpack.c.l.b16 %v1179
      %v1220 = vunpack.c.l.b16 %v1180
      %v1221 = vunpack.c.l.b16 %v1181
      %v1222 = vunpack.c.l.b16 %v1182
      %v1223 = vunpack.c.l.b16 %v1183
      %v1224 = vunpack.c.l.b16 %v1184
      %v1225 = vunpack.c.l.b16 %v1185
      %v1226 = vunpack.c.l.b16 %v1186
      %v1227 = vunpack.c.l.b16 %v1187
      %v1228 = vunpack.c.l.b16 %v1188
      %v1229 = vunpack.c.l.b16 %v1189
      %v1230 = vunpack.c.l.b16 %v1190
      %v1231 = vunpack.c.l.b16 %v1191
      %v1232 = vunpack.c.l.b16 %v1192
      %v1233 = vunpack.c.l.b16 %v1193
      %v1234 = vunpack.c.l.b16 %v1194
      %v1235 = vunpack.c.l.b16 %v1195
      %v1236 = vpack.c.b16 %v1217, %v1216
      %v1237 = vpack.c.b16 %v1219, %v1218
      %v1238 = vpack.c.b16 %v1221, %v1220
      %v1239 = vpack.c.b16 %v1223, %v1222
      %v1240 = vpack.c.b16 %v1225, %v1224
      %v1241 = vpack.c.b16 %v1227, %v1226
      %v1242 = vpack.c.b16 %v1229, %v1228
      %v1243 = vpack.c.b16 %v1231, %v1230
      %v1244 = vpack.c.b16 %v1233, %v1232
      %v1245 = vpack.c.b16 %v1235, %v1234
      %vm1256 = vcmask 261120
      %v1258 = vsel %vm1256, %v1113, 0
      %v1261 = vsel %vm1256, %v1115, 0
      %v1264 = vsel %vm1256, %v1117, 0
      %v1267 = vsel %vm1256, %v1119, 0
      %v1270 = vsel %vm1256, %v1121, 0
      %v1273 = vsel %vm1256, %v1123, 0
      %v1276 = vsel %vm1256, %v1125, 0
      %v1279 = vsel %vm1256, %v1127, 0
      %v1282 = vsel %vm1256, %v1129, 0
      %v1285 = vsel %vm1256, %v1131, 0
      %v1288 = vsel %vm1256, %v1133, 0
      %v1291 = vsel %vm1256, %v1135, 0
      %v1294 = vsel %vm1256, %v1137, 0
      %v1297 = vsel %vm1256, %v1139, 0
      %v1300 = vsel %vm1256, %v1141, 0
      %v1303 = vsel %vm1256, %v1143, 0
      %v1306 = vsel %vm1256, %v1145, 0
      %v1309 = vsel %vm1256, %v1147, 0
      %v1312 = vsel %vm1256, %v1149, 0
      %v1315 = vsel %vm1256, %v1151, 0
      %v1318 = vsel %vm1256, %v1153, 0
      %v1321 = vsel %vm1256, %v1155, 0
      %v1324 = vsel %vm1256, %v1157, 0
      %v1327 = vsel %vm1256, %v1159, 0
      %v1330 = vsel %vm1256, %v1161, 0
      %v1333 = vsel %vm1256, %v1163, 0
      %v1336 = vsel %vm1256, %v1165, 0
      %v1339 = vsel %vm1256, %v1167, 0
      %v1342 = vsel %vm1256, %v1169, 0
      %v1345 = vsel %vm1256, %v1171, 0
      %v1348 = vsel %vm1256, %v1173, 0
      %v1351 = vsel %vm1256, %v1175, 0
      %1353 = vmatpush.bf16.msra.mxu0 %v1243
      %1354 = vmatpush.bf16.msra.mxu0 %v1242
      %1355 = vmatpush.bf16.msra.mxu0 %v1241
      %1356 = vmatpush.bf16.msra.mxu0 %v1240
      %1357 = vmatpush.bf16.msra.mxu0 %v1239
      %1358 = vmatpush.bf16.msra.mxu0 %v1238
      %1359 = vmatpush.bf16.msra.mxu0 %v1237
      %1360 = vmatpush.bf16.msra.mxu0 %v1236
      %1361 = vmatmul.bf16.gmra.mxu0 %v1112
      %v1362 = vpop.f32.mrf.mxu0
      %v1363 = vadd.f32 0.0, %v1362
      %v1364 = vpop.f32.mrf.mxu0
      %v1365 = vadd.f32 0.0, %v1364
      %1366 = vmatmul.bf16.gmra.mxu0 %v1114
      %v1367 = vpop.f32.mrf.mxu0
      %v1368 = vadd.f32 0.0, %v1367
      %v1369 = vpop.f32.mrf.mxu0
      %v1370 = vadd.f32 0.0, %v1369
      %1371 = vmatmul.bf16.gmra.mxu0 %v1116
      %v1372 = vpop.f32.mrf.mxu0
      %v1373 = vadd.f32 0.0, %v1372
      %v1374 = vpop.f32.mrf.mxu0
      %v1375 = vadd.f32 0.0, %v1374
      %1376 = vmatmul.bf16.gmra.mxu0 %v1118
      %v1377 = vpop.f32.mrf.mxu0
      %v1378 = vadd.f32 0.0, %v1377
      %v1379 = vpop.f32.mrf.mxu0
      %v1380 = vadd.f32 0.0, %v1379
      %1381 = vmatmul.bf16.gmra.mxu0 %v1120
      %v1382 = vpop.f32.mrf.mxu0
      %v1383 = vadd.f32 0.0, %v1382
      %v1384 = vpop.f32.mrf.mxu0
      %v1385 = vadd.f32 0.0, %v1384
      %1386 = vmatmul.bf16.gmra.mxu0 %v1122
      %v1387 = vpop.f32.mrf.mxu0
      %v1388 = vadd.f32 0.0, %v1387
      %v1389 = vpop.f32.mrf.mxu0
      %v1390 = vadd.f32 0.0, %v1389
      %1391 = vmatmul.bf16.gmra.mxu0 %v1124
      %v1392 = vpop.f32.mrf.mxu0
      %v1393 = vadd.f32 0.0, %v1392
      %v1394 = vpop.f32.mrf.mxu0
      %v1395 = vadd.f32 0.0, %v1394
      %1396 = vmatmul.bf16.gmra.mxu0 %v1126
      %v1397 = vpop.f32.mrf.mxu0
      %v1398 = vadd.f32 0.0, %v1397
      %v1399 = vpop.f32.mrf.mxu0
      %v1400 = vadd.f32 0.0, %v1399
      %1401 = vmatmul.bf16.gmra.mxu0 %v1128
      %v1402 = vpop.f32.mrf.mxu0
      %v1403 = vadd.f32 0.0, %v1402
      %v1404 = vpop.f32.mrf.mxu0
      %v1405 = vadd.f32 0.0, %v1404
      %1406 = vmatmul.bf16.gmra.mxu0 %v1130
      %v1407 = vpop.f32.mrf.mxu0
      %v1408 = vadd.f32 0.0, %v1407
      %v1409 = vpop.f32.mrf.mxu0
      %v1410 = vadd.f32 0.0, %v1409
      %1411 = vmatmul.bf16.gmra.mxu0 %v1132
      %v1412 = vpop.f32.mrf.mxu0
      %v1413 = vadd.f32 0.0, %v1412
      %v1414 = vpop.f32.mrf.mxu0
      %v1415 = vadd.f32 0.0, %v1414
      %1416 = vmatmul.bf16.gmra.mxu0 %v1134
      %v1417 = vpop.f32.mrf.mxu0
      %v1418 = vadd.f32 0.0, %v1417
      %v1419 = vpop.f32.mrf.mxu0
      %v1420 = vadd.f32 0.0, %v1419
      %1421 = vmatmul.bf16.gmra.mxu0 %v1136
      %v1422 = vpop.f32.mrf.mxu0
      %v1423 = vadd.f32 0.0, %v1422
      %v1424 = vpop.f32.mrf.mxu0
      %v1425 = vadd.f32 0.0, %v1424
      %1426 = vmatmul.bf16.gmra.mxu0 %v1138
      %v1427 = vpop.f32.mrf.mxu0
      %v1428 = vadd.f32 0.0, %v1427
      %v1429 = vpop.f32.mrf.mxu0
      %v1430 = vadd.f32 0.0, %v1429
      %1431 = vmatmul.bf16.gmra.mxu0 %v1140
      %v1432 = vpop.f32.mrf.mxu0
      %v1433 = vadd.f32 0.0, %v1432
      %v1434 = vpop.f32.mrf.mxu0
      %v1435 = vadd.f32 0.0, %v1434
      %1436 = vmatmul.bf16.gmra.mxu0 %v1142
      %v1437 = vpop.f32.mrf.mxu0
      %v1438 = vadd.f32 0.0, %v1437
      %v1439 = vpop.f32.mrf.mxu0
      %v1440 = vadd.f32 0.0, %v1439
      %1441 = vmatmul.bf16.gmra.mxu0 %v1144
      %v1442 = vpop.f32.mrf.mxu0
      %v1443 = vadd.f32 0.0, %v1442
      %v1444 = vpop.f32.mrf.mxu0
      %v1445 = vadd.f32 0.0, %v1444
      %1446 = vmatmul.bf16.gmra.mxu0 %v1146
      %v1447 = vpop.f32.mrf.mxu0
      %v1448 = vadd.f32 0.0, %v1447
      %v1449 = vpop.f32.mrf.mxu0
      %v1450 = vadd.f32 0.0, %v1449
      %1451 = vmatmul.bf16.gmra.mxu0 %v1148
      %v1452 = vpop.f32.mrf.mxu0
      %v1453 = vadd.f32 0.0, %v1452
      %v1454 = vpop.f32.mrf.mxu0
      %v1455 = vadd.f32 0.0, %v1454
      %1456 = vmatmul.bf16.gmra.mxu0 %v1150
      %v1457 = vpop.f32.mrf.mxu0
      %v1458 = vadd.f32 0.0, %v1457
      %v1459 = vpop.f32.mrf.mxu0
      %v1460 = vadd.f32 0.0, %v1459
      %1461 = vmatmul.bf16.gmra.mxu0 %v1152
      %v1462 = vpop.f32.mrf.mxu0
      %v1463 = vadd.f32 0.0, %v1462
      %v1464 = vpop.f32.mrf.mxu0
      %v1465 = vadd.f32 0.0, %v1464
      %1466 = vmatmul.bf16.gmra.mxu0 %v1154
      %v1467 = vpop.f32.mrf.mxu0
      %v1468 = vadd.f32 0.0, %v1467
      %v1469 = vpop.f32.mrf.mxu0
      %v1470 = vadd.f32 0.0, %v1469
      %1471 = vmatmul.bf16.gmra.mxu0 %v1156
      %v1472 = vpop.f32.mrf.mxu0
      %v1473 = vadd.f32 0.0, %v1472
      %v1474 = vpop.f32.mrf.mxu0
      %v1475 = vadd.f32 0.0, %v1474
      %1476 = vmatmul.bf16.gmra.mxu0 %v1158
      %v1477 = vpop.f32.mrf.mxu0
      %v1478 = vadd.f32 0.0, %v1477
      %v1479 = vpop.f32.mrf.mxu0
      %v1480 = vadd.f32 0.0, %v1479
      %1481 = vmatmul.bf16.gmra.mxu0 %v1160
      %v1482 = vpop.f32.mrf.mxu0
      %v1483 = vadd.f32 0.0, %v1482
      %v1484 = vpop.f32.mrf.mxu0
      %v1485 = vadd.f32 0.0, %v1484
      %1486 = vmatmul.bf16.gmra.mxu0 %v1162
      %v1487 = vpop.f32.mrf.mxu0
      %v1488 = vadd.f32 0.0, %v1487
      %v1489 = vpop.f32.mrf.mxu0
      %v1490 = vadd.f32 0.0, %v1489
      %1491 = vmatmul.bf16.gmra.mxu0 %v1164
      %v1492 = vpop.f32.mrf.mxu0
      %v1493 = vadd.f32 0.0, %v1492
      %v1494 = vpop.f32.mrf.mxu0
      %v1495 = vadd.f32 0.0, %v1494
      %1496 = vmatmul.bf16.gmra.mxu0 %v1166
      %v1497 = vpop.f32.mrf.mxu0
      %v1498 = vadd.f32 0.0, %v1497
      %v1499 = vpop.f32.mrf.mxu0
      %v1500 = vadd.f32 0.0, %v1499
      %1501 = vmatmul.bf16.gmra.mxu0 %v1168
      %v1502 = vpop.f32.mrf.mxu0
      %v1503 = vadd.f32 0.0, %v1502
      %v1504 = vpop.f32.mrf.mxu0
      %v1505 = vadd.f32 0.0, %v1504
      %1506 = vmatmul.bf16.gmra.mxu0 %v1170
      %v1507 = vpop.f32.mrf.mxu0
      %v1508 = vadd.f32 0.0, %v1507
      %v1509 = vpop.f32.mrf.mxu0
      %v1510 = vadd.f32 0.0, %v1509
      %1511 = vmatmul.bf16.gmra.mxu0 %v1172
      %v1512 = vpop.f32.mrf.mxu0
      %v1513 = vadd.f32 0.0, %v1512
      %v1514 = vpop.f32.mrf.mxu0
      %v1515 = vadd.f32 0.0, %v1514
      %1516 = vmatmul.bf16.gmra.mxu0 %v1174
      %v1517 = vpop.f32.mrf.mxu0
      %v1518 = vadd.f32 0.0, %v1517
      %v1519 = vpop.f32.mrf.mxu0
      %v1520 = vadd.f32 0.0, %v1519
      %1521 = vdwg.mxu0
      %1522 = vmatpush.bf16.msra.mxu0 0
      %1523 = vmatpush.bf16.msra.mxu0 0
      %1524 = vmatpush.bf16.msra.mxu0 0
      %1525 = vmatpush.bf16.msra.mxu0 0
      %1526 = vmatpush.bf16.msra.mxu0 0
      %1527 = vmatpush.bf16.msra.mxu0 0
      %1528 = vmatpush.bf16.msra.mxu0 %v1245
      %1529 = vmatpush.bf16.msra.mxu0 %v1244
      %1530 = vmatmul.bf16.gmra.mxu0 %v1258
      %v1531 = vpop.f32.mrf.mxu0
      %v1532 = vadd.f32 %v1363, %v1531
      %v1533 = vpop.f32.mrf.mxu0
      %v1534 = vadd.f32 %v1365, %v1533
      %1535 = vmatmul.bf16.gmra.mxu0 %v1261
      %v1536 = vpop.f32.mrf.mxu0
      %v1537 = vadd.f32 %v1368, %v1536
      %v1538 = vpop.f32.mrf.mxu0
      %v1539 = vadd.f32 %v1370, %v1538
      %1540 = vmatmul.bf16.gmra.mxu0 %v1264
      %v1541 = vpop.f32.mrf.mxu0
      %v1542 = vadd.f32 %v1373, %v1541
      %v1543 = vpop.f32.mrf.mxu0
      %v1544 = vadd.f32 %v1375, %v1543
      %1545 = vmatmul.bf16.gmra.mxu0 %v1267
      %v1546 = vpop.f32.mrf.mxu0
      %v1547 = vadd.f32 %v1378, %v1546
      %v1548 = vpop.f32.mrf.mxu0
      %v1549 = vadd.f32 %v1380, %v1548
      %1550 = vmatmul.bf16.gmra.mxu0 %v1270
      %v1551 = vpop.f32.mrf.mxu0
      %v1552 = vadd.f32 %v1383, %v1551
      %v1553 = vpop.f32.mrf.mxu0
      %v1554 = vadd.f32 %v1385, %v1553
      %1555 = vmatmul.bf16.gmra.mxu0 %v1273
      %v1556 = vpop.f32.mrf.mxu0
      %v1557 = vadd.f32 %v1388, %v1556
      %v1558 = vpop.f32.mrf.mxu0
      %v1559 = vadd.f32 %v1390, %v1558
      %1560 = vmatmul.bf16.gmra.mxu0 %v1276
      %v1561 = vpop.f32.mrf.mxu0
      %v1562 = vadd.f32 %v1393, %v1561
      %v1563 = vpop.f32.mrf.mxu0
      %v1564 = vadd.f32 %v1395, %v1563
      %1565 = vmatmul.bf16.gmra.mxu0 %v1279
      %v1566 = vpop.f32.mrf.mxu0
      %v1567 = vadd.f32 %v1398, %v1566
      %v1568 = vpop.f32.mrf.mxu0
      %v1569 = vadd.f32 %v1400, %v1568
      %1570 = vmatmul.bf16.gmra.mxu0 %v1282
      %v1571 = vpop.f32.mrf.mxu0
      %v1572 = vadd.f32 %v1403, %v1571
      %v1573 = vpop.f32.mrf.mxu0
      %v1574 = vadd.f32 %v1405, %v1573
      %1575 = vmatmul.bf16.gmra.mxu0 %v1285
      %v1576 = vpop.f32.mrf.mxu0
      %v1577 = vadd.f32 %v1408, %v1576
      %v1578 = vpop.f32.mrf.mxu0
      %v1579 = vadd.f32 %v1410, %v1578
      %1580 = vmatmul.bf16.gmra.mxu0 %v1288
      %v1581 = vpop.f32.mrf.mxu0
      %v1582 = vadd.f32 %v1413, %v1581
      %v1583 = vpop.f32.mrf.mxu0
      %v1584 = vadd.f32 %v1415, %v1583
      %1585 = vmatmul.bf16.gmra.mxu0 %v1291
      %v1586 = vpop.f32.mrf.mxu0
      %v1587 = vadd.f32 %v1418, %v1586
      %v1588 = vpop.f32.mrf.mxu0
      %v1589 = vadd.f32 %v1420, %v1588
      %1590 = vmatmul.bf16.gmra.mxu0 %v1294
      %v1591 = vpop.f32.mrf.mxu0
      %v1592 = vadd.f32 %v1423, %v1591
      %v1593 = vpop.f32.mrf.mxu0
      %v1594 = vadd.f32 %v1425, %v1593
      %1595 = vmatmul.bf16.gmra.mxu0 %v1297
      %v1596 = vpop.f32.mrf.mxu0
      %v1597 = vadd.f32 %v1428, %v1596
      %v1598 = vpop.f32.mrf.mxu0
      %v1599 = vadd.f32 %v1430, %v1598
      %1600 = vmatmul.bf16.gmra.mxu0 %v1300
      %v1601 = vpop.f32.mrf.mxu0
      %v1602 = vadd.f32 %v1433, %v1601
      %v1603 = vpop.f32.mrf.mxu0
      %v1604 = vadd.f32 %v1435, %v1603
      %1605 = vmatmul.bf16.gmra.mxu0 %v1303
      %v1606 = vpop.f32.mrf.mxu0
      %v1607 = vadd.f32 %v1438, %v1606
      %v1608 = vpop.f32.mrf.mxu0
      %v1609 = vadd.f32 %v1440, %v1608
      %1610 = vmatmul.bf16.gmra.mxu0 %v1306
      %v1611 = vpop.f32.mrf.mxu0
      %v1612 = vadd.f32 %v1443, %v1611
      %v1613 = vpop.f32.mrf.mxu0
      %v1614 = vadd.f32 %v1445, %v1613
      %1615 = vmatmul.bf16.gmra.mxu0 %v1309
      %v1616 = vpop.f32.mrf.mxu0
      %v1617 = vadd.f32 %v1448, %v1616
      %v1618 = vpop.f32.mrf.mxu0
      %v1619 = vadd.f32 %v1450, %v1618
      %1620 = vmatmul.bf16.gmra.mxu0 %v1312
      %v1621 = vpop.f32.mrf.mxu0
      %v1622 = vadd.f32 %v1453, %v1621
      %v1623 = vpop.f32.mrf.mxu0
      %v1624 = vadd.f32 %v1455, %v1623
      %1625 = vmatmul.bf16.gmra.mxu0 %v1315
      %v1626 = vpop.f32.mrf.mxu0
      %v1627 = vadd.f32 %v1458, %v1626
      %v1628 = vpop.f32.mrf.mxu0
      %v1629 = vadd.f32 %v1460, %v1628
      %1630 = vmatmul.bf16.gmra.mxu0 %v1318
      %v1631 = vpop.f32.mrf.mxu0
      %v1632 = vadd.f32 %v1463, %v1631
      %v1633 = vpop.f32.mrf.mxu0
      %v1634 = vadd.f32 %v1465, %v1633
      %1635 = vmatmul.bf16.gmra.mxu0 %v1321
      %v1636 = vpop.f32.mrf.mxu0
      %v1637 = vadd.f32 %v1468, %v1636
      %v1638 = vpop.f32.mrf.mxu0
      %v1639 = vadd.f32 %v1470, %v1638
      %1640 = vmatmul.bf16.gmra.mxu0 %v1324
      %v1641 = vpop.f32.mrf.mxu0
      %v1642 = vadd.f32 %v1473, %v1641
      %v1643 = vpop.f32.mrf.mxu0
      %v1644 = vadd.f32 %v1475, %v1643
      %1645 = vmatmul.bf16.gmra.mxu0 %v1327
      %v1646 = vpop.f32.mrf.mxu0
      %v1647 = vadd.f32 %v1478, %v1646
      %v1648 = vpop.f32.mrf.mxu0
      %v1649 = vadd.f32 %v1480, %v1648
      %1650 = vmatmul.bf16.gmra.mxu0 %v1330
      %v1651 = vpop.f32.mrf.mxu0
      %v1652 = vadd.f32 %v1483, %v1651
      %v1653 = vpop.f32.mrf.mxu0
      %v1654 = vadd.f32 %v1485, %v1653
      %1655 = vmatmul.bf16.gmra.mxu0 %v1333
      %v1656 = vpop.f32.mrf.mxu0
      %v1657 = vadd.f32 %v1488, %v1656
      %v1658 = vpop.f32.mrf.mxu0
      %v1659 = vadd.f32 %v1490, %v1658
      %1660 = vmatmul.bf16.gmra.mxu0 %v1336
      %v1661 = vpop.f32.mrf.mxu0
      %v1662 = vadd.f32 %v1493, %v1661
      %v1663 = vpop.f32.mrf.mxu0
      %v1664 = vadd.f32 %v1495, %v1663
      %1665 = vmatmul.bf16.gmra.mxu0 %v1339
      %v1666 = vpop.f32.mrf.mxu0
      %v1667 = vadd.f32 %v1498, %v1666
      %v1668 = vpop.f32.mrf.mxu0
      %v1669 = vadd.f32 %v1500, %v1668
      %1670 = vmatmul.bf16.gmra.mxu0 %v1342
      %v1671 = vpop.f32.mrf.mxu0
      %v1672 = vadd.f32 %v1503, %v1671
      %v1673 = vpop.f32.mrf.mxu0
      %v1674 = vadd.f32 %v1505, %v1673
      %1675 = vmatmul.bf16.gmra.mxu0 %v1345
      %v1676 = vpop.f32.mrf.mxu0
      %v1677 = vadd.f32 %v1508, %v1676
      %v1678 = vpop.f32.mrf.mxu0
      %v1679 = vadd.f32 %v1510, %v1678
      %1680 = vmatmul.bf16.gmra.mxu0 %v1348
      %v1681 = vpop.f32.mrf.mxu0
      %v1682 = vadd.f32 %v1513, %v1681
      %v1683 = vpop.f32.mrf.mxu0
      %v1684 = vadd.f32 %v1515, %v1683
      %1685 = vmatmul.bf16.gmra.mxu0 %v1351
      %v1686 = vpop.f32.mrf.mxu0
      %v1687 = vadd.f32 %v1518, %v1686
      %v1688 = vpop.f32.mrf.mxu0
      %v1689 = vadd.f32 %v1520, %v1688
      %1690 = vdwg.mxu0
      %v1691 = vmax.f32 %v1532, 0.0
      %v1692 = vmax.f32 %v1534, 0.0
      %v1693 = vmax.f32 %v1537, 0.0
      %v1694 = vmax.f32 %v1539, 0.0
      %v1695 = vmax.f32 %v1542, 0.0
      %v1696 = vmax.f32 %v1544, 0.0
      %v1697 = vmax.f32 %v1547, 0.0
      %v1698 = vmax.f32 %v1549, 0.0
      %v1699 = vmax.f32 %v1552, 0.0
      %v1700 = vmax.f32 %v1554, 0.0
      %v1701 = vmax.f32 %v1557, 0.0
      %v1702 = vmax.f32 %v1559, 0.0
      %v1703 = vmax.f32 %v1562, 0.0
      %v1704 = vmax.f32 %v1564, 0.0
      %v1705 = vmax.f32 %v1567, 0.0
      %v1706 = vmax.f32 %v1569, 0.0
      %v1707 = vmax.f32 %v1572, 0.0
      %v1708 = vmax.f32 %v1574, 0.0
      %v1709 = vmax.f32 %v1577, 0.0
      %v1710 = vmax.f32 %v1579, 0.0
      %v1711 = vmax.f32 %v1582, 0.0
      %v1712 = vmax.f32 %v1584, 0.0
      %v1713 = vmax.f32 %v1587, 0.0
      %v1714 = vmax.f32 %v1589, 0.0
      %v1715 = vmax.f32 %v1592, 0.0
      %v1716 = vmax.f32 %v1594, 0.0
      %v1717 = vmax.f32 %v1597, 0.0
      %v1718 = vmax.f32 %v1599, 0.0
      %v1719 = vmax.f32 %v1602, 0.0
      %v1720 = vmax.f32 %v1604, 0.0
      %v1721 = vmax.f32 %v1607, 0.0
      %v1722 = vmax.f32 %v1609, 0.0
      %v1723 = vmax.f32 %v1612, 0.0
      %v1724 = vmax.f32 %v1614, 0.0
      %v1725 = vmax.f32 %v1617, 0.0
      %v1726 = vmax.f32 %v1619, 0.0
      %v1727 = vmax.f32 %v1622, 0.0
      %v1728 = vmax.f32 %v1624, 0.0
      %v1729 = vmax.f32 %v1627, 0.0
      %v1730 = vmax.f32 %v1629, 0.0
      %v1731 = vmax.f32 %v1632, 0.0
      %v1732 = vmax.f32 %v1634, 0.0
      %v1733 = vmax.f32 %v1637, 0.0
      %v1734 = vmax.f32 %v1639, 0.0
      %v1735 = vmax.f32 %v1642, 0.0
      %v1736 = vmax.f32 %v1644, 0.0
      %v1737 = vmax.f32 %v1647, 0.0
      %v1738 = vmax.f32 %v1649, 0.0
      %v1739 = vmax.f32 %v1652, 0.0
      %v1740 = vmax.f32 %v1654, 0.0
      %v1741 = vmax.f32 %v1657, 0.0
      %v1742 = vmax.f32 %v1659, 0.0
      %v1743 = vmax.f32 %v1662, 0.0
      %v1744 = vmax.f32 %v1664, 0.0
      %v1745 = vmax.f32 %v1667, 0.0
      %v1746 = vmax.f32 %v1669, 0.0
      %v1747 = vmax.f32 %v1672, 0.0
      %v1748 = vmax.f32 %v1674, 0.0
      %v1749 = vmax.f32 %v1677, 0.0
      %v1750 = vmax.f32 %v1679, 0.0
      %v1751 = vmax.f32 %v1682, 0.0
      %v1752 = vmax.f32 %v1684, 0.0
      %v1753 = vmax.f32 %v1687, 0.0
      %v1754 = vmax.f32 %v1689, 0.0
      %v1755 = vpack.c.bf16 %v1692, %v1691
      %v1756 = vpack.c.bf16 %v1694, %v1693
      %v1757 = vpack.c.bf16 %v1696, %v1695
      %v1758 = vpack.c.bf16 %v1698, %v1697
      %v1759 = vpack.c.bf16 %v1700, %v1699
      %v1760 = vpack.c.bf16 %v1702, %v1701
      %v1761 = vpack.c.bf16 %v1704, %v1703
      %v1762 = vpack.c.bf16 %v1706, %v1705
      %v1763 = vpack.c.bf16 %v1708, %v1707
      %v1764 = vpack.c.bf16 %v1710, %v1709
      %v1765 = vpack.c.bf16 %v1712, %v1711
      %v1766 = vpack.c.bf16 %v1714, %v1713
      %v1767 = vpack.c.bf16 %v1716, %v1715
      %v1768 = vpack.c.bf16 %v1718, %v1717
      %v1769 = vpack.c.bf16 %v1720, %v1719
      %v1770 = vpack.c.bf16 %v1722, %v1721
      %v1771 = vpack.c.bf16 %v1724, %v1723
      %v1772 = vpack.c.bf16 %v1726, %v1725
      %v1773 = vpack.c.bf16 %v1728, %v1727
      %v1774 = vpack.c.bf16 %v1730, %v1729
      %v1775 = vpack.c.bf16 %v1732, %v1731
      %v1776 = vpack.c.bf16 %v1734, %v1733
      %v1777 = vpack.c.bf16 %v1736, %v1735
      %v1778 = vpack.c.bf16 %v1738, %v1737
      %v1779 = vpack.c.bf16 %v1740, %v1739
      %v1780 = vpack.c.bf16 %v1742, %v1741
      %v1781 = vpack.c.bf16 %v1744, %v1743
      %v1782 = vpack.c.bf16 %v1746, %v1745
      %v1783 = vpack.c.bf16 %v1748, %v1747
      %v1784 = vpack.c.bf16 %v1750, %v1749
      %v1785 = vpack.c.bf16 %v1752, %v1751
      %v1786 = vpack.c.bf16 %v1754, %v1753
      %v1787 = vld [vmem:[%s4] sm:$0xf]
      %v1788 = vld [vmem:[%s4 + $0x4] sm:$0xf]
      %v1789 = vld [vmem:[%s4 + $0x8] sm:$0xf]
      %v1790 = vld [vmem:[%s4 + $0xc] sm:$0xf]
      %v1791 = vld [vmem:[%s4 + $0x10] sm:$0xf]
      %v1792 = vld [vmem:[%s4 + $0x14] sm:$0xf]
      %v1793 = vld [vmem:[%s4 + $0x18] sm:$0xf]
      %v1794 = vld [vmem:[%s4 + $0x1c] sm:$0xf]
      %v1795 = vld [vmem:[%s4 + $0x20] sm:$0xf]
      %v1796 = vld [vmem:[%s4 + $0x24] sm:$0xf]
      %v1797 = vld [vmem:[%s4 + $0x28] sm:$0xf]
      %v1798 = vld [vmem:[%s4 + $0x2c] sm:$0xf]
      %v1799 = vld [vmem:[%s4 + $0x30] sm:$0xf]
      %v1800 = vld [vmem:[%s4 + $0x34] sm:$0xf]
      %v1801 = vld [vmem:[%s4 + $0x38] sm:$0xf]
      %v1802 = vld [vmem:[%s4 + $0x3c] sm:$0xf]
      %v1819 = vunpack.c.l.b16 %v1787
      %v1820 = vunpack.c.l.b16 %v1788
      %v1821 = vunpack.c.l.b16 %v1789
      %v1822 = vunpack.c.l.b16 %v1790
      %v1823 = vunpack.c.l.b16 %v1791
      %v1824 = vunpack.c.l.b16 %v1792
      %v1825 = vunpack.c.l.b16 %v1793
      %v1826 = vunpack.c.l.b16 %v1794
      %v1827 = vunpack.c.l.b16 %v1795
      %v1828 = vunpack.c.l.b16 %v1796
      %v1829 = vunpack.c.l.b16 %v1797
      %v1830 = vunpack.c.l.b16 %v1798
      %v1831 = vunpack.c.l.b16 %v1799
      %v1832 = vunpack.c.l.b16 %v1800
      %v1833 = vunpack.c.l.b16 %v1801
      %v1834 = vunpack.c.l.b16 %v1802
      %v1835 = vpack.c.b16 %v1820, %v1819
      %v1836 = vpack.c.b16 %v1822, %v1821
      %v1837 = vpack.c.b16 %v1824, %v1823
      %v1838 = vpack.c.b16 %v1826, %v1825
      %v1839 = vpack.c.b16 %v1828, %v1827
      %v1840 = vpack.c.b16 %v1830, %v1829
      %v1841 = vpack.c.b16 %v1832, %v1831
      %v1842 = vpack.c.b16 %v1834, %v1833
      %1851 = vmatpush.bf16.msra.mxu0 %v1842
      %1852 = vmatpush.bf16.msra.mxu0 %v1841
      %1853 = vmatpush.bf16.msra.mxu0 %v1840
      %1854 = vmatpush.bf16.msra.mxu0 %v1839
      %1855 = vmatpush.bf16.msra.mxu0 %v1838
      %1856 = vmatpush.bf16.msra.mxu0 %v1837
      %1857 = vmatpush.bf16.msra.mxu0 %v1836
      %1858 = vmatpush.bf16.msra.mxu0 %v1835
      %1859 = vmatmul.bf16.gmra.mxu0 %v1755
      %v1860 = vpop.f32.mrf.mxu0
      %v1861 = vadd.f32 0.0, %v1860
      %v1862 = vpop.f32.mrf.mxu0
      %v1863 = vadd.f32 0.0, %v1862
      %1864 = vmatmul.bf16.gmra.mxu0 %v1756
      %v1865 = vpop.f32.mrf.mxu0
      %v1866 = vadd.f32 0.0, %v1865
      %v1867 = vpop.f32.mrf.mxu0
      %v1868 = vadd.f32 0.0, %v1867
      %1869 = vmatmul.bf16.gmra.mxu0 %v1757
      %v1870 = vpop.f32.mrf.mxu0
      %v1871 = vadd.f32 0.0, %v1870
      %v1872 = vpop.f32.mrf.mxu0
      %v1873 = vadd.f32 0.0, %v1872
      %1874 = vmatmul.bf16.gmra.mxu0 %v1758
      %v1875 = vpop.f32.mrf.mxu0
      %v1876 = vadd.f32 0.0, %v1875
      %v1877 = vpop.f32.mrf.mxu0
      %v1878 = vadd.f32 0.0, %v1877
      %1879 = vmatmul.bf16.gmra.mxu0 %v1759
      %v1880 = vpop.f32.mrf.mxu0
      %v1881 = vadd.f32 0.0, %v1880
      %v1882 = vpop.f32.mrf.mxu0
      %v1883 = vadd.f32 0.0, %v1882
      %1884 = vmatmul.bf16.gmra.mxu0 %v1760
      %v1885 = vpop.f32.mrf.mxu0
      %v1886 = vadd.f32 0.0, %v1885
      %v1887 = vpop.f32.mrf.mxu0
      %v1888 = vadd.f32 0.0, %v1887
      %1889 = vmatmul.bf16.gmra.mxu0 %v1761
      %v1890 = vpop.f32.mrf.mxu0
      %v1891 = vadd.f32 0.0, %v1890
      %v1892 = vpop.f32.mrf.mxu0
      %v1893 = vadd.f32 0.0, %v1892
      %1894 = vmatmul.bf16.gmra.mxu0 %v1762
      %v1895 = vpop.f32.mrf.mxu0
      %v1896 = vadd.f32 0.0, %v1895
      %v1897 = vpop.f32.mrf.mxu0
      %v1898 = vadd.f32 0.0, %v1897
      %1899 = vmatmul.bf16.gmra.mxu0 %v1763
      %v1900 = vpop.f32.mrf.mxu0
      %v1901 = vadd.f32 0.0, %v1900
      %v1902 = vpop.f32.mrf.mxu0
      %v1903 = vadd.f32 0.0, %v1902
      %1904 = vmatmul.bf16.gmra.mxu0 %v1764
      %v1905 = vpop.f32.mrf.mxu0
      %v1906 = vadd.f32 0.0, %v1905
      %v1907 = vpop.f32.mrf.mxu0
      %v1908 = vadd.f32 0.0, %v1907
      %1909 = vmatmul.bf16.gmra.mxu0 %v1765
      %v1910 = vpop.f32.mrf.mxu0
      %v1911 = vadd.f32 0.0, %v1910
      %v1912 = vpop.f32.mrf.mxu0
      %v1913 = vadd.f32 0.0, %v1912
      %1914 = vmatmul.bf16.gmra.mxu0 %v1766
      %v1915 = vpop.f32.mrf.mxu0
      %v1916 = vadd.f32 0.0, %v1915
      %v1917 = vpop.f32.mrf.mxu0
      %v1918 = vadd.f32 0.0, %v1917
      %1919 = vmatmul.bf16.gmra.mxu0 %v1767
      %v1920 = vpop.f32.mrf.mxu0
      %v1921 = vadd.f32 0.0, %v1920
      %v1922 = vpop.f32.mrf.mxu0
      %v1923 = vadd.f32 0.0, %v1922
      %1924 = vmatmul.bf16.gmra.mxu0 %v1768
      %v1925 = vpop.f32.mrf.mxu0
      %v1926 = vadd.f32 0.0, %v1925
      %v1927 = vpop.f32.mrf.mxu0
      %v1928 = vadd.f32 0.0, %v1927
      %1929 = vmatmul.bf16.gmra.mxu0 %v1769
      %v1930 = vpop.f32.mrf.mxu0
      %v1931 = vadd.f32 0.0, %v1930
      %v1932 = vpop.f32.mrf.mxu0
      %v1933 = vadd.f32 0.0, %v1932
      %1934 = vmatmul.bf16.gmra.mxu0 %v1770
      %v1935 = vpop.f32.mrf.mxu0
      %v1936 = vadd.f32 0.0, %v1935
      %v1937 = vpop.f32.mrf.mxu0
      %v1938 = vadd.f32 0.0, %v1937
      %1939 = vmatmul.bf16.gmra.mxu0 %v1771
      %v1940 = vpop.f32.mrf.mxu0
      %v1941 = vadd.f32 0.0, %v1940
      %v1942 = vpop.f32.mrf.mxu0
      %v1943 = vadd.f32 0.0, %v1942
      %1944 = vmatmul.bf16.gmra.mxu0 %v1772
      %v1945 = vpop.f32.mrf.mxu0
      %v1946 = vadd.f32 0.0, %v1945
      %v1947 = vpop.f32.mrf.mxu0
      %v1948 = vadd.f32 0.0, %v1947
      %1949 = vmatmul.bf16.gmra.mxu0 %v1773
      %v1950 = vpop.f32.mrf.mxu0
      %v1951 = vadd.f32 0.0, %v1950
      %v1952 = vpop.f32.mrf.mxu0
      %v1953 = vadd.f32 0.0, %v1952
      %1954 = vmatmul.bf16.gmra.mxu0 %v1774
      %v1955 = vpop.f32.mrf.mxu0
      %v1956 = vadd.f32 0.0, %v1955
      %v1957 = vpop.f32.mrf.mxu0
      %v1958 = vadd.f32 0.0, %v1957
      %1959 = vmatmul.bf16.gmra.mxu0 %v1775
      %v1960 = vpop.f32.mrf.mxu0
      %v1961 = vadd.f32 0.0, %v1960
      %v1962 = vpop.f32.mrf.mxu0
      %v1963 = vadd.f32 0.0, %v1962
      %1964 = vmatmul.bf16.gmra.mxu0 %v1776
      %v1965 = vpop.f32.mrf.mxu0
      %v1966 = vadd.f32 0.0, %v1965
      %v1967 = vpop.f32.mrf.mxu0
      %v1968 = vadd.f32 0.0, %v1967
      %1969 = vmatmul.bf16.gmra.mxu0 %v1777
      %v1970 = vpop.f32.mrf.mxu0
      %v1971 = vadd.f32 0.0, %v1970
      %v1972 = vpop.f32.mrf.mxu0
      %v1973 = vadd.f32 0.0, %v1972
      %1974 = vmatmul.bf16.gmra.mxu0 %v1778
      %v1975 = vpop.f32.mrf.mxu0
      %v1976 = vadd.f32 0.0, %v1975
      %v1977 = vpop.f32.mrf.mxu0
      %v1978 = vadd.f32 0.0, %v1977
      %1979 = vmatmul.bf16.gmra.mxu0 %v1779
      %v1980 = vpop.f32.mrf.mxu0
      %v1981 = vadd.f32 0.0, %v1980
      %v1982 = vpop.f32.mrf.mxu0
      %v1983 = vadd.f32 0.0, %v1982
      %1984 = vmatmul.bf16.gmra.mxu0 %v1780
      %v1985 = vpop.f32.mrf.mxu0
      %v1986 = vadd.f32 0.0, %v1985
      %v1987 = vpop.f32.mrf.mxu0
      %v1988 = vadd.f32 0.0, %v1987
      %1989 = vmatmul.bf16.gmra.mxu0 %v1781
      %v1990 = vpop.f32.mrf.mxu0
      %v1991 = vadd.f32 0.0, %v1990
      %v1992 = vpop.f32.mrf.mxu0
      %v1993 = vadd.f32 0.0, %v1992
      %1994 = vmatmul.bf16.gmra.mxu0 %v1782
      %v1995 = vpop.f32.mrf.mxu0
      %v1996 = vadd.f32 0.0, %v1995
      %v1997 = vpop.f32.mrf.mxu0
      %v1998 = vadd.f32 0.0, %v1997
      %1999 = vmatmul.bf16.gmra.mxu0 %v1783
      %v2000 = vpop.f32.mrf.mxu0
      %v2001 = vadd.f32 0.0, %v2000
      %v2002 = vpop.f32.mrf.mxu0
      %v2003 = vadd.f32 0.0, %v2002
      %2004 = vmatmul.bf16.gmra.mxu0 %v1784
      %v2005 = vpop.f32.mrf.mxu0
      %v2006 = vadd.f32 0.0, %v2005
      %v2007 = vpop.f32.mrf.mxu0
      %v2008 = vadd.f32 0.0, %v2007
      %2009 = vmatmul.bf16.gmra.mxu0 %v1785
      %v2010 = vpop.f32.mrf.mxu0
      %v2011 = vadd.f32 0.0, %v2010
      %v2012 = vpop.f32.mrf.mxu0
      %v2013 = vadd.f32 0.0, %v2012
      %2014 = vmatmul.bf16.gmra.mxu0 %v1786
      %v2015 = vpop.f32.mrf.mxu0
      %v2016 = vadd.f32 0.0, %v2015
      %v2017 = vpop.f32.mrf.mxu0
      %v2018 = vadd.f32 0.0, %v2017
      %2019 = vdwg.mxu0
      %v2020 = vmax.f32 %v1861, 0.0
      %v2021 = vmax.f32 %v1863, 0.0
      %v2022 = vmax.f32 %v1866, 0.0
      %v2023 = vmax.f32 %v1868, 0.0
      %v2024 = vmax.f32 %v1871, 0.0
      %v2025 = vmax.f32 %v1873, 0.0
      %v2026 = vmax.f32 %v1876, 0.0
      %v2027 = vmax.f32 %v1878, 0.0
      %v2028 = vmax.f32 %v1881, 0.0
      %v2029 = vmax.f32 %v1883, 0.0
      %v2030 = vmax.f32 %v1886, 0.0
      %v2031 = vmax.f32 %v1888, 0.0
      %v2032 = vmax.f32 %v1891, 0.0
      %v2033 = vmax.f32 %v1893, 0.0
      %v2034 = vmax.f32 %v1896, 0.0
      %v2035 = vmax.f32 %v1898, 0.0
      %v2036 = vmax.f32 %v1901, 0.0
      %v2037 = vmax.f32 %v1903, 0.0
      %v2038 = vmax.f32 %v1906, 0.0
      %v2039 = vmax.f32 %v1908, 0.0
      %v2040 = vmax.f32 %v1911, 0.0
      %v2041 = vmax.f32 %v1913, 0.0
      %v2042 = vmax.f32 %v1916, 0.0
      %v2043 = vmax.f32 %v1918, 0.0
      %v2044 = vmax.f32 %v1921, 0.0
      %v2045 = vmax.f32 %v1923, 0.0
      %v2046 = vmax.f32 %v1926, 0.0
      %v2047 = vmax.f32 %v1928, 0.0
      %v2048 = vmax.f32 %v1931, 0.0
      %v2049 = vmax.f32 %v1933, 0.0
      %v2050 = vmax.f32 %v1936, 0.0
      %v2051 = vmax.f32 %v1938, 0.0
      %v2052 = vmax.f32 %v1941, 0.0
      %v2053 = vmax.f32 %v1943, 0.0
      %v2054 = vmax.f32 %v1946, 0.0
      %v2055 = vmax.f32 %v1948, 0.0
      %v2056 = vmax.f32 %v1951, 0.0
      %v2057 = vmax.f32 %v1953, 0.0
      %v2058 = vmax.f32 %v1956, 0.0
      %v2059 = vmax.f32 %v1958, 0.0
      %v2060 = vmax.f32 %v1961, 0.0
      %v2061 = vmax.f32 %v1963, 0.0
      %v2062 = vmax.f32 %v1966, 0.0
      %v2063 = vmax.f32 %v1968, 0.0
      %v2064 = vmax.f32 %v1971, 0.0
      %v2065 = vmax.f32 %v1973, 0.0
      %v2066 = vmax.f32 %v1976, 0.0
      %v2067 = vmax.f32 %v1978, 0.0
      %v2068 = vmax.f32 %v1981, 0.0
      %v2069 = vmax.f32 %v1983, 0.0
      %v2070 = vmax.f32 %v1986, 0.0
      %v2071 = vmax.f32 %v1988, 0.0
      %v2072 = vmax.f32 %v1991, 0.0
      %v2073 = vmax.f32 %v1993, 0.0
      %v2074 = vmax.f32 %v1996, 0.0
      %v2075 = vmax.f32 %v1998, 0.0
      %v2076 = vmax.f32 %v2001, 0.0
      %v2077 = vmax.f32 %v2003, 0.0
      %v2078 = vmax.f32 %v2006, 0.0
      %v2079 = vmax.f32 %v2008, 0.0
      %v2080 = vmax.f32 %v2011, 0.0
      %v2081 = vmax.f32 %v2013, 0.0
      %v2082 = vmax.f32 %v2016, 0.0
      %v2083 = vmax.f32 %v2018, 0.0
      %v2084 = vpack.c.bf16 %v2021, %v2020
      %v2085 = vpack.c.bf16 %v2023, %v2022
      %v2086 = vpack.c.bf16 %v2025, %v2024
      %v2087 = vpack.c.bf16 %v2027, %v2026
      %v2088 = vpack.c.bf16 %v2029, %v2028
      %v2089 = vpack.c.bf16 %v2031, %v2030
      %v2090 = vpack.c.bf16 %v2033, %v2032
      %v2091 = vpack.c.bf16 %v2035, %v2034
      %v2092 = vpack.c.bf16 %v2037, %v2036
      %v2093 = vpack.c.bf16 %v2039, %v2038
      %v2094 = vpack.c.bf16 %v2041, %v2040
      %v2095 = vpack.c.bf16 %v2043, %v2042
      %v2096 = vpack.c.bf16 %v2045, %v2044
      %v2097 = vpack.c.bf16 %v2047, %v2046
      %v2098 = vpack.c.bf16 %v2049, %v2048
      %v2099 = vpack.c.bf16 %v2051, %v2050
      %v2100 = vpack.c.bf16 %v2053, %v2052
      %v2101 = vpack.c.bf16 %v2055, %v2054
      %v2102 = vpack.c.bf16 %v2057, %v2056
      %v2103 = vpack.c.bf16 %v2059, %v2058
      %v2104 = vpack.c.bf16 %v2061, %v2060
      %v2105 = vpack.c.bf16 %v2063, %v2062
      %v2106 = vpack.c.bf16 %v2065, %v2064
      %v2107 = vpack.c.bf16 %v2067, %v2066
      %v2108 = vpack.c.bf16 %v2069, %v2068
      %v2109 = vpack.c.bf16 %v2071, %v2070
      %v2110 = vpack.c.bf16 %v2073, %v2072
      %v2111 = vpack.c.bf16 %v2075, %v2074
      %v2112 = vpack.c.bf16 %v2077, %v2076
      %v2113 = vpack.c.bf16 %v2079, %v2078
      %v2114 = vpack.c.bf16 %v2081, %v2080
      %v2115 = vpack.c.bf16 %v2083, %v2082
      %v2116 = vld [vmem:[%s5] sm:$0xf]
      %v2117 = vld [vmem:[%s5 + $0x4] sm:$0xf]
      %v2118 = vld [vmem:[%s5 + $0x8] sm:$0xf]
      %v2119 = vld [vmem:[%s5 + $0xc] sm:$0xf]
      %v2120 = vld [vmem:[%s5 + $0x10] sm:$0xf]
      %v2121 = vld [vmem:[%s5 + $0x14] sm:$0xf]
      %v2122 = vld [vmem:[%s5 + $0x18] sm:$0xf]
      %v2123 = vld [vmem:[%s5 + $0x1c] sm:$0xf]
      %v2124 = vld [vmem:[%s6] sm:$0x1]
      %v2126 = vperm.slane %v2124, 0
      %v2136 = vunpack.c.l.b16 %v2116
      %v2137 = vunpack.c.l.b16 %v2117
      %v2138 = vunpack.c.l.b16 %v2118
      %v2139 = vunpack.c.l.b16 %v2119
      %v2140 = vunpack.c.l.b16 %v2120
      %v2141 = vunpack.c.l.b16 %v2121
      %v2142 = vunpack.c.l.b16 %v2122
      %v2143 = vunpack.c.l.b16 %v2123
      %v2144 = vpack.c.b16 %v2137, %v2136
      %v2145 = vpack.c.b16 %v2139, %v2138
      %v2146 = vpack.c.b16 %v2141, %v2140
      %v2147 = vpack.c.b16 %v2143, %v2142
      %vm2152 = vcmask 523264
      %v2154 = vsel %vm2152, %v2084, 0
      %v2157 = vsel %vm2152, %v2085, 0
      %v2160 = vsel %vm2152, %v2086, 0
      %v2163 = vsel %vm2152, %v2087, 0
      %v2166 = vsel %vm2152, %v2088, 0
      %v2169 = vsel %vm2152, %v2089, 0
      %v2172 = vsel %vm2152, %v2090, 0
      %v2175 = vsel %vm2152, %v2091, 0
      %v2178 = vsel %vm2152, %v2092, 0
      %v2181 = vsel %vm2152, %v2093, 0
      %v2184 = vsel %vm2152, %v2094, 0
      %v2187 = vsel %vm2152, %v2095, 0
      %v2190 = vsel %vm2152, %v2096, 0
      %v2193 = vsel %vm2152, %v2097, 0
      %v2196 = vsel %vm2152, %v2098, 0
      %v2199 = vsel %vm2152, %v2099, 0
      %v2202 = vsel %vm2152, %v2100, 0
      %v2205 = vsel %vm2152, %v2101, 0
      %v2208 = vsel %vm2152, %v2102, 0
      %v2211 = vsel %vm2152, %v2103, 0
      %v2214 = vsel %vm2152, %v2104, 0
      %v2217 = vsel %vm2152, %v2105, 0
      %v2220 = vsel %vm2152, %v2106, 0
      %v2223 = vsel %vm2152, %v2107, 0
      %v2226 = vsel %vm2152, %v2108, 0
      %v2229 = vsel %vm2152, %v2109, 0
      %v2232 = vsel %vm2152, %v2110, 0
      %v2235 = vsel %vm2152, %v2111, 0
      %v2238 = vsel %vm2152, %v2112, 0
      %v2241 = vsel %vm2152, %v2113, 0
      %v2244 = vsel %vm2152, %v2114, 0
      %v2247 = vsel %vm2152, %v2115, 0
      %2249 = vmatpush.bf16.msra.mxu0 0
      %2250 = vmatpush.bf16.msra.mxu0 0
      %2251 = vmatpush.bf16.msra.mxu0 0
      %2252 = vmatpush.bf16.msra.mxu0 0
      %2253 = vmatpush.bf16.msra.mxu0 %v2147
      %2254 = vmatpush.bf16.msra.mxu0 %v2146
      %2255 = vmatpush.bf16.msra.mxu0 %v2145
      %2256 = vmatpush.bf16.msra.mxu0 %v2144
      %2257 = vmatmul.bf16.gmra.mxu0 %v2154
      %v2258 = vpop.f32.mrf.mxu0
      %v2259 = vadd.f32 %v2126, %v2258
      %v2260 = vpop.f32.mrf.mxu0
      %v2261 = vadd.f32 %v2126, %v2260
      %2262 = vmatmul.bf16.gmra.mxu0 %v2157
      %v2263 = vpop.f32.mrf.mxu0
      %v2264 = vadd.f32 %v2126, %v2263
      %v2265 = vpop.f32.mrf.mxu0
      %v2266 = vadd.f32 %v2126, %v2265
      %2267 = vmatmul.bf16.gmra.mxu0 %v2160
      %v2268 = vpop.f32.mrf.mxu0
      %v2269 = vadd.f32 %v2126, %v2268
      %v2270 = vpop.f32.mrf.mxu0
      %v2271 = vadd.f32 %v2126, %v2270
      %2272 = vmatmul.bf16.gmra.mxu0 %v2163
      %v2273 = vpop.f32.mrf.mxu0
      %v2274 = vadd.f32 %v2126, %v2273
      %v2275 = vpop.f32.mrf.mxu0
      %v2276 = vadd.f32 %v2126, %v2275
      %2277 = vmatmul.bf16.gmra.mxu0 %v2166
      %v2278 = vpop.f32.mrf.mxu0
      %v2279 = vadd.f32 %v2126, %v2278
      %v2280 = vpop.f32.mrf.mxu0
      %v2281 = vadd.f32 %v2126, %v2280
      %2282 = vmatmul.bf16.gmra.mxu0 %v2169
      %v2283 = vpop.f32.mrf.mxu0
      %v2284 = vadd.f32 %v2126, %v2283
      %v2285 = vpop.f32.mrf.mxu0
      %v2286 = vadd.f32 %v2126, %v2285
      %2287 = vmatmul.bf16.gmra.mxu0 %v2172
      %v2288 = vpop.f32.mrf.mxu0
      %v2289 = vadd.f32 %v2126, %v2288
      %v2290 = vpop.f32.mrf.mxu0
      %v2291 = vadd.f32 %v2126, %v2290
      %2292 = vmatmul.bf16.gmra.mxu0 %v2175
      %v2293 = vpop.f32.mrf.mxu0
      %v2294 = vadd.f32 %v2126, %v2293
      %v2295 = vpop.f32.mrf.mxu0
      %v2296 = vadd.f32 %v2126, %v2295
      %2297 = vmatmul.bf16.gmra.mxu0 %v2178
      %v2298 = vpop.f32.mrf.mxu0
      %v2299 = vadd.f32 %v2126, %v2298
      %v2300 = vpop.f32.mrf.mxu0
      %v2301 = vadd.f32 %v2126, %v2300
      %2302 = vmatmul.bf16.gmra.mxu0 %v2181
      %v2303 = vpop.f32.mrf.mxu0
      %v2304 = vadd.f32 %v2126, %v2303
      %v2305 = vpop.f32.mrf.mxu0
      %v2306 = vadd.f32 %v2126, %v2305
      %2307 = vmatmul.bf16.gmra.mxu0 %v2184
      %v2308 = vpop.f32.mrf.mxu0
      %v2309 = vadd.f32 %v2126, %v2308
      %v2310 = vpop.f32.mrf.mxu0
      %v2311 = vadd.f32 %v2126, %v2310
      %2312 = vmatmul.bf16.gmra.mxu0 %v2187
      %v2313 = vpop.f32.mrf.mxu0
      %v2314 = vadd.f32 %v2126, %v2313
      %v2315 = vpop.f32.mrf.mxu0
      %v2316 = vadd.f32 %v2126, %v2315
      %2317 = vmatmul.bf16.gmra.mxu0 %v2190
      %v2318 = vpop.f32.mrf.mxu0
      %v2319 = vadd.f32 %v2126, %v2318
      %v2320 = vpop.f32.mrf.mxu0
      %v2321 = vadd.f32 %v2126, %v2320
      %2322 = vmatmul.bf16.gmra.mxu0 %v2193
      %v2323 = vpop.f32.mrf.mxu0
      %v2324 = vadd.f32 %v2126, %v2323
      %v2325 = vpop.f32.mrf.mxu0
      %v2326 = vadd.f32 %v2126, %v2325
      %2327 = vmatmul.bf16.gmra.mxu0 %v2196
      %v2328 = vpop.f32.mrf.mxu0
      %v2329 = vadd.f32 %v2126, %v2328
      %v2330 = vpop.f32.mrf.mxu0
      %v2331 = vadd.f32 %v2126, %v2330
      %2332 = vmatmul.bf16.gmra.mxu0 %v2199
      %v2333 = vpop.f32.mrf.mxu0
      %v2334 = vadd.f32 %v2126, %v2333
      %v2335 = vpop.f32.mrf.mxu0
      %v2336 = vadd.f32 %v2126, %v2335
      %2337 = vmatmul.bf16.gmra.mxu0 %v2202
      %v2338 = vpop.f32.mrf.mxu0
      %v2339 = vadd.f32 %v2126, %v2338
      %v2340 = vpop.f32.mrf.mxu0
      %v2341 = vadd.f32 %v2126, %v2340
      %2342 = vmatmul.bf16.gmra.mxu0 %v2205
      %v2343 = vpop.f32.mrf.mxu0
      %v2344 = vadd.f32 %v2126, %v2343
      %v2345 = vpop.f32.mrf.mxu0
      %v2346 = vadd.f32 %v2126, %v2345
      %2347 = vmatmul.bf16.gmra.mxu0 %v2208
      %v2348 = vpop.f32.mrf.mxu0
      %v2349 = vadd.f32 %v2126, %v2348
      %v2350 = vpop.f32.mrf.mxu0
      %v2351 = vadd.f32 %v2126, %v2350
      %2352 = vmatmul.bf16.gmra.mxu0 %v2211
      %v2353 = vpop.f32.mrf.mxu0
      %v2354 = vadd.f32 %v2126, %v2353
      %v2355 = vpop.f32.mrf.mxu0
      %v2356 = vadd.f32 %v2126, %v2355
      %2357 = vmatmul.bf16.gmra.mxu0 %v2214
      %v2358 = vpop.f32.mrf.mxu0
      %v2359 = vadd.f32 %v2126, %v2358
      %v2360 = vpop.f32.mrf.mxu0
      %v2361 = vadd.f32 %v2126, %v2360
      %2362 = vmatmul.bf16.gmra.mxu0 %v2217
      %v2363 = vpop.f32.mrf.mxu0
      %v2364 = vadd.f32 %v2126, %v2363
      %v2365 = vpop.f32.mrf.mxu0
      %v2366 = vadd.f32 %v2126, %v2365
      %2367 = vmatmul.bf16.gmra.mxu0 %v2220
      %v2368 = vpop.f32.mrf.mxu0
      %v2369 = vadd.f32 %v2126, %v2368
      %v2370 = vpop.f32.mrf.mxu0
      %v2371 = vadd.f32 %v2126, %v2370
      %2372 = vmatmul.bf16.gmra.mxu0 %v2223
      %v2373 = vpop.f32.mrf.mxu0
      %v2374 = vadd.f32 %v2126, %v2373
      %v2375 = vpop.f32.mrf.mxu0
      %v2376 = vadd.f32 %v2126, %v2375
      %2377 = vmatmul.bf16.gmra.mxu0 %v2226
      %v2378 = vpop.f32.mrf.mxu0
      %v2379 = vadd.f32 %v2126, %v2378
      %v2380 = vpop.f32.mrf.mxu0
      %v2381 = vadd.f32 %v2126, %v2380
      %2382 = vmatmul.bf16.gmra.mxu0 %v2229
      %v2383 = vpop.f32.mrf.mxu0
      %v2384 = vadd.f32 %v2126, %v2383
      %v2385 = vpop.f32.mrf.mxu0
      %v2386 = vadd.f32 %v2126, %v2385
      %2387 = vmatmul.bf16.gmra.mxu0 %v2232
      %v2388 = vpop.f32.mrf.mxu0
      %v2389 = vadd.f32 %v2126, %v2388
      %v2390 = vpop.f32.mrf.mxu0
      %v2391 = vadd.f32 %v2126, %v2390
      %2392 = vmatmul.bf16.gmra.mxu0 %v2235
      %v2393 = vpop.f32.mrf.mxu0
      %v2394 = vadd.f32 %v2126, %v2393
      %v2395 = vpop.f32.mrf.mxu0
      %v2396 = vadd.f32 %v2126, %v2395
      %2397 = vmatmul.bf16.gmra.mxu0 %v2238
      %v2398 = vpop.f32.mrf.mxu0
      %v2399 = vadd.f32 %v2126, %v2398
      %v2400 = vpop.f32.mrf.mxu0
      %v2401 = vadd.f32 %v2126, %v2400
      %2402 = vmatmul.bf16.gmra.mxu0 %v2241
      %v2403 = vpop.f32.mrf.mxu0
      %v2404 = vadd.f32 %v2126, %v2403
      %v2405 = vpop.f32.mrf.mxu0
      %v2406 = vadd.f32 %v2126, %v2405
      %2407 = vmatmul.bf16.gmra.mxu0 %v2244
      %v2408 = vpop.f32.mrf.mxu0
      %v2409 = vadd.f32 %v2126, %v2408
      %v2410 = vpop.f32.mrf.mxu0
      %v2411 = vadd.f32 %v2126, %v2410
      %2412 = vmatmul.bf16.gmra.mxu0 %v2247
      %v2413 = vpop.f32.mrf.mxu0
      %v2414 = vadd.f32 %v2126, %v2413
      %v2415 = vpop.f32.mrf.mxu0
      %v2416 = vadd.f32 %v2126, %v2415
      %2417 = vdwg.mxu0
      %v2418 = vpack.c.bf16 %v2259, %v2259
      %v2419 = vpack.c.bf16 %v2261, %v2261
      %v2420 = vpack.c.bf16 %v2264, %v2264
      %v2421 = vpack.c.bf16 %v2266, %v2266
      %v2422 = vpack.c.bf16 %v2269, %v2269
      %v2423 = vpack.c.bf16 %v2271, %v2271
      %v2424 = vpack.c.bf16 %v2274, %v2274
      %v2425 = vpack.c.bf16 %v2276, %v2276
      %v2426 = vpack.c.bf16 %v2279, %v2279
      %v2427 = vpack.c.bf16 %v2281, %v2281
      %v2428 = vpack.c.bf16 %v2284, %v2284
      %v2429 = vpack.c.bf16 %v2286, %v2286
      %v2430 = vpack.c.bf16 %v2289, %v2289
      %v2431 = vpack.c.bf16 %v2291, %v2291
      %v2432 = vpack.c.bf16 %v2294, %v2294
      %v2433 = vpack.c.bf16 %v2296, %v2296
      %v2434 = vpack.c.bf16 %v2299, %v2299
      %v2435 = vpack.c.bf16 %v2301, %v2301
      %v2436 = vpack.c.bf16 %v2304, %v2304
      %v2437 = vpack.c.bf16 %v2306, %v2306
      %v2438 = vpack.c.bf16 %v2309, %v2309
      %v2439 = vpack.c.bf16 %v2311, %v2311
      %v2440 = vpack.c.bf16 %v2314, %v2314
      %v2441 = vpack.c.bf16 %v2316, %v2316
      %v2442 = vpack.c.bf16 %v2319, %v2319
      %v2443 = vpack.c.bf16 %v2321, %v2321
      %v2444 = vpack.c.bf16 %v2324, %v2324
      %v2445 = vpack.c.bf16 %v2326, %v2326
      %v2446 = vpack.c.bf16 %v2329, %v2329
      %v2447 = vpack.c.bf16 %v2331, %v2331
      %v2448 = vpack.c.bf16 %v2334, %v2334
      %v2449 = vpack.c.bf16 %v2336, %v2336
      %v2450 = vpack.c.bf16 %v2339, %v2339
      %v2451 = vpack.c.bf16 %v2341, %v2341
      %v2452 = vpack.c.bf16 %v2344, %v2344
      %v2453 = vpack.c.bf16 %v2346, %v2346
      %v2454 = vpack.c.bf16 %v2349, %v2349
      %v2455 = vpack.c.bf16 %v2351, %v2351
      %v2456 = vpack.c.bf16 %v2354, %v2354
      %v2457 = vpack.c.bf16 %v2356, %v2356
      %v2458 = vpack.c.bf16 %v2359, %v2359
      %v2459 = vpack.c.bf16 %v2361, %v2361
      %v2460 = vpack.c.bf16 %v2364, %v2364
      %v2461 = vpack.c.bf16 %v2366, %v2366
      %v2462 = vpack.c.bf16 %v2369, %v2369
      %v2463 = vpack.c.bf16 %v2371, %v2371
      %v2464 = vpack.c.bf16 %v2374, %v2374
      %v2465 = vpack.c.bf16 %v2376, %v2376
      %v2466 = vpack.c.bf16 %v2379, %v2379
      %v2467 = vpack.c.bf16 %v2381, %v2381
      %v2468 = vpack.c.bf16 %v2384, %v2384
      %v2469 = vpack.c.bf16 %v2386, %v2386
      %v2470 = vpack.c.bf16 %v2389, %v2389
      %v2471 = vpack.c.bf16 %v2391, %v2391
      %v2472 = vpack.c.bf16 %v2394, %v2394
      %v2473 = vpack.c.bf16 %v2396, %v2396
      %v2474 = vpack.c.bf16 %v2399, %v2399
      %v2475 = vpack.c.bf16 %v2401, %v2401
      %v2476 = vpack.c.bf16 %v2404, %v2404
      %v2477 = vpack.c.bf16 %v2406, %v2406
      %v2478 = vpack.c.bf16 %v2409, %v2409
      %v2479 = vpack.c.bf16 %v2411, %v2411
      %v2480 = vpack.c.bf16 %v2414, %v2414
      %v2481 = vpack.c.bf16 %v2416, %v2416
      %vm2482 = vcmask 257024
      %2483 = vst.msk [vmem:[%s280] sm:$0xf] %vm2482, %v2418
      %2484 = vst.msk [vmem:[%s280 + $0x4] sm:$0xf] %vm2482, %v2419
      %2485 = vst.msk [vmem:[%s280 + $0x8] sm:$0xf] %vm2482, %v2420
      %2486 = vst.msk [vmem:[%s280 + $0xc] sm:$0xf] %vm2482, %v2421
      %2487 = vst.msk [vmem:[%s280 + $0x10] sm:$0xf] %vm2482, %v2422
      %2488 = vst.msk [vmem:[%s280 + $0x14] sm:$0xf] %vm2482, %v2423
      %2489 = vst.msk [vmem:[%s280 + $0x18] sm:$0xf] %vm2482, %v2424
      %2490 = vst.msk [vmem:[%s280 + $0x1c] sm:$0xf] %vm2482, %v2425
      %2491 = vst.msk [vmem:[%s280 + $0x20] sm:$0xf] %vm2482, %v2426
      %2492 = vst.msk [vmem:[%s280 + $0x24] sm:$0xf] %vm2482, %v2427
      %2493 = vst.msk [vmem:[%s280 + $0x28] sm:$0xf] %vm2482, %v2428
      %2494 = vst.msk [vmem:[%s280 + $0x2c] sm:$0xf] %vm2482, %v2429
      %2495 = vst.msk [vmem:[%s280 + $0x30] sm:$0xf] %vm2482, %v2430
      %2496 = vst.msk [vmem:[%s280 + $0x34] sm:$0xf] %vm2482, %v2431
      %2497 = vst.msk [vmem:[%s280 + $0x38] sm:$0xf] %vm2482, %v2432
      %2498 = vst.msk [vmem:[%s280 + $0x3c] sm:$0xf] %vm2482, %v2433
      %2499 = vst.msk [vmem:[%s280 + $0x40] sm:$0xf] %vm2482, %v2434
      %2500 = vst.msk [vmem:[%s280 + $0x44] sm:$0xf] %vm2482, %v2435
      %2501 = vst.msk [vmem:[%s280 + $0x48] sm:$0xf] %vm2482, %v2436
      %2502 = vst.msk [vmem:[%s280 + $0x4c] sm:$0xf] %vm2482, %v2437
      %2503 = vst.msk [vmem:[%s280 + $0x50] sm:$0xf] %vm2482, %v2438
      %2504 = vst.msk [vmem:[%s280 + $0x54] sm:$0xf] %vm2482, %v2439
      %2505 = vst.msk [vmem:[%s280 + $0x58] sm:$0xf] %vm2482, %v2440
      %2506 = vst.msk [vmem:[%s280 + $0x5c] sm:$0xf] %vm2482, %v2441
      %2507 = vst.msk [vmem:[%s280 + $0x60] sm:$0xf] %vm2482, %v2442
      %2508 = vst.msk [vmem:[%s280 + $0x64] sm:$0xf] %vm2482, %v2443
      %2509 = vst.msk [vmem:[%s280 + $0x68] sm:$0xf] %vm2482, %v2444
      %2510 = vst.msk [vmem:[%s280 + $0x6c] sm:$0xf] %vm2482, %v2445
      %2511 = vst.msk [vmem:[%s280 + $0x70] sm:$0xf] %vm2482, %v2446
      %2512 = vst.msk [vmem:[%s280 + $0x74] sm:$0xf] %vm2482, %v2447
      %2513 = vst.msk [vmem:[%s280 + $0x78] sm:$0xf] %vm2482, %v2448
      %2514 = vst.msk [vmem:[%s280 + $0x7c] sm:$0xf] %vm2482, %v2449
      %2515 = vst.msk [vmem:[%s280 + $0x80] sm:$0xf] %vm2482, %v2450
      %2516 = vst.msk [vmem:[%s280 + $0x84] sm:$0xf] %vm2482, %v2451
      %2517 = vst.msk [vmem:[%s280 + $0x88] sm:$0xf] %vm2482, %v2452
      %2518 = vst.msk [vmem:[%s280 + $0x8c] sm:$0xf] %vm2482, %v2453
      %2519 = vst.msk [vmem:[%s280 + $0x90] sm:$0xf] %vm2482, %v2454
      %2520 = vst.msk [vmem:[%s280 + $0x94] sm:$0xf] %vm2482, %v2455
      %2521 = vst.msk [vmem:[%s280 + $0x98] sm:$0xf] %vm2482, %v2456
      %2522 = vst.msk [vmem:[%s280 + $0x9c] sm:$0xf] %vm2482, %v2457
      %2523 = vst.msk [vmem:[%s280 + $0xa0] sm:$0xf] %vm2482, %v2458
      %2524 = vst.msk [vmem:[%s280 + $0xa4] sm:$0xf] %vm2482, %v2459
      %2525 = vst.msk [vmem:[%s280 + $0xa8] sm:$0xf] %vm2482, %v2460
      %2526 = vst.msk [vmem:[%s280 + $0xac] sm:$0xf] %vm2482, %v2461
      %2527 = vst.msk [vmem:[%s280 + $0xb0] sm:$0xf] %vm2482, %v2462
      %2528 = vst.msk [vmem:[%s280 + $0xb4] sm:$0xf] %vm2482, %v2463
      %2529 = vst.msk [vmem:[%s280 + $0xb8] sm:$0xf] %vm2482, %v2464
      %2530 = vst.msk [vmem:[%s280 + $0xbc] sm:$0xf] %vm2482, %v2465
      %2531 = vst.msk [vmem:[%s280 + $0xc0] sm:$0xf] %vm2482, %v2466
      %2532 = vst.msk [vmem:[%s280 + $0xc4] sm:$0xf] %vm2482, %v2467
      %2533 = vst.msk [vmem:[%s280 + $0xc8] sm:$0xf] %vm2482, %v2468
      %2534 = vst.msk [vmem:[%s280 + $0xcc] sm:$0xf] %vm2482, %v2469
      %2535 = vst.msk [vmem:[%s280 + $0xd0] sm:$0xf] %vm2482, %v2470
      %2536 = vst.msk [vmem:[%s280 + $0xd4] sm:$0xf] %vm2482, %v2471
      %2537 = vst.msk [vmem:[%s280 + $0xd8] sm:$0xf] %vm2482, %v2472
      %2538 = vst.msk [vmem:[%s280 + $0xdc] sm:$0xf] %vm2482, %v2473
      %2539 = vst.msk [vmem:[%s280 + $0xe0] sm:$0xf] %vm2482, %v2474
      %2540 = vst.msk [vmem:[%s280 + $0xe4] sm:$0xf] %vm2482, %v2475
      %2541 = vst.msk [vmem:[%s280 + $0xe8] sm:$0xf] %vm2482, %v2476
      %2542 = vst.msk [vmem:[%s280 + $0xec] sm:$0xf] %vm2482, %v2477
      %2543 = vst.msk [vmem:[%s280 + $0xf0] sm:$0xf] %vm2482, %v2478
      %2544 = vst.msk [vmem:[%s280 + $0xf4] sm:$0xf] %vm2482, %v2479
      %2545 = vst.msk [vmem:[%s280 + $0xf8] sm:$0xf] %vm2482, %v2480
      %2546 = vst.msk [vmem:[%s280 + $0xfc] sm:$0xf] %vm2482, %v2481
      %s2547 = smul.u32 64, %s18
      %p2548 = scmp.lt.s32.totalorder %s2547, 4991
      %s2549 = scalar_select %p2548, %s2547, 4991
      %s2550 = smul.addr %s2549, 4
      %s2551 = scalar_lea.vmem %s7, %s2550
      // Predicated region
      $region49: #{voxel2d_forward.2} parent=47 // pred_check
        %p2552 = pneg %p188
      $region50: #{voxel2d_forward.2} parent=47 // pred_check_branch
        %2554 = sbr.rel (%p2552) target = $region52
      $region51: #{voxel2d_forward.2} parent=47 // pred_region
        %s2555 = smul.u32 64, %s18
      $region52: #{voxel2d_forward.2} parent=47 // pred_fallthru
        _
    $region48: #{voxel2d_forward.2} parent=5 // pred_fallthru
      _
    %p2556 = scmp.le.s32.totalorder 2, %s13
    // Predicated region
    $region53: #{voxel2d_forward.2} parent=5 // pred_check
      %p2557 = pneg %p2556
    $region54: #{voxel2d_forward.2} parent=5 // pred_check_branch
      %2559 = sbr.rel (%p2557) target = $region56
    $region55: #{voxel2d_forward.2} parent=5 // pred_region
      %s2560 = ssub.s32 %s13, 2
      // Predicated region
      $region57: #{voxel2d_forward.2} parent=55 // pred_check
        %p2561 = pneg %p194
      $region58: #{voxel2d_forward.2} parent=55 // pred_check_branch
        %2563 = sbr.rel (%p2561) target = $region60
      $region59: #{voxel2d_forward.2} parent=55 // pred_region
        %s2564 = smul.u32 64, %s19
        %p2565 = scmp.lt.s32.totalorder %s2564, 4991
        %s2566 = scalar_select %p2565, %s2564, 4991
        %s2567 = smul.addr %s2566, 4
        %s2568 = scalar_lea.vmem %s7, %s2567
      $region60: #{voxel2d_forward.2} parent=55 // pred_fallthru
        _
    $region56: #{voxel2d_forward.2} parent=5 // pred_fallthru
      _
  $region6: #{voxel2d_forward.2} parent=0 // loop_footer
    %s17 = sadd.s32 1, %s13
  $region7: #{voxel2d_forward.2} parent=0 // loop_footer_branch
    %12 = sbr.rel target = $region3
  $region8: #{voxel2d_forward.2} parent=0 // loop_exit
    _

// kernel: mul.407
$region0: #{mul.407}
  %s0 = inlined_call_operand.vmem [shape: f32[24,2,208], index: 0, kind: input, shape index: {}]
  %s1 = inlined_call_operand.vmem [shape: f32[48,208], index: 1, kind: output, shape index: {}]
  $region1: #{mul.407} parent=0
    #allocation0 [shape = 'u8[196608]{0}', space=vmem, size = 0x30000, scoped, tag = 'scoped mem for input reshape']
    %s3 = ssub.s32 4, 1
    %s4 = scalar_lea.vmem %s0, 94
    %v5 = vld [vmem:[%s4] sm:%s3]
    %s6 = scalar_lea.vmem [#allocation0], 376
    %7 = vst [vmem:[%s6] sm:%s3] %v5
    %s8 = scalar_lea.vmem %s0, 92
    %v9 = vld [vmem:[%s8] sm:%s3]
    %s10 = scalar_lea.vmem [#allocation0], 368
    %11 = vst [vmem:[%s10] sm:%s3] %v9
    %s12 = scalar_lea.vmem %s0, 90
    %v13 = vld [vmem:[%s12] sm:%s3]
    %s14 = scalar_lea.vmem [#allocation0], 360
    %15 = vst [vmem:[%s14] sm:%s3] %v13
    %s16 = scalar_lea.vmem %s0, 88
    %v17 = vld [vmem:[%s16] sm:%s3]
    %s18 = scalar_lea.vmem [#allocation0], 352
    %19 = vst [vmem:[%s18] sm:%s3] %v17
    %s20 = scalar_lea.vmem %s0, 86
    %v21 = vld [vmem:[%s20] sm:%s3]
    %s22 = scalar_lea.vmem [#allocation0], 344
    %23 = vst [vmem:[%s22] sm:%s3] %v21
    %s24 = scalar_lea.vmem %s0, 84
    %v25 = vld [vmem:[%s24] sm:%s3]
    %s26 = scalar_lea.vmem [#allocation0], 336
    %27 = vst [vmem:[%s26] sm:%s3] %v25
    %s28 = scalar_lea.vmem %s0, 82
    %v29 = vld [vmem:[%s28] sm:%s3]
    %s30 = scalar_lea.vmem [#allocation0], 328
    %31 = vst [vmem:[%s30] sm:%s3] %v29
    %s32 = scalar_lea.vmem %s0, 80
    %v33 = vld [vmem:[%s32] sm:%s3]
    %s34 = scalar_lea.vmem [#allocation0], 320
    %35 = vst [vmem:[%s34] sm:%s3] %v33
    %s36 = scalar_lea.vmem %s0, 78
    %v37 = vld [vmem:[%s36] sm:%s3]
    %s38 = scalar_lea.vmem [#allocation0], 312
    %39 = vst [vmem:[%s38] sm:%s3] %v37
    %s40 = scalar_lea.vmem %s0, 76
    %v41 = vld [vmem:[%s40] sm:%s3]
    %s42 = scalar_lea.vmem [#allocation0], 304
    %43 = vst [vmem:[%s42] sm:%s3] %v41
    %s44 = scalar_lea.vmem %s0, 74
    %v45 = vld [vmem:[%s44] sm:%s3]
    %s46 = scalar_lea.vmem [#allocation0], 296
    %47 = vst [vmem:[%s46] sm:%s3] %v45
    %s48 = scalar_lea.vmem %s0, 72
    %v49 = vld [vmem:[%s48] sm:%s3]
    %s50 = scalar_lea.vmem [#allocation0], 288
    %51 = vst [vmem:[%s50] sm:%s3] %v49
    %s52 = scalar_lea.vmem %s0, 70
    %v53 = vld [vmem:[%s52] sm:%s3]
    %s54 = scalar_lea.vmem [#allocation0], 280
    %55 = vst [vmem:[%s54] sm:%s3] %v53
    %s56 = scalar_lea.vmem %s0, 68
    %v57 = vld [vmem:[%s56] sm:%s3]
    %s58 = scalar_lea.vmem [#allocation0], 272
    %59 = vst [vmem:[%s58] sm:%s3] %v57
    %s60 = scalar_lea.vmem %s0, 66
    %v61 = vld [vmem:[%s60] sm:%s3]
    %s62 = scalar_lea.vmem [#allocation0], 264
    %63 = vst [vmem:[%s62] sm:%s3] %v61
    %s64 = scalar_lea.vmem %s0, 64
    %v65 = vld [vmem:[%s64] sm:%s3]
    %s66 = scalar_lea.vmem [#allocation0], 256
    %67 = vst [vmem:[%s66] sm:%s3] %v65
    %s68 = scalar_lea.vmem %s0, 62
    %v69 = vld [vmem:[%s68] sm:%s3]
    %s70 = scalar_lea.vmem [#allocation0], 248
    %71 = vst [vmem:[%s70] sm:%s3] %v69
    %s72 = scalar_lea.vmem %s0, 60
    %v73 = vld [vmem:[%s72] sm:%s3]
    %s74 = scalar_lea.vmem [#allocation0], 240
    %75 = vst [vmem:[%s74] sm:%s3] %v73
    %s76 = scalar_lea.vmem %s0, 58
    %v77 = vld [vmem:[%s76] sm:%s3]
    %s78 = scalar_lea.vmem [#allocation0], 232
    %79 = vst [vmem:[%s78] sm:%s3] %v77
    %s80 = scalar_lea.vmem %s0, 56
    %v81 = vld [vmem:[%s80] sm:%s3]
    %s82 = scalar_lea.vmem [#allocation0], 224
    %83 = vst [vmem:[%s82] sm:%s3] %v81
    %s84 = scalar_lea.vmem %s0, 54
    %v85 = vld [vmem:[%s84] sm:%s3]
    %s86 = scalar_lea.vmem [#allocation0], 216
    %87 = vst [vmem:[%s86] sm:%s3] %v85
    %s88 = scalar_lea.vmem %s0, 52
    %v89 = vld [vmem:[%s88] sm:%s3]
    %s90 = scalar_lea.vmem [#allocation0], 208
    %91 = vst [vmem:[%s90] sm:%s3] %v89
    %s92 = scalar_lea.vmem %s0, 50
    %v93 = vld [vmem:[%s92] sm:%s3]
    %s94 = scalar_lea.vmem [#allocation0], 200
    %95 = vst [vmem:[%s94] sm:%s3] %v93
    %s96 = scalar_lea.vmem %s0, 48
    %v97 = vld [vmem:[%s96] sm:%s3]
    %s98 = scalar_lea.vmem [#allocation0], 192
    %99 = vst [vmem:[%s98] sm:%s3] %v97
    %s100 = scalar_lea.vmem %s0, 46
    %v101 = vld [vmem:[%s100] sm:%s3]
    %s102 = scalar_lea.vmem [#allocation0], 184
    %103 = vst [vmem:[%s102] sm:%s3] %v101
    %s104 = scalar_lea.vmem %s0, 44
    %v105 = vld [vmem:[%s104] sm:%s3]
    %s106 = scalar_lea.vmem [#allocation0], 176
    %107 = vst [vmem:[%s106] sm:%s3] %v105
    %s108 = scalar_lea.vmem %s0, 42
    %v109 = vld [vmem:[%s108] sm:%s3]
    %s110 = scalar_lea.vmem [#allocation0], 168
    %111 = vst [vmem:[%s110] sm:%s3] %v109
    %s112 = scalar_lea.vmem %s0, 40
    %v113 = vld [vmem:[%s112] sm:%s3]
    %s114 = scalar_lea.vmem [#allocation0], 160
    %115 = vst [vmem:[%s114] sm:%s3] %v113
    %s116 = scalar_lea.vmem %s0, 38
    %v117 = vld [vmem:[%s116] sm:%s3]
    %s118 = scalar_lea.vmem [#allocation0], 152
    %119 = vst [vmem:[%s118] sm:%s3] %v117
    %s120 = scalar_lea.vmem %s0, 36
    %v121 = vld [vmem:[%s120] sm:%s3]
    %s122 = scalar_lea.vmem [#allocation0], 144
    %123 = vst [vmem:[%s122] sm:%s3] %v121
    %s124 = scalar_lea.vmem %s0, 34
    %v125 = vld [vmem:[%s124] sm:%s3]
    %s126 = scalar_lea.vmem [#allocation0], 136
    %127 = vst [vmem:[%s126] sm:%s3] %v125
    %s128 = scalar_lea.vmem %s0, 32
    %v129 = vld [vmem:[%s128] sm:%s3]
    %s130 = scalar_lea.vmem [#allocation0], 128
    %131 = vst [vmem:[%s130] sm:%s3] %v129
    %s132 = scalar_lea.vmem %s0, 30
    %v133 = vld [vmem:[%s132] sm:%s3]
    %s134 = scalar_lea.vmem [#allocation0], 120
    %135 = vst [vmem:[%s134] sm:%s3] %v133
    %s136 = scalar_lea.vmem %s0, 28
    %v137 = vld [vmem:[%s136] sm:%s3]
    %s138 = scalar_lea.vmem [#allocation0], 112
    %139 = vst [vmem:[%s138] sm:%s3] %v137
    %s140 = scalar_lea.vmem %s0, 26
    %v141 = vld [vmem:[%s140] sm:%s3]
    %s142 = scalar_lea.vmem [#allocation0], 104
    %143 = vst [vmem:[%s142] sm:%s3] %v141
    %s144 = scalar_lea.vmem %s0, 24
    %v145 = vld [vmem:[%s144] sm:%s3]
    %s146 = scalar_lea.vmem [#allocation0], 96
    %147 = vst [vmem:[%s146] sm:%s3] %v145
    %s148 = scalar_lea.vmem %s0, 22
    %v149 = vld [vmem:[%s148] sm:%s3]
    %s150 = scalar_lea.vmem [#allocation0], 88
    %151 = vst [vmem:[%s150] sm:%s3] %v149
    %s152 = scalar_lea.vmem %s0, 20
    %v153 = vld [vmem:[%s152] sm:%s3]
    %s154 = scalar_lea.vmem [#allocation0], 80
    %155 = vst [vmem:[%s154] sm:%s3] %v153
    %s156 = scalar_lea.vmem %s0, 18
    %v157 = vld [vmem:[%s156] sm:%s3]
    %s158 = scalar_lea.vmem [#allocation0], 72
    %159 = vst [vmem:[%s158] sm:%s3] %v157
    %s160 = scalar_lea.vmem %s0, 16
    %v161 = vld [vmem:[%s160] sm:%s3]
    %s162 = scalar_lea.vmem [#allocation0], 64
    %163 = vst [vmem:[%s162] sm:%s3] %v161
    %s164 = scalar_lea.vmem %s0, 14
    %v165 = vld [vmem:[%s164] sm:%s3]
    %s166 = scalar_lea.vmem [#allocation0], 56
    %167 = vst [vmem:[%s166] sm:%s3] %v165
    %s168 = scalar_lea.vmem %s0, 12
    %v169 = vld [vmem:[%s168] sm:%s3]
    %s170 = scalar_lea.vmem [#allocation0], 48
    %171 = vst [vmem:[%s170] sm:%s3] %v169
    %s172 = scalar_lea.vmem %s0, 10
    %v173 = vld [vmem:[%s172] sm:%s3]
    %s174 = scalar_lea.vmem [#allocation0], 40
    %175 = vst [vmem:[%s174] sm:%s3] %v173
    %s176 = scalar_lea.vmem %s0, 8
    %v177 = vld [vmem:[%s176] sm:%s3]
    %s178 = scalar_lea.vmem [#allocation0], 32
    %179 = vst [vmem:[%s178] sm:%s3] %v177
    %s180 = scalar_lea.vmem %s0, 6
    %v181 = vld [vmem:[%s180] sm:%s3]
    %s182 = scalar_lea.vmem [#allocation0], 24
    %183 = vst [vmem:[%s182] sm:%s3] %v181
    %s184 = scalar_lea.vmem %s0, 4
    %v185 = vld [vmem:[%s184] sm:%s3]
    %s186 = scalar_lea.vmem [#allocation0], 16
    %187 = vst [vmem:[%s186] sm:%s3] %v185
    %s188 = scalar_lea.vmem %s0, 2
    %v189 = vld [vmem:[%s188] sm:%s3]
    %s190 = scalar_lea.vmem [#allocation0], 8
    %191 = vst [vmem:[%s190] sm:%s3] %v189
    %v192 = vld [vmem:[%s0] sm:%s3]
    %193 = vst [vmem:[#allocation0] sm:%s3] %v192
    %s194 = scalar_lea.vmem [#allocation0], 8
    %v195 = vld [vmem:[%s194] sm:$0x3]
    %vm196 = vcmask 654336
    %s197 = scalar_lea.vmem %s1, 8
    %198 = vst.msk [vmem:[%s197] sm:$0x3] %vm196, %v195
    %s199 = scalar_lea.vmem [#allocation0], 24
    %v200 = vld [vmem:[%s199] sm:$0x3]
    %vm201 = vcmask 654336
    %s202 = scalar_lea.vmem %s1, 10
    %203 = vst.msk [vmem:[%s202] sm:$0x3] %vm201, %v200
    %s204 = scalar_lea.vmem [#allocation0], 40
    %v205 = vld [vmem:[%s204] sm:$0x3]
    %vm206 = vcmask 654336
    %s207 = scalar_lea.vmem %s1, 12
    %208 = vst.msk [vmem:[%s207] sm:$0x3] %vm206, %v205
    %s209 = scalar_lea.vmem [#allocation0], 56
    %v210 = vld [vmem:[%s209] sm:$0x3]
    %vm211 = vcmask 654336
    %s212 = scalar_lea.vmem %s1, 14
    %213 = vst.msk [vmem:[%s212] sm:$0x3] %vm211, %v210
    %s214 = scalar_lea.vmem [#allocation0], 72
    %v215 = vld [vmem:[%s214] sm:$0x3]
    %vm216 = vcmask 654336
    %s217 = scalar_lea.vmem %s1, 24
    %218 = vst.msk [vmem:[%s217] sm:$0x3] %vm216, %v215
    %s219 = scalar_lea.vmem [#allocation0], 88
    %v220 = vld [vmem:[%s219] sm:$0x3]
    %vm221 = vcmask 654336
    %s222 = scalar_lea.vmem %s1, 26
    %223 = vst.msk [vmem:[%s222] sm:$0x3] %vm221, %v220
    %s224 = scalar_lea.vmem [#allocation0], 104
    %v225 = vld [vmem:[%s224] sm:$0x3]
    %vm226 = vcmask 654336
    %s227 = scalar_lea.vmem %s1, 28
    %228 = vst.msk [vmem:[%s227] sm:$0x3] %vm226, %v225
    %s229 = scalar_lea.vmem [#allocation0], 120
    %v230 = vld [vmem:[%s229] sm:$0x3]
    %vm231 = vcmask 654336
    %s232 = scalar_lea.vmem %s1, 30
    %233 = vst.msk [vmem:[%s232] sm:$0x3] %vm231, %v230
    %s234 = scalar_lea.vmem [#allocation0], 136
    %v235 = vld [vmem:[%s234] sm:$0x3]
    %vm236 = vcmask 654336
    %s237 = scalar_lea.vmem %s1, 40
    %238 = vst.msk [vmem:[%s237] sm:$0x3] %vm236, %v235
    %s239 = scalar_lea.vmem [#allocation0], 152
    %v240 = vld [vmem:[%s239] sm:$0x3]
    %vm241 = vcmask 654336
    %s242 = scalar_lea.vmem %s1, 42
    %243 = vst.msk [vmem:[%s242] sm:$0x3] %vm241, %v240
    %s244 = scalar_lea.vmem [#allocation0], 168
    %v245 = vld [vmem:[%s244] sm:$0x3]
    %vm246 = vcmask 654336
    %s247 = scalar_lea.vmem %s1, 44
    %248 = vst.msk [vmem:[%s247] sm:$0x3] %vm246, %v245
    %s249 = scalar_lea.vmem [#allocation0], 184
    %v250 = vld [vmem:[%s249] sm:$0x3]
    %vm251 = vcmask 654336
    %s252 = scalar_lea.vmem %s1, 46
    %253 = vst.msk [vmem:[%s252] sm:$0x3] %vm251, %v250
    %s254 = scalar_lea.vmem [#allocation0], 200
    %v255 = vld [vmem:[%s254] sm:$0x3]
    %vm256 = vcmask 654336
    %s257 = scalar_lea.vmem %s1, 56
    %258 = vst.msk [vmem:[%s257] sm:$0x3] %vm256, %v255
    %s259 = scalar_lea.vmem [#allocation0], 216
    %v260 = vld [vmem:[%s259] sm:$0x3]
    %vm261 = vcmask 654336
    %s262 = scalar_lea.vmem %s1, 58
    %263 = vst.msk [vmem:[%s262] sm:$0x3] %vm261, %v260
    %s264 = scalar_lea.vmem [#allocation0], 232
    %v265 = vld [vmem:[%s264] sm:$0x3]
    %vm266 = vcmask 654336
    %s267 = scalar_lea.vmem %s1, 60
    %268 = vst.msk [vmem:[%s267] sm:$0x3] %vm266, %v265
    %s269 = scalar_lea.vmem [#allocation0], 248
    %v270 = vld [vmem:[%s269] sm:$0x3]
    %vm271 = vcmask 654336
    %s272 = scalar_lea.vmem %s1, 62
    %273 = vst.msk [vmem:[%s272] sm:$0x3] %vm271, %v270
    %s274 = scalar_lea.vmem [#allocation0], 264
    %v275 = vld [vmem:[%s274] sm:$0x3]
    %vm276 = vcmask 654336
    %s277 = scalar_lea.vmem %s1, 72
    %278 = vst.msk [vmem:[%s277] sm:$0x3] %vm276, %v275
    %s279 = scalar_lea.vmem [#allocation0], 280
    %v280 = vld [vmem:[%s279] sm:$0x3]
    %vm281 = vcmask 654336
    %s282 = scalar_lea.vmem %s1, 74
    %283 = vst.msk [vmem:[%s282] sm:$0x3] %vm281, %v280
    %s284 = scalar_lea.vmem [#allocation0], 296
    %v285 = vld [vmem:[%s284] sm:$0x3]
    %vm286 = vcmask 654336
    %s287 = scalar_lea.vmem %s1, 76
    %288 = vst.msk [vmem:[%s287] sm:$0x3] %vm286, %v285
    %s289 = scalar_lea.vmem [#allocation0], 312
    %v290 = vld [vmem:[%s289] sm:$0x3]
    %vm291 = vcmask 654336
    %s292 = scalar_lea.vmem %s1, 78
    %293 = vst.msk [vmem:[%s292] sm:$0x3] %vm291, %v290
    %s294 = scalar_lea.vmem [#allocation0], 328
    %v295 = vld [vmem:[%s294] sm:$0x3]
    %vm296 = vcmask 654336
    %s297 = scalar_lea.vmem %s1, 88
    %298 = vst.msk [vmem:[%s297] sm:$0x3] %vm296, %v295
    %s299 = scalar_lea.vmem [#allocation0], 344
    %v300 = vld [vmem:[%s299] sm:$0x3]
    %vm301 = vcmask 654336
    %s302 = scalar_lea.vmem %s1, 90
    %303 = vst.msk [vmem:[%s302] sm:$0x3] %vm301, %v300
    %s304 = scalar_lea.vmem [#allocation0], 360
    %v305 = vld [vmem:[%s304] sm:$0x3]
    %vm306 = vcmask 654336
    %s307 = scalar_lea.vmem %s1, 92
    %308 = vst.msk [vmem:[%s307] sm:$0x3] %vm306, %v305
    %s309 = scalar_lea.vmem [#allocation0], 376
    %v310 = vld [vmem:[%s309] sm:$0x3]
    %vm311 = vcmask 654336
    %s312 = scalar_lea.vmem %s1, 94
    %313 = vst.msk [vmem:[%s312] sm:$0x3] %vm311, %v310
    %v314 = vld [vmem:[#allocation0] sm:$0x3]
    %315 = vst [vmem:[%s1] sm:$0x3] %v314
    %s316 = scalar_lea.vmem [#allocation0], 16
    %v317 = vld [vmem:[%s316] sm:$0x3]
    %s318 = scalar_lea.vmem %s1, 2
    %319 = vst [vmem:[%s318] sm:$0x3] %v317
    %s320 = scalar_lea.vmem [#allocation0], 32
    %v321 = vld [vmem:[%s320] sm:$0x3]
    %s322 = scalar_lea.vmem %s1, 4
    %323 = vst [vmem:[%s322] sm:$0x3] %v321
    %s324 = scalar_lea.vmem [#allocation0], 48
    %v325 = vld [vmem:[%s324] sm:$0x3]
    %s326 = scalar_lea.vmem %s1, 6
    %327 = vst [vmem:[%s326] sm:$0x3] %v325
    %s328 = scalar_lea.vmem [#allocation0], 64
    %v329 = vld [vmem:[%s328] sm:$0x3]
    %s330 = scalar_lea.vmem %s1, 16
    %331 = vst [vmem:[%s330] sm:$0x3] %v329
    %s332 = scalar_lea.vmem [#allocation0], 80
    %v333 = vld [vmem:[%s332] sm:$0x3]
    %s334 = scalar_lea.vmem %s1, 18
    %335 = vst [vmem:[%s334] sm:$0x3] %v333
    %s336 = scalar_lea.vmem [#allocation0], 96
    %v337 = vld [vmem:[%s336] sm:$0x3]
    %s338 = scalar_lea.vmem %s1, 20
    %339 = vst [vmem:[%s338] sm:$0x3] %v337
    %s340 = scalar_lea.vmem [#allocation0], 112
    %v341 = vld [vmem:[%s340] sm:$0x3]
    %s342 = scalar_lea.vmem %s1, 22
    %343 = vst [vmem:[%s342] sm:$0x3] %v341
    %s344 = scalar_lea.vmem [#allocation0], 128
    %v345 = vld [vmem:[%s344] sm:$0x3]
    %s346 = scalar_lea.vmem %s1, 32
    %347 = vst [vmem:[%s346] sm:$0x3] %v345
    %s348 = scalar_lea.vmem [#allocation0], 144
    %v349 = vld [vmem:[%s348] sm:$0x3]
    %s350 = scalar_lea.vmem %s1, 34
    %351 = vst [vmem:[%s350] sm:$0x3] %v349
    %s352 = scalar_lea.vmem [#allocation0], 160
    %v353 = vld [vmem:[%s352] sm:$0x3]
    %s354 = scalar_lea.vmem %s1, 36
    %355 = vst [vmem:[%s354] sm:$0x3] %v353
    %s356 = scalar_lea.vmem [#allocation0], 176
    %v357 = vld [vmem:[%s356] sm:$0x3]
    %s358 = scalar_lea.vmem %s1, 38
    %359 = vst [vmem:[%s358] sm:$0x3] %v357
    %s360 = scalar_lea.vmem [#allocation0], 192
    %v361 = vld [vmem:[%s360] sm:$0x3]
    %s362 = scalar_lea.vmem %s1, 48
    %363 = vst [vmem:[%s362] sm:$0x3] %v361
    %s364 = scalar_lea.vmem [#allocation0], 208
    %v365 = vld [vmem:[%s364] sm:$0x3]
    %s366 = scalar_lea.vmem %s1, 50
    %367 = vst [vmem:[%s366] sm:$0x3] %v365
    %s368 = scalar_lea.vmem [#allocation0], 224
    %v369 = vld [vmem:[%s368] sm:$0x3]
    %s370 = scalar_lea.vmem %s1, 52
    %371 = vst [vmem:[%s370] sm:$0x3] %v369
    %s372 = scalar_lea.vmem [#allocation0], 240
    %v373 = vld [vmem:[%s372] sm:$0x3]
    %s374 = scalar_lea.vmem %s1, 54
    %375 = vst [vmem:[%s374] sm:$0x3] %v373
    %s376 = scalar_lea.vmem [#allocation0], 256
    %v377 = vld [vmem:[%s376] sm:$0x3]
    %s378 = scalar_lea.vmem %s1, 64
    %379 = vst [vmem:[%s378] sm:$0x3] %v377
    %s380 = scalar_lea.vmem [#allocation0], 272
    %v381 = vld [vmem:[%s380] sm:$0x3]
    %s382 = scalar_lea.vmem %s1, 66
    %383 = vst [vmem:[%s382] sm:$0x3] %v381
    %s384 = scalar_lea.vmem [#allocation0], 288
    %v385 = vld [vmem:[%s384] sm:$0x3]
    %s386 = scalar_lea.vmem %s1, 68
    %387 = vst [vmem:[%s386] sm:$0x3] %v385
    %s388 = scalar_lea.vmem [#allocation0], 304
    %v389 = vld [vmem:[%s388] sm:$0x3]
    %s390 = scalar_lea.vmem %s1, 70
    %391 = vst [vmem:[%s390] sm:$0x3] %v389
    %s392 = scalar_lea.vmem [#allocation0], 320
    %v393 = vld [vmem:[%s392] sm:$0x3]
    %s394 = scalar_lea.vmem %s1, 80
    %395 = vst [vmem:[%s394] sm:$0x3] %v393
    %s396 = scalar_lea.vmem [#allocation0], 336
    %v397 = vld [vmem:[%s396] sm:$0x3]
    %s398 = scalar_lea.vmem %s1, 82
    %399 = vst [vmem:[%s398] sm:$0x3] %v397
    %s400 = scalar_lea.vmem [#allocation0], 352
    %v401 = vld [vmem:[%s400] sm:$0x3]
    %s402 = scalar_lea.vmem %s1, 84
    %403 = vst [vmem:[%s402] sm:$0x3] %v401
    %s404 = scalar_lea.vmem [#allocation0], 368
    %v405 = vld [vmem:[%s404] sm:$0x3]
    %s406 = scalar_lea.vmem %s1, 86
    %407 = vst [vmem:[%s406] sm:$0x3] %v405

// kernel: voxel2d_forward.3
$region0: #{voxel2d_forward.3}
  #allocation0 [shape = 'u32[]', space=smem, size = 0x4, offset = 0x4, fixed_abs, tag = 'smem constant byte address 0x4 - core index']
  #allocation1 [shape = 'u32[72,128]{1,0:T(1,128)}', space=vmem, size = 0x9000, scoped, tag = 'internal scratch']
  %s0 = inlined_call_operand.vmem [shape: bf16[5376,864], index: 0, kind: input, shape index: {}]
  %s1 = inlined_call_operand.vmem [shape: bf16[864,128], index: 1, kind: input, shape index: {}]
  %s2 = inlined_call_operand.vmem [shape: f32[1,128], index: 2, kind: input, shape index: {}]
  %s3 = inlined_call_operand.vmem [shape: f32[5376,128], index: 3, kind: output, shape index: {}]
  %s4 = sld [smem:[#allocation0]]
  $region45: #{voxel2d_forward.3} parent=0
    _
  %s6 = ssub.s32 1, %s4
  %s7 = scalar_select 0, %s6, %s4
  loop: start=0, step=1, limit=14
  $region2: #{voxel2d_forward.3} parent=0 // loop_pre_header
    _
  $region3: #{voxel2d_forward.3} parent=0 // loop_header
    %s9 = sphi 0, %s13
    %p10 = scmp.ge.s32.totalorder %s9, 14
    %s16 = sphi 0, %s28
    %s17 = sphi 0, %s24
    %s18 = sphi 0, %s16
    %s19 = sphi 0, %s17
    %s20 = sphi 0, %s18
    %s21 = sphi 0, %s19
    %s31 = sphi 0, %s33
    %s34 = sphi 0, %s31
    %s35 = sphi 0, %s34
    %s51 = sphi 0, %s35
    %s57 = sphi 0, %s59
    %s60 = sphi 0, %s57
    %s61 = sphi 0, %s60
    %s77 = sphi 0, %s61
    %s83 = sphi 0, %s85
    %s86 = sphi 0, %s83
    %s87 = sphi 0, %s86
    %s103 = sphi 0, %s87
    %s111 = sphi 0, %s113
    %s114 = sphi 0, %s111
    %s115 = sphi 0, %s114
    %s131 = sphi 0, %s115
  $region4: #{voxel2d_forward.3} parent=0 // loop_header_branch
    %12 = sbr.rel (%p10) target = $region8
  $region5: #{voxel2d_forward.3} parent=0 // loop_body
    %s14 = ssub.s32 %s9, 1
    %s15 = ssub.s32 %s9, 2
    %s22 = sadd.s32 1, %s17
    %p23 = scmp.ge.s32.totalorder %s22, 1
    %s24 = scalar_select %p23, 0, %s22
    %s25 = sadd.s32 1, %s16
    %s26 = scalar_select %p23, %s25, %s16
    %p27 = scmp.ge.s32.totalorder %s26, 12
    %s28 = scalar_select %p27, 0, %s26
    %s29 = ssub.s32 %s16, %s28
    %p30 = scmp.eq.s32.totalorder %s29, 0
    %s32 = sadd.s32 %s31, 1
    %s33 = scalar_select %p30, %s31, %s32
    %p36 = pneg %p30
    %p37 = scmp.eq.s32.totalorder %s9, 11
    %p38 = por %p36, %p37
    %p39 = scmp.ne.s32.totalorder %s31, %s34
    %p40 = scmp.eq.s32.totalorder %s9, 0
    %p41 = por %p39, %p40
    %p42 = scmp.ne.s32.totalorder %s31, %s34
    %p43 = scmp.eq.s32.totalorder %s14, 11
    %p44 = por %p42, %p43
    %p45 = scmp.ne.s32.totalorder %s34, %s35
    %p46 = scmp.eq.s32.totalorder %s14, 0
    %p47 = por %p45, %p46
    %p48 = scmp.ne.s32.totalorder %s34, %s35
    %p49 = scmp.eq.s32.totalorder %s15, 11
    %p50 = por %p48, %p49
    %p52 = scmp.ne.s32.totalorder %s35, %s51
    %p53 = scmp.eq.s32.totalorder %s15, 0
    %p54 = por %p52, %p53
    %s55 = ssub.s32 %s17, %s24
    %p56 = scmp.eq.s32.totalorder %s55, 0
    %s58 = sadd.s32 %s57, 1
    %s59 = scalar_select %p56, %s57, %s58
    %p62 = pneg %p56
    %p63 = scmp.eq.s32.totalorder %s9, 11
    %p64 = por %p62, %p63
    %p65 = scmp.ne.s32.totalorder %s57, %s60
    %p66 = scmp.eq.s32.totalorder %s9, 0
    %p67 = por %p65, %p66
    %p68 = scmp.ne.s32.totalorder %s57, %s60
    %p69 = scmp.eq.s32.totalorder %s14, 11
    %p70 = por %p68, %p69
    %p71 = scmp.ne.s32.totalorder %s60, %s61
    %p72 = scmp.eq.s32.totalorder %s14, 0
    %p73 = por %p71, %p72
    %p74 = scmp.ne.s32.totalorder %s60, %s61
    %p75 = scmp.eq.s32.totalorder %s15, 11
    %p76 = por %p74, %p75
    %p78 = scmp.ne.s32.totalorder %s61, %s77
    %p79 = scmp.eq.s32.totalorder %s15, 0
    %p80 = por %p78, %p79
    %s81 = ssub.s32 %s17, %s24
    %p82 = scmp.eq.s32.totalorder %s81, 0
    %s84 = sadd.s32 %s83, 1
    %s85 = scalar_select %p82, %s83, %s84
    %p88 = pneg %p82
    %p89 = scmp.eq.s32.totalorder %s9, 11
    %p90 = por %p88, %p89
    %p91 = scmp.ne.s32.totalorder %s83, %s86
    %p92 = scmp.eq.s32.totalorder %s9, 0
    %p93 = por %p91, %p92
    %p94 = scmp.ne.s32.totalorder %s83, %s86
    %p95 = scmp.eq.s32.totalorder %s14, 11
    %p96 = por %p94, %p95
    %p97 = scmp.ne.s32.totalorder %s86, %s87
    %p98 = scmp.eq.s32.totalorder %s14, 0
    %p99 = por %p97, %p98
    %p100 = scmp.ne.s32.totalorder %s86, %s87
    %p101 = scmp.eq.s32.totalorder %s15, 11
    %p102 = por %p100, %p101
    %p104 = scmp.ne.s32.totalorder %s87, %s103
    %p105 = scmp.eq.s32.totalorder %s15, 0
    %p106 = por %p104, %p105
    %s107 = ssub.s32 %s16, %s28
    %s108 = ssub.s32 %s17, %s24
    %s109 = sor.u32 %s107, %s108
    %p110 = scmp.eq.s32.totalorder %s109, 0
    %s112 = sadd.s32 %s111, 1
    %s113 = scalar_select %p110, %s111, %s112
    %p116 = pneg %p110
    %p117 = scmp.eq.s32.totalorder %s9, 11
    %p118 = por %p116, %p117
    %p119 = scmp.ne.s32.totalorder %s111, %s114
    %p120 = scmp.eq.s32.totalorder %s9, 0
    %p121 = por %p119, %p120
    %p122 = scmp.ne.s32.totalorder %s111, %s114
    %p123 = scmp.eq.s32.totalorder %s14, 11
    %p124 = por %p122, %p123
    %p125 = scmp.ne.s32.totalorder %s114, %s115
    %p126 = scmp.eq.s32.totalorder %s14, 0
    %p127 = por %p125, %p126
    %p128 = scmp.ne.s32.totalorder %s114, %s115
    %p129 = scmp.eq.s32.totalorder %s15, 11
    %p130 = por %p128, %p129
    %p132 = scmp.ne.s32.totalorder %s115, %s131
    %p133 = scmp.eq.s32.totalorder %s15, 0
    %p134 = por %p132, %p133
    %p135 = scmp.le.s32.totalorder 1, %s9
    %p136 = scmp.lt.s32.totalorder %s9, 13
    %p137 = pnand %p135, %p136
    %p138 = pneg %p137
    // Predicated region
    $region9: #{voxel2d_forward.3} parent=5 // pred_check
      _
    $region10: #{voxel2d_forward.3} parent=5 // pred_check_branch
      %140 = sbr.rel (%p137) target = $region12
    $region11: #{voxel2d_forward.3} parent=5 // pred_region
      %s141 = ssub.s32 %s9, 1
      // Predicated region
      $region13: #{voxel2d_forward.3} parent=11 // pred_check
        %p142 = pneg %p73
      $region14: #{voxel2d_forward.3} parent=11 // pred_check_branch
        %144 = sbr.rel (%p142) target = $region16
      $region15: #{voxel2d_forward.3} parent=11 // pred_region
        %p145 = scmp.lt.s32.totalorder %s19, 0
        %s146 = scalar_select %p145, %s19, 0
        %s147 = smul.addr %s146, 4
        %s148 = scalar_lea.vmem %s1, %s147
      $region16: #{voxel2d_forward.3} parent=11 // pred_fallthru
        _
      // Predicated region
      $region17: #{voxel2d_forward.3} parent=11 // pred_check
        %p149 = pneg %p99
      $region18: #{voxel2d_forward.3} parent=11 // pred_check_branch
        %151 = sbr.rel (%p149) target = $region20
      $region19: #{voxel2d_forward.3} parent=11 // pred_region
        %p152 = scmp.lt.s32.totalorder %s19, 0
        %s153 = scalar_select %p152, %s19, 0
        %s154 = scalar_lea.vmem %s2, %s153
      $region20: #{voxel2d_forward.3} parent=11 // pred_fallthru
        _
    $region12: #{voxel2d_forward.3} parent=5 // pred_fallthru
      _
    %p155 = scmp.lt.s32.totalorder %s9, 12
    // Predicated region
    $region21: #{voxel2d_forward.3} parent=5 // pred_check
      %p156 = pneg %p155
    $region22: #{voxel2d_forward.3} parent=5 // pred_check_branch
      %158 = sbr.rel (%p156) target = $region24
    $region23: #{voxel2d_forward.3} parent=5 // pred_region
      // Predicated region
      $region25: #{voxel2d_forward.3} parent=23 // pred_check
        %p159 = pneg %p41
      $region26: #{voxel2d_forward.3} parent=23 // pred_check_branch
        %161 = sbr.rel (%p159) target = $region28
      $region27: #{voxel2d_forward.3} parent=23 // pred_region
        %s162 = smul.u32 56, %s16
        %p163 = scmp.lt.s32.totalorder %s162, 671
        %s164 = scalar_select %p163, %s162, 671
        %s165 = smul.addr %s164, 7
        %s166 = smul.addr %s165, 4
        %s167 = scalar_lea.vmem %s0, %s166
        %s168 = smul.u32 56, %s16
      $region28: #{voxel2d_forward.3} parent=23 // pred_fallthru
        _
    $region24: #{voxel2d_forward.3} parent=5 // pred_fallthru
      _
    %p169 = scmp.le.s32.totalorder 1, %s9
    %p170 = scmp.lt.s32.totalorder %s9, 13
    %p171 = pnand %p169, %p170
    %p172 = pneg %p171
    // Predicated region
    $region29: #{voxel2d_forward.3} parent=5 // pred_check
      _
    $region30: #{voxel2d_forward.3} parent=5 // pred_check_branch
      %174 = sbr.rel (%p171) target = $region32
    $region31: #{voxel2d_forward.3} parent=5 // pred_region
      %s175 = ssub.s32 %s9, 1
      %s176 = smul.u32 56, %s18
      %p177 = scmp.lt.s32.totalorder %s176, 671
      %s178 = scalar_select %p177, %s176, 671
      %s179 = smul.addr %s178, 7
      %s180 = smul.addr %s179, 4
      %s181 = scalar_lea.vmem %s0, %s180
      %p182 = pneg %p47
      %p183 = pneg %p44
      %p184 = scmp.lt.s32.totalorder %s19, 0
      %s185 = scalar_select %p184, %s19, 0
      %s186 = smul.addr %s185, 4
      %s187 = scalar_lea.vmem %s1, %s186
      %p188 = pneg %p73
      %p189 = pneg %p70
      %p190 = scmp.lt.s32.totalorder %s19, 0
      %s191 = scalar_select %p190, %s19, 0
      %s192 = scalar_lea.vmem %s2, %s191
      %p193 = pneg %p99
      %p194 = pneg %p96
      %p195 = pneg %p127
      %p196 = pneg %p124
      %s197 = smul.u32 56, %s18
      %p198 = scmp.lt.s32.totalorder %s197, 671
      %s199 = scalar_select %p198, %s197, 671
      %p200 = scmp.lt.s32.totalorder %s19, 0
      %s201 = scalar_select %p200, %s19, 0
      %s202 = sadd.s32 %s201, %s199
      %s203 = smul.addr %s202, 8
      %s204 = scalar_lea.vmem %s3, %s203
      %s205 = smul.u32 56, %s18
      %p206 = scmp.lt.s32.totalorder %s205, 671
      %s207 = scalar_select %p206, %s205, 671
      %s208 = smul.addr %s207, 7
      %s209 = smul.addr %s208, 4
      %s210 = scalar_lea.vmem %s0, %s209
      %s211 = smul.u32 56, %s18
      %p212 = scmp.lt.s32.totalorder %s19, 0
      %s213 = scalar_select %p212, %s19, 0
      %s214 = smul.addr %s213, 4
      %s215 = scalar_lea.vmem %s1, %s214
      %p216 = scmp.lt.s32.totalorder %s19, 0
      %s217 = scalar_select %p216, %s19, 0
      %s218 = scalar_lea.vmem %s2, %s217
      %s219 = smul.u32 56, %s18
      %p220 = scmp.lt.s32.totalorder %s219, 671
      %s221 = scalar_select %p220, %s219, 671
      %p222 = scmp.lt.s32.totalorder %s19, 0
      %s223 = scalar_select %p222, %s19, 0
      %s224 = sadd.s32 %s223, %s221
      %s225 = smul.addr %s224, 8
      %s226 = scalar_lea.vmem %s3, %s225
      %s227 = smul.u32 56, %s18
      %v229 = vld [vmem:[%s210] sm:$0xff]
      %v230 = vld [vmem:[%s210 + $0x8] sm:$0xff]
      %v231 = vld [vmem:[%s210 + $0x10] sm:$0xff]
      %v232 = vld [vmem:[%s210 + $0x18] sm:$0xf]
      %v233 = vld [vmem:[%s210 + $0x1c] sm:$0xff]
      %v234 = vld [vmem:[%s210 + $0x24] sm:$0xff]
      %v235 = vld [vmem:[%s210 + $0x2c] sm:$0xff]
      %v236 = vld [vmem:[%s210 + $0x34] sm:$0xf]
      %v237 = vld [vmem:[%s210 + $0x38] sm:$0xff]
      %v238 = vld [vmem:[%s210 + $0x40] sm:$0xff]
      %v239 = vld [vmem:[%s210 + $0x48] sm:$0xff]
      %v240 = vld [vmem:[%s210 + $0x50] sm:$0xf]
      %v241 = vld [vmem:[%s210 + $0x54] sm:$0xff]
      %v242 = vld [vmem:[%s210 + $0x5c] sm:$0xff]
      %v243 = vld [vmem:[%s210 + $0x64] sm:$0xff]
      %v244 = vld [vmem:[%s210 + $0x6c] sm:$0xf]
      %v245 = vld [vmem:[%s210 + $0x70] sm:$0xff]
      %v246 = vld [vmem:[%s210 + $0x78] sm:$0xff]
      %v247 = vld [vmem:[%s210 + $0x80] sm:$0xff]
      %v248 = vld [vmem:[%s210 + $0x88] sm:$0xf]
      %v249 = vld [vmem:[%s210 + $0x8c] sm:$0xff]
      %v250 = vld [vmem:[%s210 + $0x94] sm:$0xff]
      %v251 = vld [vmem:[%s210 + $0x9c] sm:$0xff]
      %v252 = vld [vmem:[%s210 + $0xa4] sm:$0xf]
      %v253 = vld [vmem:[%s210 + $0xa8] sm:$0xff]
      %v254 = vld [vmem:[%s210 + $0xb0] sm:$0xff]
      %v255 = vld [vmem:[%s210 + $0xb8] sm:$0xff]
      %v256 = vld [vmem:[%s210 + $0xc0] sm:$0xf]
      %v257 = vld [vmem:[%s210 + $0xc4] sm:$0xff]
      %v258 = vld [vmem:[%s210 + $0xcc] sm:$0xff]
      %v259 = vld [vmem:[%s210 + $0xd4] sm:$0xff]
      %v260 = vld [vmem:[%s210 + $0xdc] sm:$0xf]
      %v261 = vld [vmem:[%s210 + $0xe0] sm:$0xff]
      %v262 = vld [vmem:[%s210 + $0xe8] sm:$0xff]
      %v263 = vld [vmem:[%s210 + $0xf0] sm:$0xff]
      %v264 = vld [vmem:[%s210 + $0xf8] sm:$0xf]
      %v265 = vld [vmem:[%s210 + $0xfc] sm:$0xff]
      %v266 = vld [vmem:[%s210 + $0x104] sm:$0xff]
      %v267 = vld [vmem:[%s210 + $0x10c] sm:$0xff]
      %v268 = vld [vmem:[%s210 + $0x114] sm:$0xf]
      %v269 = vld [vmem:[%s210 + $0x118] sm:$0xff]
      %v270 = vld [vmem:[%s210 + $0x120] sm:$0xff]
      %v271 = vld [vmem:[%s210 + $0x128] sm:$0xff]
      %v272 = vld [vmem:[%s210 + $0x130] sm:$0xf]
      %v273 = vld [vmem:[%s210 + $0x134] sm:$0xff]
      %v274 = vld [vmem:[%s210 + $0x13c] sm:$0xff]
      %v275 = vld [vmem:[%s210 + $0x144] sm:$0xff]
      %v276 = vld [vmem:[%s210 + $0x14c] sm:$0xf]
      %v277 = vld [vmem:[%s210 + $0x150] sm:$0xff]
      %v278 = vld [vmem:[%s210 + $0x158] sm:$0xff]
      %v279 = vld [vmem:[%s210 + $0x160] sm:$0xff]
      %v280 = vld [vmem:[%s210 + $0x168] sm:$0xf]
      %v281 = vld [vmem:[%s210 + $0x16c] sm:$0xff]
      %v282 = vld [vmem:[%s210 + $0x174] sm:$0xff]
      %v283 = vld [vmem:[%s210 + $0x17c] sm:$0xff]
      %v284 = vld [vmem:[%s210 + $0x184] sm:$0xf]
      %v285 = vld [vmem:[%s210 + $0x188] sm:$0xff]
      %v286 = vld [vmem:[%s210 + $0x190] sm:$0xff]
      %v287 = vld [vmem:[%s210 + $0x198] sm:$0xff]
      %v288 = vld [vmem:[%s210 + $0x1a0] sm:$0xf]
      %v289 = vld [vmem:[%s210 + $0x1a4] sm:$0xff]
      %v290 = vld [vmem:[%s210 + $0x1ac] sm:$0xff]
      %v291 = vld [vmem:[%s210 + $0x1b4] sm:$0xff]
      %v292 = vld [vmem:[%s210 + $0x1bc] sm:$0xf]
      %v293 = vld [vmem:[%s210 + $0x1c0] sm:$0xff]
      %v294 = vld [vmem:[%s210 + $0x1c8] sm:$0xff]
      %v295 = vld [vmem:[%s210 + $0x1d0] sm:$0xff]
      %v296 = vld [vmem:[%s210 + $0x1d8] sm:$0xf]
      %v297 = vld [vmem:[%s210 + $0x1dc] sm:$0xff]
      %v298 = vld [vmem:[%s210 + $0x1e4] sm:$0xff]
      %v299 = vld [vmem:[%s210 + $0x1ec] sm:$0xff]
      %v300 = vld [vmem:[%s210 + $0x1f4] sm:$0xf]
      %v301 = vld [vmem:[%s210 + $0x1f8] sm:$0xff]
      %v302 = vld [vmem:[%s210 + $0x200] sm:$0xff]
      %v303 = vld [vmem:[%s210 + $0x208] sm:$0xff]
      %v304 = vld [vmem:[%s210 + $0x210] sm:$0xf]
      %v305 = vld [vmem:[%s210 + $0x214] sm:$0xff]
      %v306 = vld [vmem:[%s210 + $0x21c] sm:$0xff]
      %v307 = vld [vmem:[%s210 + $0x224] sm:$0xff]
      %v308 = vld [vmem:[%s210 + $0x22c] sm:$0xf]
      %v309 = vld [vmem:[%s210 + $0x230] sm:$0xff]
      %v310 = vld [vmem:[%s210 + $0x238] sm:$0xff]
      %v311 = vld [vmem:[%s210 + $0x240] sm:$0xff]
      %v312 = vld [vmem:[%s210 + $0x248] sm:$0xf]
      %v313 = vld [vmem:[%s210 + $0x24c] sm:$0xff]
      %v314 = vld [vmem:[%s210 + $0x254] sm:$0xff]
      %v315 = vld [vmem:[%s210 + $0x25c] sm:$0xff]
      %v316 = vld [vmem:[%s210 + $0x264] sm:$0xf]
      %v317 = vld [vmem:[%s210 + $0x268] sm:$0xff]
      %v318 = vld [vmem:[%s210 + $0x270] sm:$0xff]
      %v319 = vld [vmem:[%s210 + $0x278] sm:$0xff]
      %v320 = vld [vmem:[%s210 + $0x280] sm:$0xf]
      %v321 = vld [vmem:[%s210 + $0x284] sm:$0xff]
      %v322 = vld [vmem:[%s210 + $0x28c] sm:$0xff]
      %v323 = vld [vmem:[%s210 + $0x294] sm:$0xff]
      %v324 = vld [vmem:[%s210 + $0x29c] sm:$0xf]
      %v325 = vld [vmem:[%s210 + $0x2a0] sm:$0xff]
      %v326 = vld [vmem:[%s210 + $0x2a8] sm:$0xff]
      %v327 = vld [vmem:[%s210 + $0x2b0] sm:$0xff]
      %v328 = vld [vmem:[%s210 + $0x2b8] sm:$0xf]
      %v329 = vld [vmem:[%s210 + $0x2bc] sm:$0xff]
      %v330 = vld [vmem:[%s210 + $0x2c4] sm:$0xff]
      %v331 = vld [vmem:[%s210 + $0x2cc] sm:$0xff]
      %v332 = vld [vmem:[%s210 + $0x2d4] sm:$0xf]
      %v333 = vld [vmem:[%s210 + $0x2d8] sm:$0xff]
      %v334 = vld [vmem:[%s210 + $0x2e0] sm:$0xff]
      %v335 = vld [vmem:[%s210 + $0x2e8] sm:$0xff]
      %v336 = vld [vmem:[%s210 + $0x2f0] sm:$0xf]
      %v337 = vld [vmem:[%s210 + $0x2f4] sm:$0xff]
      %v338 = vld [vmem:[%s210 + $0x2fc] sm:$0xff]
      %v339 = vld [vmem:[%s210 + $0x304] sm:$0xff]
      %v340 = vld [vmem:[%s210 + $0x30c] sm:$0xf]
      %v341 = vld [vmem:[%s210 + $0x310] sm:$0xff]
      %v342 = vld [vmem:[%s210 + $0x318] sm:$0xff]
      %v343 = vld [vmem:[%s210 + $0x320] sm:$0xff]
      %v344 = vld [vmem:[%s210 + $0x328] sm:$0xf]
      %v345 = vld [vmem:[%s210 + $0x32c] sm:$0xff]
      %v346 = vld [vmem:[%s210 + $0x334] sm:$0xff]
      %v347 = vld [vmem:[%s210 + $0x33c] sm:$0xff]
      %v348 = vld [vmem:[%s210 + $0x344] sm:$0xf]
      %v349 = vld [vmem:[%s210 + $0x348] sm:$0xff]
      %v350 = vld [vmem:[%s210 + $0x350] sm:$0xff]
      %v351 = vld [vmem:[%s210 + $0x358] sm:$0xff]
      %v352 = vld [vmem:[%s210 + $0x360] sm:$0xf]
      %v353 = vld [vmem:[%s210 + $0x364] sm:$0xff]
      %v354 = vld [vmem:[%s210 + $0x36c] sm:$0xff]
      %v355 = vld [vmem:[%s210 + $0x374] sm:$0xff]
      %v356 = vld [vmem:[%s210 + $0x37c] sm:$0xf]
      %v357 = vld [vmem:[%s210 + $0x380] sm:$0xff]
      %v358 = vld [vmem:[%s210 + $0x388] sm:$0xff]
      %v359 = vld [vmem:[%s210 + $0x390] sm:$0xff]
      %v360 = vld [vmem:[%s210 + $0x398] sm:$0xf]
      %v361 = vld [vmem:[%s210 + $0x39c] sm:$0xff]
      %v362 = vld [vmem:[%s210 + $0x3a4] sm:$0xff]
      %v363 = vld [vmem:[%s210 + $0x3ac] sm:$0xff]
      %v364 = vld [vmem:[%s210 + $0x3b4] sm:$0xf]
      %v365 = vld [vmem:[%s210 + $0x3b8] sm:$0xff]
      %v366 = vld [vmem:[%s210 + $0x3c0] sm:$0xff]
      %v367 = vld [vmem:[%s210 + $0x3c8] sm:$0xff]
      %v368 = vld [vmem:[%s210 + $0x3d0] sm:$0xf]
      %v369 = vld [vmem:[%s210 + $0x3d4] sm:$0xff]
      %v370 = vld [vmem:[%s210 + $0x3dc] sm:$0xff]
      %v371 = vld [vmem:[%s210 + $0x3e4] sm:$0xff]
      %v372 = vld [vmem:[%s210 + $0x3ec] sm:$0xf]
      %v373 = vld [vmem:[%s210 + $0x3f0] sm:$0xff]
      %v374 = vld [vmem:[%s210 + $0x3f8] sm:$0xff]
      %v375 = vld [vmem:[%s210 + $0x400] sm:$0xff]
      %v376 = vld [vmem:[%s210 + $0x408] sm:$0xf]
      %v377 = vld [vmem:[%s210 + $0x40c] sm:$0xff]
      %v378 = vld [vmem:[%s210 + $0x414] sm:$0xff]
      %v379 = vld [vmem:[%s210 + $0x41c] sm:$0xff]
      %v380 = vld [vmem:[%s210 + $0x424] sm:$0xf]
      %v381 = vld [vmem:[%s210 + $0x428] sm:$0xff]
      %v382 = vld [vmem:[%s210 + $0x430] sm:$0xff]
      %v383 = vld [vmem:[%s210 + $0x438] sm:$0xff]
      %v384 = vld [vmem:[%s210 + $0x440] sm:$0xf]
      %v385 = vld [vmem:[%s210 + $0x444] sm:$0xff]
      %v386 = vld [vmem:[%s210 + $0x44c] sm:$0xff]
      %v387 = vld [vmem:[%s210 + $0x454] sm:$0xff]
      %v388 = vld [vmem:[%s210 + $0x45c] sm:$0xf]
      %v389 = vld [vmem:[%s210 + $0x460] sm:$0xff]
      %v390 = vld [vmem:[%s210 + $0x468] sm:$0xff]
      %v391 = vld [vmem:[%s210 + $0x470] sm:$0xff]
      %v392 = vld [vmem:[%s210 + $0x478] sm:$0xf]
      %v393 = vld [vmem:[%s210 + $0x47c] sm:$0xff]
      %v394 = vld [vmem:[%s210 + $0x484] sm:$0xff]
      %v395 = vld [vmem:[%s210 + $0x48c] sm:$0xff]
      %v396 = vld [vmem:[%s210 + $0x494] sm:$0xf]
      %v397 = vld [vmem:[%s210 + $0x498] sm:$0xff]
      %v398 = vld [vmem:[%s210 + $0x4a0] sm:$0xff]
      %v399 = vld [vmem:[%s210 + $0x4a8] sm:$0xff]
      %v400 = vld [vmem:[%s210 + $0x4b0] sm:$0xf]
      %v401 = vld [vmem:[%s210 + $0x4b4] sm:$0xff]
      %v402 = vld [vmem:[%s210 + $0x4bc] sm:$0xff]
      %v403 = vld [vmem:[%s210 + $0x4c4] sm:$0xff]
      %v404 = vld [vmem:[%s210 + $0x4cc] sm:$0xf]
      %v405 = vld [vmem:[%s210 + $0x4d0] sm:$0xff]
      %v406 = vld [vmem:[%s210 + $0x4d8] sm:$0xff]
      %v407 = vld [vmem:[%s210 + $0x4e0] sm:$0xff]
      %v408 = vld [vmem:[%s210 + $0x4e8] sm:$0xf]
      %v409 = vld [vmem:[%s210 + $0x4ec] sm:$0xff]
      %v410 = vld [vmem:[%s210 + $0x4f4] sm:$0xff]
      %v411 = vld [vmem:[%s210 + $0x4fc] sm:$0xff]
      %v412 = vld [vmem:[%s210 + $0x504] sm:$0xf]
      %v413 = vld [vmem:[%s210 + $0x508] sm:$0xff]
      %v414 = vld [vmem:[%s210 + $0x510] sm:$0xff]
      %v415 = vld [vmem:[%s210 + $0x518] sm:$0xff]
      %v416 = vld [vmem:[%s210 + $0x520] sm:$0xf]
      %v417 = vld [vmem:[%s210 + $0x524] sm:$0xff]
      %v418 = vld [vmem:[%s210 + $0x52c] sm:$0xff]
      %v419 = vld [vmem:[%s210 + $0x534] sm:$0xff]
      %v420 = vld [vmem:[%s210 + $0x53c] sm:$0xf]
      %v421 = vld [vmem:[%s210 + $0x540] sm:$0xff]
      %v422 = vld [vmem:[%s210 + $0x548] sm:$0xff]
      %v423 = vld [vmem:[%s210 + $0x550] sm:$0xff]
      %v424 = vld [vmem:[%s210 + $0x558] sm:$0xf]
      %v425 = vld [vmem:[%s210 + $0x55c] sm:$0xff]
      %v426 = vld [vmem:[%s210 + $0x564] sm:$0xff]
      %v427 = vld [vmem:[%s210 + $0x56c] sm:$0xff]
      %v428 = vld [vmem:[%s210 + $0x574] sm:$0xf]
      %v429 = vld [vmem:[%s210 + $0x578] sm:$0xff]
      %v430 = vld [vmem:[%s210 + $0x580] sm:$0xff]
      %v431 = vld [vmem:[%s210 + $0x588] sm:$0xff]
      %v432 = vld [vmem:[%s210 + $0x590] sm:$0xf]
      %v433 = vld [vmem:[%s210 + $0x594] sm:$0xff]
      %v434 = vld [vmem:[%s210 + $0x59c] sm:$0xff]
      %v435 = vld [vmem:[%s210 + $0x5a4] sm:$0xff]
      %v436 = vld [vmem:[%s210 + $0x5ac] sm:$0xf]
      %v437 = vld [vmem:[%s210 + $0x5b0] sm:$0xff]
      %v438 = vld [vmem:[%s210 + $0x5b8] sm:$0xff]
      %v439 = vld [vmem:[%s210 + $0x5c0] sm:$0xff]
      %v440 = vld [vmem:[%s210 + $0x5c8] sm:$0xf]
      %v441 = vld [vmem:[%s210 + $0x5cc] sm:$0xff]
      %v442 = vld [vmem:[%s210 + $0x5d4] sm:$0xff]
      %v443 = vld [vmem:[%s210 + $0x5dc] sm:$0xff]
      %v444 = vld [vmem:[%s210 + $0x5e4] sm:$0xf]
      %v445 = vld [vmem:[%s210 + $0x5e8] sm:$0xff]
      %v446 = vld [vmem:[%s210 + $0x5f0] sm:$0xff]
      %v447 = vld [vmem:[%s210 + $0x5f8] sm:$0xff]
      %v448 = vld [vmem:[%s210 + $0x600] sm:$0xf]
      %v449 = vld [vmem:[%s210 + $0x604] sm:$0xff]
      %v450 = vld [vmem:[%s210 + $0x60c] sm:$0xff]
      %v451 = vld [vmem:[%s210 + $0x614] sm:$0xff]
      %v452 = vld [vmem:[%s210 + $0x61c] sm:$0xf]
      %v453 = vld [vmem:[%s215] sm:$0xf]
      %v454 = vld [vmem:[%s215 + $0x4] sm:$0xf]
      %v455 = vld [vmem:[%s215 + $0x8] sm:$0xf]
      %v456 = vld [vmem:[%s215 + $0xc] sm:$0xf]
      %v457 = vld [vmem:[%s215 + $0x10] sm:$0xf]
      %v458 = vld [vmem:[%s215 + $0x14] sm:$0xf]
      %v459 = vld [vmem:[%s215 + $0x18] sm:$0xf]
      %v460 = vld [vmem:[%s215 + $0x1c] sm:$0xf]
      %v461 = vld [vmem:[%s215 + $0x20] sm:$0xf]
      %v462 = vld [vmem:[%s215 + $0x24] sm:$0xf]
      %v463 = vld [vmem:[%s215 + $0x28] sm:$0xf]
      %v464 = vld [vmem:[%s215 + $0x2c] sm:$0xf]
      %v465 = vld [vmem:[%s215 + $0x30] sm:$0xf]
      %v466 = vld [vmem:[%s215 + $0x34] sm:$0xf]
      %v467 = vld [vmem:[%s215 + $0x38] sm:$0xf]
      %v468 = vld [vmem:[%s215 + $0x3c] sm:$0xf]
      %v469 = vld [vmem:[%s215 + $0x40] sm:$0xf]
      %v470 = vld [vmem:[%s215 + $0x44] sm:$0xf]
      %v471 = vld [vmem:[%s215 + $0x48] sm:$0xf]
      %v472 = vld [vmem:[%s215 + $0x4c] sm:$0xf]
      %v473 = vld [vmem:[%s215 + $0x50] sm:$0xf]
      %v474 = vld [vmem:[%s215 + $0x54] sm:$0xf]
      %v475 = vld [vmem:[%s215 + $0x58] sm:$0xf]
      %v476 = vld [vmem:[%s215 + $0x5c] sm:$0xf]
      %v477 = vld [vmem:[%s215 + $0x60] sm:$0xf]
      %v478 = vld [vmem:[%s215 + $0x64] sm:$0xf]
      %v479 = vld [vmem:[%s215 + $0x68] sm:$0xf]
      %v480 = vld [vmem:[%s215 + $0x6c] sm:$0xf]
      %v481 = vld [vmem:[%s215 + $0x70] sm:$0xf]
      %v482 = vld [vmem:[%s215 + $0x74] sm:$0xf]
      %v483 = vld [vmem:[%s215 + $0x78] sm:$0xf]
      %v484 = vld [vmem:[%s215 + $0x7c] sm:$0xf]
      %v485 = vld [vmem:[%s215 + $0x80] sm:$0xf]
      %v486 = vld [vmem:[%s215 + $0x84] sm:$0xf]
      %v487 = vld [vmem:[%s215 + $0x88] sm:$0xf]
      %v488 = vld [vmem:[%s215 + $0x8c] sm:$0xf]
      %v489 = vld [vmem:[%s215 + $0x90] sm:$0xf]
      %v490 = vld [vmem:[%s215 + $0x94] sm:$0xf]
      %v491 = vld [vmem:[%s215 + $0x98] sm:$0xf]
      %v492 = vld [vmem:[%s215 + $0x9c] sm:$0xf]
      %v493 = vld [vmem:[%s215 + $0xa0] sm:$0xf]
      %v494 = vld [vmem:[%s215 + $0xa4] sm:$0xf]
      %v495 = vld [vmem:[%s215 + $0xa8] sm:$0xf]
      %v496 = vld [vmem:[%s215 + $0xac] sm:$0xf]
      %v497 = vld [vmem:[%s215 + $0xb0] sm:$0xf]
      %v498 = vld [vmem:[%s215 + $0xb4] sm:$0xf]
      %v499 = vld [vmem:[%s215 + $0xb8] sm:$0xf]
      %v500 = vld [vmem:[%s215 + $0xbc] sm:$0xf]
      %v501 = vld [vmem:[%s215 + $0xc0] sm:$0xf]
      %v502 = vld [vmem:[%s215 + $0xc4] sm:$0xf]
      %v503 = vld [vmem:[%s215 + $0xc8] sm:$0xf]
      %v504 = vld [vmem:[%s215 + $0xcc] sm:$0xf]
      %v505 = vld [vmem:[%s215 + $0xd0] sm:$0xf]
      %v506 = vld [vmem:[%s215 + $0xd4] sm:$0xf]
      %v507 = vld [vmem:[%s215 + $0xd8] sm:$0xf]
      %v508 = vld [vmem:[%s215 + $0xdc] sm:$0xf]
      %v509 = vld [vmem:[%s215 + $0xe0] sm:$0xf]
      %v510 = vld [vmem:[%s215 + $0xe4] sm:$0xf]
      %v511 = vld [vmem:[%s215 + $0xe8] sm:$0xf]
      %v512 = vld [vmem:[%s215 + $0xec] sm:$0xf]
      %v513 = vld [vmem:[%s215 + $0xf0] sm:$0xf]
      %v514 = vld [vmem:[%s215 + $0xf4] sm:$0xf]
      %v515 = vld [vmem:[%s215 + $0xf8] sm:$0xf]
      %v516 = vld [vmem:[%s215 + $0xfc] sm:$0xf]
      %v517 = vld [vmem:[%s215 + $0x100] sm:$0xf]
      %v518 = vld [vmem:[%s215 + $0x104] sm:$0xf]
      %v519 = vld [vmem:[%s215 + $0x108] sm:$0xf]
      %v520 = vld [vmem:[%s215 + $0x10c] sm:$0xf]
      %v521 = vld [vmem:[%s215 + $0x110] sm:$0xf]
      %v522 = vld [vmem:[%s215 + $0x114] sm:$0xf]
      %v523 = vld [vmem:[%s215 + $0x118] sm:$0xf]
      %v524 = vld [vmem:[%s215 + $0x11c] sm:$0xf]
      %v525 = vld [vmem:[%s215 + $0x120] sm:$0xf]
      %v526 = vld [vmem:[%s215 + $0x124] sm:$0xf]
      %v527 = vld [vmem:[%s215 + $0x128] sm:$0xf]
      %v528 = vld [vmem:[%s215 + $0x12c] sm:$0xf]
      %v529 = vld [vmem:[%s215 + $0x130] sm:$0xf]
      %v530 = vld [vmem:[%s215 + $0x134] sm:$0xf]
      %v531 = vld [vmem:[%s215 + $0x138] sm:$0xf]
      %v532 = vld [vmem:[%s215 + $0x13c] sm:$0xf]
      %v533 = vld [vmem:[%s215 + $0x140] sm:$0xf]
      %v534 = vld [vmem:[%s215 + $0x144] sm:$0xf]
      %v535 = vld [vmem:[%s215 + $0x148] sm:$0xf]
      %v536 = vld [vmem:[%s215 + $0x14c] sm:$0xf]
      %v537 = vld [vmem:[%s215 + $0x150] sm:$0xf]
      %v538 = vld [vmem:[%s215 + $0x154] sm:$0xf]
      %v539 = vld [vmem:[%s215 + $0x158] sm:$0xf]
      %v540 = vld [vmem:[%s215 + $0x15c] sm:$0xf]
      %v541 = vld [vmem:[%s215 + $0x160] sm:$0xf]
      %v542 = vld [vmem:[%s215 + $0x164] sm:$0xf]
      %v543 = vld [vmem:[%s215 + $0x168] sm:$0xf]
      %v544 = vld [vmem:[%s215 + $0x16c] sm:$0xf]
      %v545 = vld [vmem:[%s215 + $0x170] sm:$0xf]
      %v546 = vld [vmem:[%s215 + $0x174] sm:$0xf]
      %v547 = vld [vmem:[%s215 + $0x178] sm:$0xf]
      %v548 = vld [vmem:[%s215 + $0x17c] sm:$0xf]
      %v549 = vld [vmem:[%s215 + $0x180] sm:$0xf]
      %v550 = vld [vmem:[%s215 + $0x184] sm:$0xf]
      %v551 = vld [vmem:[%s215 + $0x188] sm:$0xf]
      %v552 = vld [vmem:[%s215 + $0x18c] sm:$0xf]
      %v553 = vld [vmem:[%s215 + $0x190] sm:$0xf]
      %v554 = vld [vmem:[%s215 + $0x194] sm:$0xf]
      %v555 = vld [vmem:[%s215 + $0x198] sm:$0xf]
      %v556 = vld [vmem:[%s215 + $0x19c] sm:$0xf]
      %v557 = vld [vmem:[%s215 + $0x1a0] sm:$0xf]
      %v558 = vld [vmem:[%s215 + $0x1a4] sm:$0xf]
      %v559 = vld [vmem:[%s215 + $0x1a8] sm:$0xf]
      %v560 = vld [vmem:[%s215 + $0x1ac] sm:$0xf]
      %v561 = vld [vmem:[%s218] sm:$0x1]
      %v563 = vperm.slane %v561, 0
      %v789 = vunpack.c.l.b16 %v229
      %v790 = vunpack.c.h.b16 %v229
      %v791 = vunpack.c.l.b16 %v230
      %v792 = vunpack.c.h.b16 %v230
      %v793 = vunpack.c.l.b16 %v231
      %v794 = vunpack.c.h.b16 %v231
      %v795 = vunpack.c.l.b16 %v232
      %v796 = vunpack.c.l.b16 %v233
      %v797 = vunpack.c.h.b16 %v233
      %v798 = vunpack.c.l.b16 %v234
      %v799 = vunpack.c.h.b16 %v234
      %v800 = vunpack.c.l.b16 %v235
      %v801 = vunpack.c.h.b16 %v235
      %v802 = vunpack.c.l.b16 %v236
      %v803 = vunpack.c.l.b16 %v237
      %v804 = vunpack.c.h.b16 %v237
      %v805 = vunpack.c.l.b16 %v238
      %v806 = vunpack.c.h.b16 %v238
      %v807 = vunpack.c.l.b16 %v239
      %v808 = vunpack.c.h.b16 %v239
      %v809 = vunpack.c.l.b16 %v240
      %v810 = vunpack.c.l.b16 %v241
      %v811 = vunpack.c.h.b16 %v241
      %v812 = vunpack.c.l.b16 %v242
      %v813 = vunpack.c.h.b16 %v242
      %v814 = vunpack.c.l.b16 %v243
      %v815 = vunpack.c.h.b16 %v243
      %v816 = vunpack.c.l.b16 %v244
      %v817 = vunpack.c.l.b16 %v245
      %v818 = vunpack.c.h.b16 %v245
      %v819 = vunpack.c.l.b16 %v246
      %v820 = vunpack.c.h.b16 %v246
      %v821 = vunpack.c.l.b16 %v247
      %v822 = vunpack.c.h.b16 %v247
      %v823 = vunpack.c.l.b16 %v248
      %v824 = vunpack.c.l.b16 %v249
      %v825 = vunpack.c.h.b16 %v249
      %v826 = vunpack.c.l.b16 %v250
      %v827 = vunpack.c.h.b16 %v250
      %v828 = vunpack.c.l.b16 %v251
      %v829 = vunpack.c.h.b16 %v251
      %v830 = vunpack.c.l.b16 %v252
      %v831 = vunpack.c.l.b16 %v253
      %v832 = vunpack.c.h.b16 %v253
      %v833 = vunpack.c.l.b16 %v254
      %v834 = vunpack.c.h.b16 %v254
      %v835 = vunpack.c.l.b16 %v255
      %v836 = vunpack.c.h.b16 %v255
      %v837 = vunpack.c.l.b16 %v256
      %v838 = vunpack.c.l.b16 %v257
      %v839 = vunpack.c.h.b16 %v257
      %v840 = vunpack.c.l.b16 %v258
      %v841 = vunpack.c.h.b16 %v258
      %v842 = vunpack.c.l.b16 %v259
      %v843 = vunpack.c.h.b16 %v259
      %v844 = vunpack.c.l.b16 %v260
      %v845 = vunpack.c.l.b16 %v261
      %v846 = vunpack.c.h.b16 %v261
      %v847 = vunpack.c.l.b16 %v262
      %v848 = vunpack.c.h.b16 %v262
      %v849 = vunpack.c.l.b16 %v263
      %v850 = vunpack.c.h.b16 %v263
      %v851 = vunpack.c.l.b16 %v264
      %v852 = vunpack.c.l.b16 %v265
      %v853 = vunpack.c.h.b16 %v265
      %v854 = vunpack.c.l.b16 %v266
      %v855 = vunpack.c.h.b16 %v266
      %v856 = vunpack.c.l.b16 %v267
      %v857 = vunpack.c.h.b16 %v267
      %v858 = vunpack.c.l.b16 %v268
      %v859 = vunpack.c.l.b16 %v269
      %v860 = vunpack.c.h.b16 %v269
      %v861 = vunpack.c.l.b16 %v270
      %v862 = vunpack.c.h.b16 %v270
      %v863 = vunpack.c.l.b16 %v271
      %v864 = vunpack.c.h.b16 %v271
      %v865 = vunpack.c.l.b16 %v272
      %v866 = vunpack.c.l.b16 %v273
      %v867 = vunpack.c.h.b16 %v273
      %v868 = vunpack.c.l.b16 %v274
      %v869 = vunpack.c.h.b16 %v274
      %v870 = vunpack.c.l.b16 %v275
      %v871 = vunpack.c.h.b16 %v275
      %v872 = vunpack.c.l.b16 %v276
      %v873 = vunpack.c.l.b16 %v277
      %v874 = vunpack.c.h.b16 %v277
      %v875 = vunpack.c.l.b16 %v278
      %v876 = vunpack.c.h.b16 %v278
      %v877 = vunpack.c.l.b16 %v279
      %v878 = vunpack.c.h.b16 %v279
      %v879 = vunpack.c.l.b16 %v280
      %v880 = vunpack.c.l.b16 %v281
      %v881 = vunpack.c.h.b16 %v281
      %v882 = vunpack.c.l.b16 %v282
      %v883 = vunpack.c.h.b16 %v282
      %v884 = vunpack.c.l.b16 %v283
      %v885 = vunpack.c.h.b16 %v283
      %v886 = vunpack.c.l.b16 %v284
      %v887 = vunpack.c.l.b16 %v285
      %v888 = vunpack.c.h.b16 %v285
      %v889 = vunpack.c.l.b16 %v286
      %v890 = vunpack.c.h.b16 %v286
      %v891 = vunpack.c.l.b16 %v287
      %v892 = vunpack.c.h.b16 %v287
      %v893 = vunpack.c.l.b16 %v288
      %v894 = vunpack.c.l.b16 %v289
      %v895 = vunpack.c.h.b16 %v289
      %v896 = vunpack.c.l.b16 %v290
      %v897 = vunpack.c.h.b16 %v290
      %v898 = vunpack.c.l.b16 %v291
      %v899 = vunpack.c.h.b16 %v291
      %v900 = vunpack.c.l.b16 %v292
      %v901 = vunpack.c.l.b16 %v293
      %v902 = vunpack.c.h.b16 %v293
      %v903 = vunpack.c.l.b16 %v294
      %v904 = vunpack.c.h.b16 %v294
      %v905 = vunpack.c.l.b16 %v295
      %v906 = vunpack.c.h.b16 %v295
      %v907 = vunpack.c.l.b16 %v296
      %v908 = vunpack.c.l.b16 %v297
      %v909 = vunpack.c.h.b16 %v297
      %v910 = vunpack.c.l.b16 %v298
      %v911 = vunpack.c.h.b16 %v298
      %v912 = vunpack.c.l.b16 %v299
      %v913 = vunpack.c.h.b16 %v299
      %v914 = vunpack.c.l.b16 %v300
      %v915 = vunpack.c.l.b16 %v301
      %v916 = vunpack.c.h.b16 %v301
      %v917 = vunpack.c.l.b16 %v302
      %v918 = vunpack.c.h.b16 %v302
      %v919 = vunpack.c.l.b16 %v303
      %v920 = vunpack.c.h.b16 %v303
      %v921 = vunpack.c.l.b16 %v304
      %v922 = vunpack.c.l.b16 %v305
      %v923 = vunpack.c.h.b16 %v305
      %v924 = vunpack.c.l.b16 %v306
      %v925 = vunpack.c.h.b16 %v306
      %v926 = vunpack.c.l.b16 %v307
      %v927 = vunpack.c.h.b16 %v307
      %v928 = vunpack.c.l.b16 %v308
      %v929 = vunpack.c.l.b16 %v309
      %v930 = vunpack.c.h.b16 %v309
      %v931 = vunpack.c.l.b16 %v310
      %v932 = vunpack.c.h.b16 %v310
      %v933 = vunpack.c.l.b16 %v311
      %v934 = vunpack.c.h.b16 %v311
      %v935 = vunpack.c.l.b16 %v312
      %v936 = vunpack.c.l.b16 %v313
      %v937 = vunpack.c.h.b16 %v313
      %v938 = vunpack.c.l.b16 %v314
      %v939 = vunpack.c.h.b16 %v314
      %v940 = vunpack.c.l.b16 %v315
      %v941 = vunpack.c.h.b16 %v315
      %v942 = vunpack.c.l.b16 %v316
      %v943 = vunpack.c.l.b16 %v317
      %v944 = vunpack.c.h.b16 %v317
      %v945 = vunpack.c.l.b16 %v318
      %v946 = vunpack.c.h.b16 %v318
      %v947 = vunpack.c.l.b16 %v319
      %v948 = vunpack.c.h.b16 %v319
      %v949 = vunpack.c.l.b16 %v320
      %v950 = vunpack.c.l.b16 %v321
      %v951 = vunpack.c.h.b16 %v321
      %v952 = vunpack.c.l.b16 %v322
      %v953 = vunpack.c.h.b16 %v322
      %v954 = vunpack.c.l.b16 %v323
      %v955 = vunpack.c.h.b16 %v323
      %v956 = vunpack.c.l.b16 %v324
      %v957 = vunpack.c.l.b16 %v325
      %v958 = vunpack.c.h.b16 %v325
      %v959 = vunpack.c.l.b16 %v326
      %v960 = vunpack.c.h.b16 %v326
      %v961 = vunpack.c.l.b16 %v327
      %v962 = vunpack.c.h.b16 %v327
      %v963 = vunpack.c.l.b16 %v328
      %v964 = vunpack.c.l.b16 %v329
      %v965 = vunpack.c.h.b16 %v329
      %v966 = vunpack.c.l.b16 %v330
      %v967 = vunpack.c.h.b16 %v330
      %v968 = vunpack.c.l.b16 %v331
      %v969 = vunpack.c.h.b16 %v331
      %v970 = vunpack.c.l.b16 %v332
      %v971 = vunpack.c.l.b16 %v333
      %v972 = vunpack.c.h.b16 %v333
      %v973 = vunpack.c.l.b16 %v334
      %v974 = vunpack.c.h.b16 %v334
      %v975 = vunpack.c.l.b16 %v335
      %v976 = vunpack.c.h.b16 %v335
      %v977 = vunpack.c.l.b16 %v336
      %v978 = vunpack.c.l.b16 %v337
      %v979 = vunpack.c.h.b16 %v337
      %v980 = vunpack.c.l.b16 %v338
      %v981 = vunpack.c.h.b16 %v338
      %v982 = vunpack.c.l.b16 %v339
      %v983 = vunpack.c.h.b16 %v339
      %v984 = vunpack.c.l.b16 %v340
      %v985 = vunpack.c.l.b16 %v341
      %v986 = vunpack.c.h.b16 %v341
      %v987 = vunpack.c.l.b16 %v342
      %v988 = vunpack.c.h.b16 %v342
      %v989 = vunpack.c.l.b16 %v343
      %v990 = vunpack.c.h.b16 %v343
      %v991 = vunpack.c.l.b16 %v344
      %v992 = vunpack.c.l.b16 %v345
      %v993 = vunpack.c.h.b16 %v345
      %v994 = vunpack.c.l.b16 %v346
      %v995 = vunpack.c.h.b16 %v346
      %v996 = vunpack.c.l.b16 %v347
      %v997 = vunpack.c.h.b16 %v347
      %v998 = vunpack.c.l.b16 %v348
      %v999 = vunpack.c.l.b16 %v349
      %v1000 = vunpack.c.h.b16 %v349
      %v1001 = vunpack.c.l.b16 %v350
      %v1002 = vunpack.c.h.b16 %v350
      %v1003 = vunpack.c.l.b16 %v351
      %v1004 = vunpack.c.h.b16 %v351
      %v1005 = vunpack.c.l.b16 %v352
      %v1006 = vunpack.c.l.b16 %v353
      %v1007 = vunpack.c.h.b16 %v353
      %v1008 = vunpack.c.l.b16 %v354
      %v1009 = vunpack.c.h.b16 %v354
      %v1010 = vunpack.c.l.b16 %v355
      %v1011 = vunpack.c.h.b16 %v355
      %v1012 = vunpack.c.l.b16 %v356
      %v1013 = vunpack.c.l.b16 %v357
      %v1014 = vunpack.c.h.b16 %v357
      %v1015 = vunpack.c.l.b16 %v358
      %v1016 = vunpack.c.h.b16 %v358
      %v1017 = vunpack.c.l.b16 %v359
      %v1018 = vunpack.c.h.b16 %v359
      %v1019 = vunpack.c.l.b16 %v360
      %v1020 = vunpack.c.l.b16 %v361
      %v1021 = vunpack.c.h.b16 %v361
      %v1022 = vunpack.c.l.b16 %v362
      %v1023 = vunpack.c.h.b16 %v362
      %v1024 = vunpack.c.l.b16 %v363
      %v1025 = vunpack.c.h.b16 %v363
      %v1026 = vunpack.c.l.b16 %v364
      %v1027 = vunpack.c.l.b16 %v365
      %v1028 = vunpack.c.h.b16 %v365
      %v1029 = vunpack.c.l.b16 %v366
      %v1030 = vunpack.c.h.b16 %v366
      %v1031 = vunpack.c.l.b16 %v367
      %v1032 = vunpack.c.h.b16 %v367
      %v1033 = vunpack.c.l.b16 %v368
      %v1034 = vunpack.c.l.b16 %v369
      %v1035 = vunpack.c.h.b16 %v369
      %v1036 = vunpack.c.l.b16 %v370
      %v1037 = vunpack.c.h.b16 %v370
      %v1038 = vunpack.c.l.b16 %v371
      %v1039 = vunpack.c.h.b16 %v371
      %v1040 = vunpack.c.l.b16 %v372
      %v1041 = vunpack.c.l.b16 %v373
      %v1042 = vunpack.c.h.b16 %v373
      %v1043 = vunpack.c.l.b16 %v374
      %v1044 = vunpack.c.h.b16 %v374
      %v1045 = vunpack.c.l.b16 %v375
      %v1046 = vunpack.c.h.b16 %v375
      %v1047 = vunpack.c.l.b16 %v376
      %v1048 = vunpack.c.l.b16 %v377
      %v1049 = vunpack.c.h.b16 %v377
      %v1050 = vunpack.c.l.b16 %v378
      %v1051 = vunpack.c.h.b16 %v378
      %v1052 = vunpack.c.l.b16 %v379
      %v1053 = vunpack.c.h.b16 %v379
      %v1054 = vunpack.c.l.b16 %v380
      %v1055 = vunpack.c.l.b16 %v381
      %v1056 = vunpack.c.h.b16 %v381
      %v1057 = vunpack.c.l.b16 %v382
      %v1058 = vunpack.c.h.b16 %v382
      %v1059 = vunpack.c.l.b16 %v383
      %v1060 = vunpack.c.h.b16 %v383
      %v1061 = vunpack.c.l.b16 %v384
      %v1062 = vunpack.c.l.b16 %v385
      %v1063 = vunpack.c.h.b16 %v385
      %v1064 = vunpack.c.l.b16 %v386
      %v1065 = vunpack.c.h.b16 %v386
      %v1066 = vunpack.c.l.b16 %v387
      %v1067 = vunpack.c.h.b16 %v387
      %v1068 = vunpack.c.l.b16 %v388
      %v1069 = vunpack.c.l.b16 %v389
      %v1070 = vunpack.c.h.b16 %v389
      %v1071 = vunpack.c.l.b16 %v390
      %v1072 = vunpack.c.h.b16 %v390
      %v1073 = vunpack.c.l.b16 %v391
      %v1074 = vunpack.c.h.b16 %v391
      %v1075 = vunpack.c.l.b16 %v392
      %v1076 = vunpack.c.l.b16 %v393
      %v1077 = vunpack.c.h.b16 %v393
      %v1078 = vunpack.c.l.b16 %v394
      %v1079 = vunpack.c.h.b16 %v394
      %v1080 = vunpack.c.l.b16 %v395
      %v1081 = vunpack.c.h.b16 %v395
      %v1082 = vunpack.c.l.b16 %v396
      %v1083 = vunpack.c.l.b16 %v397
      %v1084 = vunpack.c.h.b16 %v397
      %v1085 = vunpack.c.l.b16 %v398
      %v1086 = vunpack.c.h.b16 %v398
      %v1087 = vunpack.c.l.b16 %v399
      %v1088 = vunpack.c.h.b16 %v399
      %v1089 = vunpack.c.l.b16 %v400
      %v1090 = vunpack.c.l.b16 %v401
      %v1091 = vunpack.c.h.b16 %v401
      %v1092 = vunpack.c.l.b16 %v402
      %v1093 = vunpack.c.h.b16 %v402
      %v1094 = vunpack.c.l.b16 %v403
      %v1095 = vunpack.c.h.b16 %v403
      %v1096 = vunpack.c.l.b16 %v404
      %v1097 = vunpack.c.l.b16 %v405
      %v1098 = vunpack.c.h.b16 %v405
      %v1099 = vunpack.c.l.b16 %v406
      %v1100 = vunpack.c.h.b16 %v406
      %v1101 = vunpack.c.l.b16 %v407
      %v1102 = vunpack.c.h.b16 %v407
      %v1103 = vunpack.c.l.b16 %v408
      %v1104 = vunpack.c.l.b16 %v409
      %v1105 = vunpack.c.h.b16 %v409
      %v1106 = vunpack.c.l.b16 %v410
      %v1107 = vunpack.c.h.b16 %v410
      %v1108 = vunpack.c.l.b16 %v411
      %v1109 = vunpack.c.h.b16 %v411
      %v1110 = vunpack.c.l.b16 %v412
      %v1111 = vunpack.c.l.b16 %v413
      %v1112 = vunpack.c.h.b16 %v413
      %v1113 = vunpack.c.l.b16 %v414
      %v1114 = vunpack.c.h.b16 %v414
      %v1115 = vunpack.c.l.b16 %v415
      %v1116 = vunpack.c.h.b16 %v415
      %v1117 = vunpack.c.l.b16 %v416
      %v1118 = vunpack.c.l.b16 %v417
      %v1119 = vunpack.c.h.b16 %v417
      %v1120 = vunpack.c.l.b16 %v418
      %v1121 = vunpack.c.h.b16 %v418
      %v1122 = vunpack.c.l.b16 %v419
      %v1123 = vunpack.c.h.b16 %v419
      %v1124 = vunpack.c.l.b16 %v420
      %v1125 = vunpack.c.l.b16 %v421
      %v1126 = vunpack.c.h.b16 %v421
      %v1127 = vunpack.c.l.b16 %v422
      %v1128 = vunpack.c.h.b16 %v422
      %v1129 = vunpack.c.l.b16 %v423
      %v1130 = vunpack.c.h.b16 %v423
      %v1131 = vunpack.c.l.b16 %v424
      %v1132 = vunpack.c.l.b16 %v425
      %v1133 = vunpack.c.h.b16 %v425
      %v1134 = vunpack.c.l.b16 %v426
      %v1135 = vunpack.c.h.b16 %v426
      %v1136 = vunpack.c.l.b16 %v427
      %v1137 = vunpack.c.h.b16 %v427
      %v1138 = vunpack.c.l.b16 %v428
      %v1139 = vunpack.c.l.b16 %v429
      %v1140 = vunpack.c.h.b16 %v429
      %v1141 = vunpack.c.l.b16 %v430
      %v1142 = vunpack.c.h.b16 %v430
      %v1143 = vunpack.c.l.b16 %v431
      %v1144 = vunpack.c.h.b16 %v431
      %v1145 = vunpack.c.l.b16 %v432
      %v1146 = vunpack.c.l.b16 %v433
      %v1147 = vunpack.c.h.b16 %v433
      %v1148 = vunpack.c.l.b16 %v434
      %v1149 = vunpack.c.h.b16 %v434
      %v1150 = vunpack.c.l.b16 %v435
      %v1151 = vunpack.c.h.b16 %v435
      %v1152 = vunpack.c.l.b16 %v436
      %v1153 = vunpack.c.l.b16 %v437
      %v1154 = vunpack.c.h.b16 %v437
      %v1155 = vunpack.c.l.b16 %v438
      %v1156 = vunpack.c.h.b16 %v438
      %v1157 = vunpack.c.l.b16 %v439
      %v1158 = vunpack.c.h.b16 %v439
      %v1159 = vunpack.c.l.b16 %v440
      %v1160 = vunpack.c.l.b16 %v441
      %v1161 = vunpack.c.h.b16 %v441
      %v1162 = vunpack.c.l.b16 %v442
      %v1163 = vunpack.c.h.b16 %v442
      %v1164 = vunpack.c.l.b16 %v443
      %v1165 = vunpack.c.h.b16 %v443
      %v1166 = vunpack.c.l.b16 %v444
      %v1167 = vunpack.c.l.b16 %v445
      %v1168 = vunpack.c.h.b16 %v445
      %v1169 = vunpack.c.l.b16 %v446
      %v1170 = vunpack.c.h.b16 %v446
      %v1171 = vunpack.c.l.b16 %v447
      %v1172 = vunpack.c.h.b16 %v447
      %v1173 = vunpack.c.l.b16 %v448
      %v1174 = vunpack.c.l.b16 %v449
      %v1175 = vunpack.c.h.b16 %v449
      %v1176 = vunpack.c.l.b16 %v450
      %v1177 = vunpack.c.h.b16 %v450
      %v1178 = vunpack.c.l.b16 %v451
      %v1179 = vunpack.c.h.b16 %v451
      %v1180 = vunpack.c.l.b16 %v452
      %v1181 = vpack.c.b16 %v796, %v789
      %v1182 = vpack.c.b16 %v797, %v790
      %v1183 = vpack.c.b16 %v798, %v791
      %v1184 = vpack.c.b16 %v799, %v792
      %v1185 = vpack.c.b16 %v800, %v793
      %v1186 = vpack.c.b16 %v801, %v794
      %v1187 = vpack.c.b16 %v802, %v795
      %v1188 = vpack.c.b16 %v810, %v803
      %v1189 = vpack.c.b16 %v811, %v804
      %v1190 = vpack.c.b16 %v812, %v805
      %v1191 = vpack.c.b16 %v813, %v806
      %v1192 = vpack.c.b16 %v814, %v807
      %v1193 = vpack.c.b16 %v815, %v808
      %v1194 = vpack.c.b16 %v816, %v809
      %v1195 = vpack.c.b16 %v824, %v817
      %v1196 = vpack.c.b16 %v825, %v818
      %v1197 = vpack.c.b16 %v826, %v819
      %v1198 = vpack.c.b16 %v827, %v820
      %v1199 = vpack.c.b16 %v828, %v821
      %v1200 = vpack.c.b16 %v829, %v822
      %v1201 = vpack.c.b16 %v830, %v823
      %v1202 = vpack.c.b16 %v838, %v831
      %v1203 = vpack.c.b16 %v839, %v832
      %v1204 = vpack.c.b16 %v840, %v833
      %v1205 = vpack.c.b16 %v841, %v834
      %v1206 = vpack.c.b16 %v842, %v835
      %v1207 = vpack.c.b16 %v843, %v836
      %v1208 = vpack.c.b16 %v844, %v837
      %v1209 = vpack.c.b16 %v852, %v845
      %v1210 = vpack.c.b16 %v853, %v846
      %v1211 = vpack.c.b16 %v854, %v847
      %v1212 = vpack.c.b16 %v855, %v848
      %v1213 = vpack.c.b16 %v856, %v849
      %v1214 = vpack.c.b16 %v857, %v850
      %v1215 = vpack.c.b16 %v858, %v851
      %v1216 = vpack.c.b16 %v866, %v859
      %v1217 = vpack.c.b16 %v867, %v860
      %v1218 = vpack.c.b16 %v868, %v861
      %v1219 = vpack.c.b16 %v869, %v862
      %v1220 = vpack.c.b16 %v870, %v863
      %v1221 = vpack.c.b16 %v871, %v864
      %v1222 = vpack.c.b16 %v872, %v865
      %v1223 = vpack.c.b16 %v880, %v873
      %v1224 = vpack.c.b16 %v881, %v874
      %v1225 = vpack.c.b16 %v882, %v875
      %v1226 = vpack.c.b16 %v883, %v876
      %v1227 = vpack.c.b16 %v884, %v877
      %v1228 = vpack.c.b16 %v885, %v878
      %v1229 = vpack.c.b16 %v886, %v879
      %v1230 = vpack.c.b16 %v894, %v887
      %v1231 = vpack.c.b16 %v895, %v888
      %v1232 = vpack.c.b16 %v896, %v889
      %v1233 = vpack.c.b16 %v897, %v890
      %v1234 = vpack.c.b16 %v898, %v891
      %v1235 = vpack.c.b16 %v899, %v892
      %v1236 = vpack.c.b16 %v900, %v893
      %v1237 = vpack.c.b16 %v908, %v901
      %v1238 = vpack.c.b16 %v909, %v902
      %v1239 = vpack.c.b16 %v910, %v903
      %v1240 = vpack.c.b16 %v911, %v904
      %v1241 = vpack.c.b16 %v912, %v905
      %v1242 = vpack.c.b16 %v913, %v906
      %v1243 = vpack.c.b16 %v914, %v907
      %v1244 = vpack.c.b16 %v922, %v915
      %v1245 = vpack.c.b16 %v923, %v916
      %v1246 = vpack.c.b16 %v924, %v917
      %v1247 = vpack.c.b16 %v925, %v918
      %v1248 = vpack.c.b16 %v926, %v919
      %v1249 = vpack.c.b16 %v927, %v920
      %v1250 = vpack.c.b16 %v928, %v921
      %v1251 = vpack.c.b16 %v936, %v929
      %v1252 = vpack.c.b16 %v937, %v930
      %v1253 = vpack.c.b16 %v938, %v931
      %v1254 = vpack.c.b16 %v939, %v932
      %v1255 = vpack.c.b16 %v940, %v933
      %v1256 = vpack.c.b16 %v941, %v934
      %v1257 = vpack.c.b16 %v942, %v935
      %v1258 = vpack.c.b16 %v950, %v943
      %v1259 = vpack.c.b16 %v951, %v944
      %v1260 = vpack.c.b16 %v952, %v945
      %v1261 = vpack.c.b16 %v953, %v946
      %v1262 = vpack.c.b16 %v954, %v947
      %v1263 = vpack.c.b16 %v955, %v948
      %v1264 = vpack.c.b16 %v956, %v949
      %v1265 = vpack.c.b16 %v964, %v957
      %v1266 = vpack.c.b16 %v965, %v958
      %v1267 = vpack.c.b16 %v966, %v959
      %v1268 = vpack.c.b16 %v967, %v960
      %v1269 = vpack.c.b16 %v968, %v961
      %v1270 = vpack.c.b16 %v969, %v962
      %v1271 = vpack.c.b16 %v970, %v963
      %v1272 = vpack.c.b16 %v978, %v971
      %v1273 = vpack.c.b16 %v979, %v972
      %v1274 = vpack.c.b16 %v980, %v973
      %v1275 = vpack.c.b16 %v981, %v974
      %v1276 = vpack.c.b16 %v982, %v975
      %v1277 = vpack.c.b16 %v983, %v976
      %v1278 = vpack.c.b16 %v984, %v977
      %v1279 = vpack.c.b16 %v992, %v985
      %v1280 = vpack.c.b16 %v993, %v986
      %v1281 = vpack.c.b16 %v994, %v987
      %v1282 = vpack.c.b16 %v995, %v988
      %v1283 = vpack.c.b16 %v996, %v989
      %v1284 = vpack.c.b16 %v997, %v990
      %v1285 = vpack.c.b16 %v998, %v991
      %v1286 = vpack.c.b16 %v1006, %v999
      %v1287 = vpack.c.b16 %v1007, %v1000
      %v1288 = vpack.c.b16 %v1008, %v1001
      %v1289 = vpack.c.b16 %v1009, %v1002
      %v1290 = vpack.c.b16 %v1010, %v1003
      %v1291 = vpack.c.b16 %v1011, %v1004
      %v1292 = vpack.c.b16 %v1012, %v1005
      %v1293 = vpack.c.b16 %v1020, %v1013
      %v1294 = vpack.c.b16 %v1021, %v1014
      %v1295 = vpack.c.b16 %v1022, %v1015
      %v1296 = vpack.c.b16 %v1023, %v1016
      %v1297 = vpack.c.b16 %v1024, %v1017
      %v1298 = vpack.c.b16 %v1025, %v1018
      %v1299 = vpack.c.b16 %v1026, %v1019
      %v1300 = vpack.c.b16 %v1034, %v1027
      %v1301 = vpack.c.b16 %v1035, %v1028
      %v1302 = vpack.c.b16 %v1036, %v1029
      %v1303 = vpack.c.b16 %v1037, %v1030
      %v1304 = vpack.c.b16 %v1038, %v1031
      %v1305 = vpack.c.b16 %v1039, %v1032
      %v1306 = vpack.c.b16 %v1040, %v1033
      %v1307 = vpack.c.b16 %v1048, %v1041
      %v1308 = vpack.c.b16 %v1049, %v1042
      %v1309 = vpack.c.b16 %v1050, %v1043
      %v1310 = vpack.c.b16 %v1051, %v1044
      %v1311 = vpack.c.b16 %v1052, %v1045
      %v1312 = vpack.c.b16 %v1053, %v1046
      %v1313 = vpack.c.b16 %v1054, %v1047
      %v1314 = vpack.c.b16 %v1062, %v1055
      %v1315 = vpack.c.b16 %v1063, %v1056
      %v1316 = vpack.c.b16 %v1064, %v1057
      %v1317 = vpack.c.b16 %v1065, %v1058
      %v1318 = vpack.c.b16 %v1066, %v1059
      %v1319 = vpack.c.b16 %v1067, %v1060
      %v1320 = vpack.c.b16 %v1068, %v1061
      %v1321 = vpack.c.b16 %v1076, %v1069
      %v1322 = vpack.c.b16 %v1077, %v1070
      %v1323 = vpack.c.b16 %v1078, %v1071
      %v1324 = vpack.c.b16 %v1079, %v1072
      %v1325 = vpack.c.b16 %v1080, %v1073
      %v1326 = vpack.c.b16 %v1081, %v1074
      %v1327 = vpack.c.b16 %v1082, %v1075
      %v1328 = vpack.c.b16 %v1090, %v1083
      %v1329 = vpack.c.b16 %v1091, %v1084
      %v1330 = vpack.c.b16 %v1092, %v1085
      %v1331 = vpack.c.b16 %v1093, %v1086
      %v1332 = vpack.c.b16 %v1094, %v1087
      %v1333 = vpack.c.b16 %v1095, %v1088
      %v1334 = vpack.c.b16 %v1096, %v1089
      %v1335 = vpack.c.b16 %v1104, %v1097
      %v1336 = vpack.c.b16 %v1105, %v1098
      %v1337 = vpack.c.b16 %v1106, %v1099
      %v1338 = vpack.c.b16 %v1107, %v1100
      %v1339 = vpack.c.b16 %v1108, %v1101
      %v1340 = vpack.c.b16 %v1109, %v1102
      %v1341 = vpack.c.b16 %v1110, %v1103
      %v1342 = vpack.c.b16 %v1118, %v1111
      %v1343 = vpack.c.b16 %v1119, %v1112
      %v1344 = vpack.c.b16 %v1120, %v1113
      %v1345 = vpack.c.b16 %v1121, %v1114
      %v1346 = vpack.c.b16 %v1122, %v1115
      %v1347 = vpack.c.b16 %v1123, %v1116
      %v1348 = vpack.c.b16 %v1124, %v1117
      %v1349 = vpack.c.b16 %v1132, %v1125
      %v1350 = vpack.c.b16 %v1133, %v1126
      %v1351 = vpack.c.b16 %v1134, %v1127
      %v1352 = vpack.c.b16 %v1135, %v1128
      %v1353 = vpack.c.b16 %v1136, %v1129
      %v1354 = vpack.c.b16 %v1137, %v1130
      %v1355 = vpack.c.b16 %v1138, %v1131
      %v1356 = vpack.c.b16 %v1146, %v1139
      %v1357 = vpack.c.b16 %v1147, %v1140
      %v1358 = vpack.c.b16 %v1148, %v1141
      %v1359 = vpack.c.b16 %v1149, %v1142
      %v1360 = vpack.c.b16 %v1150, %v1143
      %v1361 = vpack.c.b16 %v1151, %v1144
      %v1362 = vpack.c.b16 %v1152, %v1145
      %v1363 = vpack.c.b16 %v1160, %v1153
      %v1364 = vpack.c.b16 %v1161, %v1154
      %v1365 = vpack.c.b16 %v1162, %v1155
      %v1366 = vpack.c.b16 %v1163, %v1156
      %v1367 = vpack.c.b16 %v1164, %v1157
      %v1368 = vpack.c.b16 %v1165, %v1158
      %v1369 = vpack.c.b16 %v1166, %v1159
      %v1370 = vpack.c.b16 %v1174, %v1167
      %v1371 = vpack.c.b16 %v1175, %v1168
      %v1372 = vpack.c.b16 %v1176, %v1169
      %v1373 = vpack.c.b16 %v1177, %v1170
      %v1374 = vpack.c.b16 %v1178, %v1171
      %v1375 = vpack.c.b16 %v1179, %v1172
      %v1376 = vpack.c.b16 %v1180, %v1173
      %v1653 = vunpack.c.l.b16 %v453
      %v1654 = vunpack.c.l.b16 %v454
      %v1655 = vunpack.c.l.b16 %v455
      %v1656 = vunpack.c.l.b16 %v456
      %v1657 = vunpack.c.l.b16 %v457
      %v1658 = vunpack.c.l.b16 %v458
      %v1659 = vunpack.c.l.b16 %v459
      %v1660 = vunpack.c.l.b16 %v460
      %v1661 = vunpack.c.l.b16 %v461
      %v1662 = vunpack.c.l.b16 %v462
      %v1663 = vunpack.c.l.b16 %v463
      %v1664 = vunpack.c.l.b16 %v464
      %v1665 = vunpack.c.l.b16 %v465
      %v1666 = vunpack.c.l.b16 %v466
      %v1667 = vunpack.c.l.b16 %v467
      %v1668 = vunpack.c.l.b16 %v468
      %v1669 = vunpack.c.l.b16 %v469
      %v1670 = vunpack.c.l.b16 %v470
      %v1671 = vunpack.c.l.b16 %v471
      %v1672 = vunpack.c.l.b16 %v472
      %v1673 = vunpack.c.l.b16 %v473
      %v1674 = vunpack.c.l.b16 %v474
      %v1675 = vunpack.c.l.b16 %v475
      %v1676 = vunpack.c.l.b16 %v476
      %v1677 = vunpack.c.l.b16 %v477
      %v1678 = vunpack.c.l.b16 %v478
      %v1679 = vunpack.c.l.b16 %v479
      %v1680 = vunpack.c.l.b16 %v480
      %v1681 = vunpack.c.l.b16 %v481
      %v1682 = vunpack.c.l.b16 %v482
      %v1683 = vunpack.c.l.b16 %v483
      %v1684 = vunpack.c.l.b16 %v484
      %v1685 = vunpack.c.l.b16 %v485
      %v1686 = vunpack.c.l.b16 %v486
      %v1687 = vunpack.c.l.b16 %v487
      %v1688 = vunpack.c.l.b16 %v488
      %v1689 = vunpack.c.l.b16 %v489
      %v1690 = vunpack.c.l.b16 %v490
      %v1691 = vunpack.c.l.b16 %v491
      %v1692 = vunpack.c.l.b16 %v492
      %v1693 = vunpack.c.l.b16 %v493
      %v1694 = vunpack.c.l.b16 %v494
      %v1695 = vunpack.c.l.b16 %v495
      %v1696 = vunpack.c.l.b16 %v496
      %v1697 = vunpack.c.l.b16 %v497
      %v1698 = vunpack.c.l.b16 %v498
      %v1699 = vunpack.c.l.b16 %v499
      %v1700 = vunpack.c.l.b16 %v500
      %v1701 = vunpack.c.l.b16 %v501
      %v1702 = vunpack.c.l.b16 %v502
      %v1703 = vunpack.c.l.b16 %v503
      %v1704 = vunpack.c.l.b16 %v504
      %v1705 = vunpack.c.l.b16 %v505
      %v1706 = vunpack.c.l.b16 %v506
      %v1707 = vunpack.c.l.b16 %v507
      %v1708 = vunpack.c.l.b16 %v508
      %v1709 = vunpack.c.l.b16 %v509
      %v1710 = vunpack.c.l.b16 %v510
      %v1711 = vunpack.c.l.b16 %v511
      %v1712 = vunpack.c.l.b16 %v512
      %v1713 = vunpack.c.l.b16 %v513
      %v1714 = vunpack.c.l.b16 %v514
      %v1715 = vunpack.c.l.b16 %v515
      %v1716 = vunpack.c.l.b16 %v516
      %v1717 = vunpack.c.l.b16 %v517
      %v1718 = vunpack.c.l.b16 %v518
      %v1719 = vunpack.c.l.b16 %v519
      %v1720 = vunpack.c.l.b16 %v520
      %v1721 = vunpack.c.l.b16 %v521
      %v1722 = vunpack.c.l.b16 %v522
      %v1723 = vunpack.c.l.b16 %v523
      %v1724 = vunpack.c.l.b16 %v524
      %v1725 = vunpack.c.l.b16 %v525
      %v1726 = vunpack.c.l.b16 %v526
      %v1727 = vunpack.c.l.b16 %v527
      %v1728 = vunpack.c.l.b16 %v528
      %v1729 = vunpack.c.l.b16 %v529
      %v1730 = vunpack.c.l.b16 %v530
      %v1731 = vunpack.c.l.b16 %v531
      %v1732 = vunpack.c.l.b16 %v532
      %v1733 = vunpack.c.l.b16 %v533
      %v1734 = vunpack.c.l.b16 %v534
      %v1735 = vunpack.c.l.b16 %v535
      %v1736 = vunpack.c.l.b16 %v536
      %v1737 = vunpack.c.l.b16 %v537
      %v1738 = vunpack.c.l.b16 %v538
      %v1739 = vunpack.c.l.b16 %v539
      %v1740 = vunpack.c.l.b16 %v540
      %v1741 = vunpack.c.l.b16 %v541
      %v1742 = vunpack.c.l.b16 %v542
      %v1743 = vunpack.c.l.b16 %v543
      %v1744 = vunpack.c.l.b16 %v544
      %v1745 = vunpack.c.l.b16 %v545
      %v1746 = vunpack.c.l.b16 %v546
      %v1747 = vunpack.c.l.b16 %v547
      %v1748 = vunpack.c.l.b16 %v548
      %v1749 = vunpack.c.l.b16 %v549
      %v1750 = vunpack.c.l.b16 %v550
      %v1751 = vunpack.c.l.b16 %v551
      %v1752 = vunpack.c.l.b16 %v552
      %v1753 = vunpack.c.l.b16 %v553
      %v1754 = vunpack.c.l.b16 %v554
      %v1755 = vunpack.c.l.b16 %v555
      %v1756 = vunpack.c.l.b16 %v556
      %v1757 = vunpack.c.l.b16 %v557
      %v1758 = vunpack.c.l.b16 %v558
      %v1759 = vunpack.c.l.b16 %v559
      %v1760 = vunpack.c.l.b16 %v560
      %v1761 = vpack.c.b16 %v1654, %v1653
      %v1762 = vpack.c.b16 %v1656, %v1655
      %v1763 = vpack.c.b16 %v1658, %v1657
      %v1764 = vpack.c.b16 %v1660, %v1659
      %v1765 = vpack.c.b16 %v1662, %v1661
      %v1766 = vpack.c.b16 %v1664, %v1663
      %v1767 = vpack.c.b16 %v1666, %v1665
      %v1768 = vpack.c.b16 %v1668, %v1667
      %v1769 = vpack.c.b16 %v1670, %v1669
      %v1770 = vpack.c.b16 %v1672, %v1671
      %v1771 = vpack.c.b16 %v1674, %v1673
      %v1772 = vpack.c.b16 %v1676, %v1675
      %v1773 = vpack.c.b16 %v1678, %v1677
      %v1774 = vpack.c.b16 %v1680, %v1679
      %v1775 = vpack.c.b16 %v1682, %v1681
      %v1776 = vpack.c.b16 %v1684, %v1683
      %v1777 = vpack.c.b16 %v1686, %v1685
      %v1778 = vpack.c.b16 %v1688, %v1687
      %v1779 = vpack.c.b16 %v1690, %v1689
      %v1780 = vpack.c.b16 %v1692, %v1691
      %v1781 = vpack.c.b16 %v1694, %v1693
      %v1782 = vpack.c.b16 %v1696, %v1695
      %v1783 = vpack.c.b16 %v1698, %v1697
      %v1784 = vpack.c.b16 %v1700, %v1699
      %v1785 = vpack.c.b16 %v1702, %v1701
      %v1786 = vpack.c.b16 %v1704, %v1703
      %v1787 = vpack.c.b16 %v1706, %v1705
      %v1788 = vpack.c.b16 %v1708, %v1707
      %v1789 = vpack.c.b16 %v1710, %v1709
      %v1790 = vpack.c.b16 %v1712, %v1711
      %v1791 = vpack.c.b16 %v1714, %v1713
      %v1792 = vpack.c.b16 %v1716, %v1715
      %v1793 = vpack.c.b16 %v1718, %v1717
      %v1794 = vpack.c.b16 %v1720, %v1719
      %v1795 = vpack.c.b16 %v1722, %v1721
      %v1796 = vpack.c.b16 %v1724, %v1723
      %v1797 = vpack.c.b16 %v1726, %v1725
      %v1798 = vpack.c.b16 %v1728, %v1727
      %v1799 = vpack.c.b16 %v1730, %v1729
      %v1800 = vpack.c.b16 %v1732, %v1731
      %v1801 = vpack.c.b16 %v1734, %v1733
      %v1802 = vpack.c.b16 %v1736, %v1735
      %v1803 = vpack.c.b16 %v1738, %v1737
      %v1804 = vpack.c.b16 %v1740, %v1739
      %v1805 = vpack.c.b16 %v1742, %v1741
      %v1806 = vpack.c.b16 %v1744, %v1743
      %v1807 = vpack.c.b16 %v1746, %v1745
      %v1808 = vpack.c.b16 %v1748, %v1747
      %v1809 = vpack.c.b16 %v1750, %v1749
      %v1810 = vpack.c.b16 %v1752, %v1751
      %v1811 = vpack.c.b16 %v1754, %v1753
      %v1812 = vpack.c.b16 %v1756, %v1755
      %v1813 = vpack.c.b16 %v1758, %v1757
      %v1814 = vpack.c.b16 %v1760, %v1759
      %vm1869 = vcmask 785408
      %v1871 = vsel %vm1869, %v1187, 0
      %v1874 = vsel %vm1869, %v1194, 0
      %v1877 = vsel %vm1869, %v1201, 0
      %v1880 = vsel %vm1869, %v1208, 0
      %v1883 = vsel %vm1869, %v1215, 0
      %v1886 = vsel %vm1869, %v1222, 0
      %v1889 = vsel %vm1869, %v1229, 0
      %v1892 = vsel %vm1869, %v1236, 0
      %v1895 = vsel %vm1869, %v1243, 0
      %v1898 = vsel %vm1869, %v1250, 0
      %v1901 = vsel %vm1869, %v1257, 0
      %v1904 = vsel %vm1869, %v1264, 0
      %v1907 = vsel %vm1869, %v1271, 0
      %v1910 = vsel %vm1869, %v1278, 0
      %v1913 = vsel %vm1869, %v1285, 0
      %v1916 = vsel %vm1869, %v1292, 0
      %v1919 = vsel %vm1869, %v1299, 0
      %v1922 = vsel %vm1869, %v1306, 0
      %v1925 = vsel %vm1869, %v1313, 0
      %v1928 = vsel %vm1869, %v1320, 0
      %v1931 = vsel %vm1869, %v1327, 0
      %v1934 = vsel %vm1869, %v1334, 0
      %v1937 = vsel %vm1869, %v1341, 0
      %v1940 = vsel %vm1869, %v1348, 0
      %v1943 = vsel %vm1869, %v1355, 0
      %v1946 = vsel %vm1869, %v1362, 0
      %v1949 = vsel %vm1869, %v1369, 0
      %v1952 = vsel %vm1869, %v1376, 0
      %1954 = vmatpush.bf16.msra.mxu0 %v1768
      %1955 = vmatpush.bf16.msra.mxu0 %v1767
      %1956 = vmatpush.bf16.msra.mxu0 %v1766
      %1957 = vmatpush.bf16.msra.mxu0 %v1765
      %1958 = vmatpush.bf16.msra.mxu0 %v1764
      %1959 = vmatpush.bf16.msra.mxu0 %v1763
      %1960 = vmatpush.bf16.msra.mxu0 %v1762
      %1961 = vmatpush.bf16.msra.mxu0 %v1761
      %1962 = vmatmul.bf16.gmra.mxu0 %v1181
      %v1963 = vpop.f32.mrf.mxu0
      %v1964 = vadd.f32 %v563, %v1963
      %v1965 = vpop.f32.mrf.mxu0
      %v1966 = vadd.f32 %v563, %v1965
      %1967 = vmatmul.bf16.gmra.mxu0 %v1188
      %v1968 = vpop.f32.mrf.mxu0
      %v1969 = vadd.f32 %v563, %v1968
      %v1970 = vpop.f32.mrf.mxu0
      %v1971 = vadd.f32 %v563, %v1970
      %1972 = vmatmul.bf16.gmra.mxu0 %v1195
      %v1973 = vpop.f32.mrf.mxu0
      %v1974 = vadd.f32 %v563, %v1973
      %v1975 = vpop.f32.mrf.mxu0
      %v1976 = vadd.f32 %v563, %v1975
      %1977 = vmatmul.bf16.gmra.mxu0 %v1202
      %v1978 = vpop.f32.mrf.mxu0
      %v1979 = vadd.f32 %v563, %v1978
      %v1980 = vpop.f32.mrf.mxu0
      %v1981 = vadd.f32 %v563, %v1980
      %1982 = vmatmul.bf16.gmra.mxu0 %v1209
      %v1983 = vpop.f32.mrf.mxu0
      %v1984 = vadd.f32 %v563, %v1983
      %v1985 = vpop.f32.mrf.mxu0
      %v1986 = vadd.f32 %v563, %v1985
      %1987 = vmatmul.bf16.gmra.mxu0 %v1216
      %v1988 = vpop.f32.mrf.mxu0
      %v1989 = vadd.f32 %v563, %v1988
      %v1990 = vpop.f32.mrf.mxu0
      %v1991 = vadd.f32 %v563, %v1990
      %1992 = vmatmul.bf16.gmra.mxu0 %v1223
      %v1993 = vpop.f32.mrf.mxu0
      %v1994 = vadd.f32 %v563, %v1993
      %v1995 = vpop.f32.mrf.mxu0
      %v1996 = vadd.f32 %v563, %v1995
      %1997 = vmatmul.bf16.gmra.mxu0 %v1230
      %v1998 = vpop.f32.mrf.mxu0
      %v1999 = vadd.f32 %v563, %v1998
      %v2000 = vpop.f32.mrf.mxu0
      %v2001 = vadd.f32 %v563, %v2000
      %2002 = vmatmul.bf16.gmra.mxu0 %v1237
      %v2003 = vpop.f32.mrf.mxu0
      %v2004 = vadd.f32 %v563, %v2003
      %v2005 = vpop.f32.mrf.mxu0
      %v2006 = vadd.f32 %v563, %v2005
      %2007 = vmatmul.bf16.gmra.mxu0 %v1244
      %v2008 = vpop.f32.mrf.mxu0
      %v2009 = vadd.f32 %v563, %v2008
      %v2010 = vpop.f32.mrf.mxu0
      %v2011 = vadd.f32 %v563, %v2010
      %2012 = vmatmul.bf16.gmra.mxu0 %v1251
      %v2013 = vpop.f32.mrf.mxu0
      %v2014 = vadd.f32 %v563, %v2013
      %v2015 = vpop.f32.mrf.mxu0
      %v2016 = vadd.f32 %v563, %v2015
      %2017 = vmatmul.bf16.gmra.mxu0 %v1258
      %v2018 = vpop.f32.mrf.mxu0
      %v2019 = vadd.f32 %v563, %v2018
      %v2020 = vpop.f32.mrf.mxu0
      %v2021 = vadd.f32 %v563, %v2020
      %2022 = vmatmul.bf16.gmra.mxu0 %v1265
      %v2023 = vpop.f32.mrf.mxu0
      %v2024 = vadd.f32 %v563, %v2023
      %v2025 = vpop.f32.mrf.mxu0
      %v2026 = vadd.f32 %v563, %v2025
      %2027 = vmatmul.bf16.gmra.mxu0 %v1272
      %v2028 = vpop.f32.mrf.mxu0
      %v2029 = vadd.f32 %v563, %v2028
      %v2030 = vpop.f32.mrf.mxu0
      %v2031 = vadd.f32 %v563, %v2030
      %2032 = vmatmul.bf16.gmra.mxu0 %v1279
      %v2033 = vpop.f32.mrf.mxu0
      %v2034 = vadd.f32 %v563, %v2033
      %v2035 = vpop.f32.mrf.mxu0
      %v2036 = vadd.f32 %v563, %v2035
      %2037 = vmatmul.bf16.gmra.mxu0 %v1286
      %v2038 = vpop.f32.mrf.mxu0
      %v2039 = vadd.f32 %v563, %v2038
      %v2040 = vpop.f32.mrf.mxu0
      %v2041 = vadd.f32 %v563, %v2040
      %2042 = vmatmul.bf16.gmra.mxu0 %v1293
      %v2043 = vpop.f32.mrf.mxu0
      %v2044 = vadd.f32 %v563, %v2043
      %v2045 = vpop.f32.mrf.mxu0
      %v2046 = vadd.f32 %v563, %v2045
      %2047 = vmatmul.bf16.gmra.mxu0 %v1300
      %v2048 = vpop.f32.mrf.mxu0
      %v2049 = vadd.f32 %v563, %v2048
      %v2050 = vpop.f32.mrf.mxu0
      %v2051 = vadd.f32 %v563, %v2050
      %2052 = vmatmul.bf16.gmra.mxu0 %v1307
      %v2053 = vpop.f32.mrf.mxu0
      %v2054 = vadd.f32 %v563, %v2053
      %v2055 = vpop.f32.mrf.mxu0
      %v2056 = vadd.f32 %v563, %v2055
      %2057 = vmatmul.bf16.gmra.mxu0 %v1314
      %v2058 = vpop.f32.mrf.mxu0
      %v2059 = vadd.f32 %v563, %v2058
      %v2060 = vpop.f32.mrf.mxu0
      %v2061 = vadd.f32 %v563, %v2060
      %2062 = vmatmul.bf16.gmra.mxu0 %v1321
      %v2063 = vpop.f32.mrf.mxu0
      %v2064 = vadd.f32 %v563, %v2063
      %v2065 = vpop.f32.mrf.mxu0
      %v2066 = vadd.f32 %v563, %v2065
      %2067 = vmatmul.bf16.gmra.mxu0 %v1328
      %v2068 = vpop.f32.mrf.mxu0
      %v2069 = vadd.f32 %v563, %v2068
      %v2070 = vpop.f32.mrf.mxu0
      %v2071 = vadd.f32 %v563, %v2070
      %2072 = vmatmul.bf16.gmra.mxu0 %v1335
      %v2073 = vpop.f32.mrf.mxu0
      %v2074 = vadd.f32 %v563, %v2073
      %v2075 = vpop.f32.mrf.mxu0
      %v2076 = vadd.f32 %v563, %v2075
      %2077 = vmatmul.bf16.gmra.mxu0 %v1342
      %v2078 = vpop.f32.mrf.mxu0
      %v2079 = vadd.f32 %v563, %v2078
      %v2080 = vpop.f32.mrf.mxu0
      %v2081 = vadd.f32 %v563, %v2080
      %2082 = vmatmul.bf16.gmra.mxu0 %v1349
      %v2083 = vpop.f32.mrf.mxu0
      %v2084 = vadd.f32 %v563, %v2083
      %v2085 = vpop.f32.mrf.mxu0
      %v2086 = vadd.f32 %v563, %v2085
      %2087 = vmatmul.bf16.gmra.mxu0 %v1356
      %v2088 = vpop.f32.mrf.mxu0
      %v2089 = vadd.f32 %v563, %v2088
      %v2090 = vpop.f32.mrf.mxu0
      %v2091 = vadd.f32 %v563, %v2090
      %2092 = vmatmul.bf16.gmra.mxu0 %v1363
      %v2093 = vpop.f32.mrf.mxu0
      %v2094 = vadd.f32 %v563, %v2093
      %v2095 = vpop.f32.mrf.mxu0
      %v2096 = vadd.f32 %v563, %v2095
      %2097 = vmatmul.bf16.gmra.mxu0 %v1370
      %v2098 = vpop.f32.mrf.mxu0
      %v2099 = vadd.f32 %v563, %v2098
      %v2100 = vpop.f32.mrf.mxu0
      %v2101 = vadd.f32 %v563, %v2100
      %2102 = vdwg.mxu0
      %2103 = vmatpush.bf16.msra.mxu0 %v1776
      %2104 = vmatpush.bf16.msra.mxu0 %v1775
      %2105 = vmatpush.bf16.msra.mxu0 %v1774
      %2106 = vmatpush.bf16.msra.mxu0 %v1773
      %2107 = vmatpush.bf16.msra.mxu0 %v1772
      %2108 = vmatpush.bf16.msra.mxu0 %v1771
      %2109 = vmatpush.bf16.msra.mxu0 %v1770
      %2110 = vmatpush.bf16.msra.mxu0 %v1769
      %2111 = vmatmul.bf16.gmra.mxu0 %v1182
      %v2112 = vpop.f32.mrf.mxu0
      %v2113 = vadd.f32 %v1964, %v2112
      %v2114 = vpop.f32.mrf.mxu0
      %v2115 = vadd.f32 %v1966, %v2114
      %2116 = vmatmul.bf16.gmra.mxu0 %v1189
      %v2117 = vpop.f32.mrf.mxu0
      %v2118 = vadd.f32 %v1969, %v2117
      %v2119 = vpop.f32.mrf.mxu0
      %v2120 = vadd.f32 %v1971, %v2119
      %2121 = vmatmul.bf16.gmra.mxu0 %v1196
      %v2122 = vpop.f32.mrf.mxu0
      %v2123 = vadd.f32 %v1974, %v2122
      %v2124 = vpop.f32.mrf.mxu0
      %v2125 = vadd.f32 %v1976, %v2124
      %2126 = vmatmul.bf16.gmra.mxu0 %v1203
      %v2127 = vpop.f32.mrf.mxu0
      %v2128 = vadd.f32 %v1979, %v2127
      %v2129 = vpop.f32.mrf.mxu0
      %v2130 = vadd.f32 %v1981, %v2129
      %2131 = vmatmul.bf16.gmra.mxu0 %v1210
      %v2132 = vpop.f32.mrf.mxu0
      %v2133 = vadd.f32 %v1984, %v2132
      %v2134 = vpop.f32.mrf.mxu0
      %v2135 = vadd.f32 %v1986, %v2134
      %2136 = vmatmul.bf16.gmra.mxu0 %v1217
      %v2137 = vpop.f32.mrf.mxu0
      %v2138 = vadd.f32 %v1989, %v2137
      %v2139 = vpop.f32.mrf.mxu0
      %v2140 = vadd.f32 %v1991, %v2139
      %2141 = vmatmul.bf16.gmra.mxu0 %v1224
      %v2142 = vpop.f32.mrf.mxu0
      %v2143 = vadd.f32 %v1994, %v2142
      %v2144 = vpop.f32.mrf.mxu0
      %v2145 = vadd.f32 %v1996, %v2144
      %2146 = vmatmul.bf16.gmra.mxu0 %v1231
      %v2147 = vpop.f32.mrf.mxu0
      %v2148 = vadd.f32 %v1999, %v2147
      %v2149 = vpop.f32.mrf.mxu0
      %v2150 = vadd.f32 %v2001, %v2149
      %2151 = vmatmul.bf16.gmra.mxu0 %v1238
      %v2152 = vpop.f32.mrf.mxu0
      %v2153 = vadd.f32 %v2004, %v2152
      %v2154 = vpop.f32.mrf.mxu0
      %v2155 = vadd.f32 %v2006, %v2154
      %2156 = vmatmul.bf16.gmra.mxu0 %v1245
      %v2157 = vpop.f32.mrf.mxu0
      %v2158 = vadd.f32 %v2009, %v2157
      %v2159 = vpop.f32.mrf.mxu0
      %v2160 = vadd.f32 %v2011, %v2159
      %2161 = vmatmul.bf16.gmra.mxu0 %v1252
      %v2162 = vpop.f32.mrf.mxu0
      %v2163 = vadd.f32 %v2014, %v2162
      %v2164 = vpop.f32.mrf.mxu0
      %v2165 = vadd.f32 %v2016, %v2164
      %2166 = vmatmul.bf16.gmra.mxu0 %v1259
      %v2167 = vpop.f32.mrf.mxu0
      %v2168 = vadd.f32 %v2019, %v2167
      %v2169 = vpop.f32.mrf.mxu0
      %v2170 = vadd.f32 %v2021, %v2169
      %2171 = vmatmul.bf16.gmra.mxu0 %v1266
      %v2172 = vpop.f32.mrf.mxu0
      %v2173 = vadd.f32 %v2024, %v2172
      %v2174 = vpop.f32.mrf.mxu0
      %v2175 = vadd.f32 %v2026, %v2174
      %2176 = vmatmul.bf16.gmra.mxu0 %v1273
      %v2177 = vpop.f32.mrf.mxu0
      %v2178 = vadd.f32 %v2029, %v2177
      %v2179 = vpop.f32.mrf.mxu0
      %v2180 = vadd.f32 %v2031, %v2179
      %2181 = vmatmul.bf16.gmra.mxu0 %v1280
      %v2182 = vpop.f32.mrf.mxu0
      %v2183 = vadd.f32 %v2034, %v2182
      %v2184 = vpop.f32.mrf.mxu0
      %v2185 = vadd.f32 %v2036, %v2184
      %2186 = vmatmul.bf16.gmra.mxu0 %v1287
      %v2187 = vpop.f32.mrf.mxu0
      %v2188 = vadd.f32 %v2039, %v2187
      %v2189 = vpop.f32.mrf.mxu0
      %v2190 = vadd.f32 %v2041, %v2189
      %2191 = vmatmul.bf16.gmra.mxu0 %v1294
      %v2192 = vpop.f32.mrf.mxu0
      %v2193 = vadd.f32 %v2044, %v2192
      %v2194 = vpop.f32.mrf.mxu0
      %v2195 = vadd.f32 %v2046, %v2194
      %2196 = vmatmul.bf16.gmra.mxu0 %v1301
      %v2197 = vpop.f32.mrf.mxu0
      %v2198 = vadd.f32 %v2049, %v2197
      %v2199 = vpop.f32.mrf.mxu0
      %v2200 = vadd.f32 %v2051, %v2199
      %2201 = vmatmul.bf16.gmra.mxu0 %v1308
      %v2202 = vpop.f32.mrf.mxu0
      %v2203 = vadd.f32 %v2054, %v2202
      %v2204 = vpop.f32.mrf.mxu0
      %v2205 = vadd.f32 %v2056, %v2204
      %2206 = vmatmul.bf16.gmra.mxu0 %v1315
      %v2207 = vpop.f32.mrf.mxu0
      %v2208 = vadd.f32 %v2059, %v2207
      %v2209 = vpop.f32.mrf.mxu0
      %v2210 = vadd.f32 %v2061, %v2209
      %2211 = vmatmul.bf16.gmra.mxu0 %v1322
      %v2212 = vpop.f32.mrf.mxu0
      %v2213 = vadd.f32 %v2064, %v2212
      %v2214 = vpop.f32.mrf.mxu0
      %v2215 = vadd.f32 %v2066, %v2214
      %2216 = vmatmul.bf16.gmra.mxu0 %v1329
      %v2217 = vpop.f32.mrf.mxu0
      %v2218 = vadd.f32 %v2069, %v2217
      %v2219 = vpop.f32.mrf.mxu0
      %v2220 = vadd.f32 %v2071, %v2219
      %2221 = vmatmul.bf16.gmra.mxu0 %v1336
      %v2222 = vpop.f32.mrf.mxu0
      %v2223 = vadd.f32 %v2074, %v2222
      %v2224 = vpop.f32.mrf.mxu0
      %v2225 = vadd.f32 %v2076, %v2224
      %2226 = vmatmul.bf16.gmra.mxu0 %v1343
      %v2227 = vpop.f32.mrf.mxu0
      %v2228 = vadd.f32 %v2079, %v2227
      %v2229 = vpop.f32.mrf.mxu0
      %v2230 = vadd.f32 %v2081, %v2229
      %2231 = vmatmul.bf16.gmra.mxu0 %v1350
      %v2232 = vpop.f32.mrf.mxu0
      %v2233 = vadd.f32 %v2084, %v2232
      %v2234 = vpop.f32.mrf.mxu0
      %v2235 = vadd.f32 %v2086, %v2234
      %2236 = vmatmul.bf16.gmra.mxu0 %v1357
      %v2237 = vpop.f32.mrf.mxu0
      %v2238 = vadd.f32 %v2089, %v2237
      %v2239 = vpop.f32.mrf.mxu0
      %v2240 = vadd.f32 %v2091, %v2239
      %2241 = vmatmul.bf16.gmra.mxu0 %v1364
      %v2242 = vpop.f32.mrf.mxu0
      %v2243 = vadd.f32 %v2094, %v2242
      %v2244 = vpop.f32.mrf.mxu0
      %v2245 = vadd.f32 %v2096, %v2244
      %2246 = vmatmul.bf16.gmra.mxu0 %v1371
      %v2247 = vpop.f32.mrf.mxu0
      %v2248 = vadd.f32 %v2099, %v2247
      %v2249 = vpop.f32.mrf.mxu0
      %v2250 = vadd.f32 %v2101, %v2249
      %2251 = vdwg.mxu0
      %2252 = vmatpush.bf16.msra.mxu0 %v1784
      %2253 = vmatpush.bf16.msra.mxu0 %v1783
      %2254 = vmatpush.bf16.msra.mxu0 %v1782
      %2255 = vmatpush.bf16.msra.mxu0 %v1781
      %2256 = vmatpush.bf16.msra.mxu0 %v1780
      %2257 = vmatpush.bf16.msra.mxu0 %v1779
      %2258 = vmatpush.bf16.msra.mxu0 %v1778
      %2259 = vmatpush.bf16.msra.mxu0 %v1777
      %2260 = vmatmul.bf16.gmra.mxu0 %v1183
      %v2261 = vpop.f32.mrf.mxu0
      %v2262 = vadd.f32 %v2113, %v2261
      %v2263 = vpop.f32.mrf.mxu0
      %v2264 = vadd.f32 %v2115, %v2263
      %2265 = vmatmul.bf16.gmra.mxu0 %v1190
      %v2266 = vpop.f32.mrf.mxu0
      %v2267 = vadd.f32 %v2118, %v2266
      %v2268 = vpop.f32.mrf.mxu0
      %v2269 = vadd.f32 %v2120, %v2268
      %2270 = vmatmul.bf16.gmra.mxu0 %v1197
      %v2271 = vpop.f32.mrf.mxu0
      %v2272 = vadd.f32 %v2123, %v2271
      %v2273 = vpop.f32.mrf.mxu0
      %v2274 = vadd.f32 %v2125, %v2273
      %2275 = vmatmul.bf16.gmra.mxu0 %v1204
      %v2276 = vpop.f32.mrf.mxu0
      %v2277 = vadd.f32 %v2128, %v2276
      %v2278 = vpop.f32.mrf.mxu0
      %v2279 = vadd.f32 %v2130, %v2278
      %2280 = vmatmul.bf16.gmra.mxu0 %v1211
      %v2281 = vpop.f32.mrf.mxu0
      %v2282 = vadd.f32 %v2133, %v2281
      %v2283 = vpop.f32.mrf.mxu0
      %v2284 = vadd.f32 %v2135, %v2283
      %2285 = vmatmul.bf16.gmra.mxu0 %v1218
      %v2286 = vpop.f32.mrf.mxu0
      %v2287 = vadd.f32 %v2138, %v2286
      %v2288 = vpop.f32.mrf.mxu0
      %v2289 = vadd.f32 %v2140, %v2288
      %2290 = vmatmul.bf16.gmra.mxu0 %v1225
      %v2291 = vpop.f32.mrf.mxu0
      %v2292 = vadd.f32 %v2143, %v2291
      %v2293 = vpop.f32.mrf.mxu0
      %v2294 = vadd.f32 %v2145, %v2293
      %2295 = vmatmul.bf16.gmra.mxu0 %v1232
      %v2296 = vpop.f32.mrf.mxu0
      %v2297 = vadd.f32 %v2148, %v2296
      %v2298 = vpop.f32.mrf.mxu0
      %v2299 = vadd.f32 %v2150, %v2298
      %2300 = vmatmul.bf16.gmra.mxu0 %v1239
      %v2301 = vpop.f32.mrf.mxu0
      %v2302 = vadd.f32 %v2153, %v2301
      %v2303 = vpop.f32.mrf.mxu0
      %v2304 = vadd.f32 %v2155, %v2303
      %2305 = vmatmul.bf16.gmra.mxu0 %v1246
      %v2306 = vpop.f32.mrf.mxu0
      %v2307 = vadd.f32 %v2158, %v2306
      %v2308 = vpop.f32.mrf.mxu0
      %v2309 = vadd.f32 %v2160, %v2308
      %2310 = vmatmul.bf16.gmra.mxu0 %v1253
      %v2311 = vpop.f32.mrf.mxu0
      %v2312 = vadd.f32 %v2163, %v2311
      %v2313 = vpop.f32.mrf.mxu0
      %v2314 = vadd.f32 %v2165, %v2313
      %2315 = vmatmul.bf16.gmra.mxu0 %v1260
      %v2316 = vpop.f32.mrf.mxu0
      %v2317 = vadd.f32 %v2168, %v2316
      %v2318 = vpop.f32.mrf.mxu0
      %v2319 = vadd.f32 %v2170, %v2318
      %2320 = vmatmul.bf16.gmra.mxu0 %v1267
      %v2321 = vpop.f32.mrf.mxu0
      %v2322 = vadd.f32 %v2173, %v2321
      %v2323 = vpop.f32.mrf.mxu0
      %v2324 = vadd.f32 %v2175, %v2323
      %2325 = vmatmul.bf16.gmra.mxu0 %v1274
      %v2326 = vpop.f32.mrf.mxu0
      %v2327 = vadd.f32 %v2178, %v2326
      %v2328 = vpop.f32.mrf.mxu0
      %v2329 = vadd.f32 %v2180, %v2328
      %2330 = vmatmul.bf16.gmra.mxu0 %v1281
      %v2331 = vpop.f32.mrf.mxu0
      %v2332 = vadd.f32 %v2183, %v2331
      %v2333 = vpop.f32.mrf.mxu0
      %v2334 = vadd.f32 %v2185, %v2333
      %2335 = vmatmul.bf16.gmra.mxu0 %v1288
      %v2336 = vpop.f32.mrf.mxu0
      %v2337 = vadd.f32 %v2188, %v2336
      %v2338 = vpop.f32.mrf.mxu0
      %v2339 = vadd.f32 %v2190, %v2338
      %2340 = vmatmul.bf16.gmra.mxu0 %v1295
      %v2341 = vpop.f32.mrf.mxu0
      %v2342 = vadd.f32 %v2193, %v2341
      %v2343 = vpop.f32.mrf.mxu0
      %v2344 = vadd.f32 %v2195, %v2343
      %2345 = vmatmul.bf16.gmra.mxu0 %v1302
      %v2346 = vpop.f32.mrf.mxu0
      %v2347 = vadd.f32 %v2198, %v2346
      %v2348 = vpop.f32.mrf.mxu0
      %v2349 = vadd.f32 %v2200, %v2348
      %2350 = vmatmul.bf16.gmra.mxu0 %v1309
      %v2351 = vpop.f32.mrf.mxu0
      %v2352 = vadd.f32 %v2203, %v2351
      %v2353 = vpop.f32.mrf.mxu0
      %v2354 = vadd.f32 %v2205, %v2353
      %2355 = vmatmul.bf16.gmra.mxu0 %v1316
      %v2356 = vpop.f32.mrf.mxu0
      %v2357 = vadd.f32 %v2208, %v2356
      %v2358 = vpop.f32.mrf.mxu0
      %v2359 = vadd.f32 %v2210, %v2358
      %2360 = vmatmul.bf16.gmra.mxu0 %v1323
      %v2361 = vpop.f32.mrf.mxu0
      %v2362 = vadd.f32 %v2213, %v2361
      %v2363 = vpop.f32.mrf.mxu0
      %v2364 = vadd.f32 %v2215, %v2363
      %2365 = vmatmul.bf16.gmra.mxu0 %v1330
      %v2366 = vpop.f32.mrf.mxu0
      %v2367 = vadd.f32 %v2218, %v2366
      %v2368 = vpop.f32.mrf.mxu0
      %v2369 = vadd.f32 %v2220, %v2368
      %2370 = vmatmul.bf16.gmra.mxu0 %v1337
      %v2371 = vpop.f32.mrf.mxu0
      %v2372 = vadd.f32 %v2223, %v2371
      %v2373 = vpop.f32.mrf.mxu0
      %v2374 = vadd.f32 %v2225, %v2373
      %2375 = vmatmul.bf16.gmra.mxu0 %v1344
      %v2376 = vpop.f32.mrf.mxu0
      %v2377 = vadd.f32 %v2228, %v2376
      %v2378 = vpop.f32.mrf.mxu0
      %v2379 = vadd.f32 %v2230, %v2378
      %2380 = vmatmul.bf16.gmra.mxu0 %v1351
      %v2381 = vpop.f32.mrf.mxu0
      %v2382 = vadd.f32 %v2233, %v2381
      %v2383 = vpop.f32.mrf.mxu0
      %v2384 = vadd.f32 %v2235, %v2383
      %2385 = vmatmul.bf16.gmra.mxu0 %v1358
      %v2386 = vpop.f32.mrf.mxu0
      %v2387 = vadd.f32 %v2238, %v2386
      %v2388 = vpop.f32.mrf.mxu0
      %v2389 = vadd.f32 %v2240, %v2388
      %2390 = vmatmul.bf16.gmra.mxu0 %v1365
      %v2391 = vpop.f32.mrf.mxu0
      %v2392 = vadd.f32 %v2243, %v2391
      %v2393 = vpop.f32.mrf.mxu0
      %v2394 = vadd.f32 %v2245, %v2393
      %2395 = vmatmul.bf16.gmra.mxu0 %v1372
      %v2396 = vpop.f32.mrf.mxu0
      %v2397 = vadd.f32 %v2248, %v2396
      %v2398 = vpop.f32.mrf.mxu0
      %v2399 = vadd.f32 %v2250, %v2398
      %2400 = vdwg.mxu0
      %2401 = vmatpush.bf16.msra.mxu0 %v1792
      %2402 = vmatpush.bf16.msra.mxu0 %v1791
      %2403 = vmatpush.bf16.msra.mxu0 %v1790
      %2404 = vmatpush.bf16.msra.mxu0 %v1789
      %2405 = vmatpush.bf16.msra.mxu0 %v1788
      %2406 = vmatpush.bf16.msra.mxu0 %v1787
      %2407 = vmatpush.bf16.msra.mxu0 %v1786
      %2408 = vmatpush.bf16.msra.mxu0 %v1785
      %2409 = vmatmul.bf16.gmra.mxu0 %v1184
      %v2410 = vpop.f32.mrf.mxu0
      %v2411 = vadd.f32 %v2262, %v2410
      %v2412 = vpop.f32.mrf.mxu0
      %v2413 = vadd.f32 %v2264, %v2412
      %2414 = vmatmul.bf16.gmra.mxu0 %v1191
      %v2415 = vpop.f32.mrf.mxu0
      %v2416 = vadd.f32 %v2267, %v2415
      %v2417 = vpop.f32.mrf.mxu0
      %v2418 = vadd.f32 %v2269, %v2417
      %2419 = vmatmul.bf16.gmra.mxu0 %v1198
      %v2420 = vpop.f32.mrf.mxu0
      %v2421 = vadd.f32 %v2272, %v2420
      %v2422 = vpop.f32.mrf.mxu0
      %v2423 = vadd.f32 %v2274, %v2422
      %2424 = vmatmul.bf16.gmra.mxu0 %v1205
      %v2425 = vpop.f32.mrf.mxu0
      %v2426 = vadd.f32 %v2277, %v2425
      %v2427 = vpop.f32.mrf.mxu0
      %v2428 = vadd.f32 %v2279, %v2427
      %2429 = vmatmul.bf16.gmra.mxu0 %v1212
      %v2430 = vpop.f32.mrf.mxu0
      %v2431 = vadd.f32 %v2282, %v2430
      %v2432 = vpop.f32.mrf.mxu0
      %v2433 = vadd.f32 %v2284, %v2432
      %2434 = vmatmul.bf16.gmra.mxu0 %v1219
      %v2435 = vpop.f32.mrf.mxu0
      %v2436 = vadd.f32 %v2287, %v2435
      %v2437 = vpop.f32.mrf.mxu0
      %v2438 = vadd.f32 %v2289, %v2437
      %2439 = vmatmul.bf16.gmra.mxu0 %v1226
      %v2440 = vpop.f32.mrf.mxu0
      %v2441 = vadd.f32 %v2292, %v2440
      %v2442 = vpop.f32.mrf.mxu0
      %v2443 = vadd.f32 %v2294, %v2442
      %2444 = vmatmul.bf16.gmra.mxu0 %v1233
      %v2445 = vpop.f32.mrf.mxu0
      %v2446 = vadd.f32 %v2297, %v2445
      %v2447 = vpop.f32.mrf.mxu0
      %v2448 = vadd.f32 %v2299, %v2447
      %2449 = vmatmul.bf16.gmra.mxu0 %v1240
      %v2450 = vpop.f32.mrf.mxu0
      %v2451 = vadd.f32 %v2302, %v2450
      %v2452 = vpop.f32.mrf.mxu0
      %v2453 = vadd.f32 %v2304, %v2452
      %2454 = vmatmul.bf16.gmra.mxu0 %v1247
      %v2455 = vpop.f32.mrf.mxu0
      %v2456 = vadd.f32 %v2307, %v2455
      %v2457 = vpop.f32.mrf.mxu0
      %v2458 = vadd.f32 %v2309, %v2457
      %2459 = vmatmul.bf16.gmra.mxu0 %v1254
      %v2460 = vpop.f32.mrf.mxu0
      %v2461 = vadd.f32 %v2312, %v2460
      %v2462 = vpop.f32.mrf.mxu0
      %v2463 = vadd.f32 %v2314, %v2462
      %2464 = vmatmul.bf16.gmra.mxu0 %v1261
      %v2465 = vpop.f32.mrf.mxu0
      %v2466 = vadd.f32 %v2317, %v2465
      %v2467 = vpop.f32.mrf.mxu0
      %v2468 = vadd.f32 %v2319, %v2467
      %2469 = vmatmul.bf16.gmra.mxu0 %v1268
      %v2470 = vpop.f32.mrf.mxu0
      %v2471 = vadd.f32 %v2322, %v2470
      %v2472 = vpop.f32.mrf.mxu0
      %v2473 = vadd.f32 %v2324, %v2472
      %2474 = vmatmul.bf16.gmra.mxu0 %v1275
      %v2475 = vpop.f32.mrf.mxu0
      %v2476 = vadd.f32 %v2327, %v2475
      %v2477 = vpop.f32.mrf.mxu0
      %v2478 = vadd.f32 %v2329, %v2477
      %2479 = vmatmul.bf16.gmra.mxu0 %v1282
      %v2480 = vpop.f32.mrf.mxu0
      %v2481 = vadd.f32 %v2332, %v2480
      %v2482 = vpop.f32.mrf.mxu0
      %v2483 = vadd.f32 %v2334, %v2482
      %2484 = vmatmul.bf16.gmra.mxu0 %v1289
      %v2485 = vpop.f32.mrf.mxu0
      %v2486 = vadd.f32 %v2337, %v2485
      %v2487 = vpop.f32.mrf.mxu0
      %v2488 = vadd.f32 %v2339, %v2487
      %2489 = vmatmul.bf16.gmra.mxu0 %v1296
      %v2490 = vpop.f32.mrf.mxu0
      %v2491 = vadd.f32 %v2342, %v2490
      %v2492 = vpop.f32.mrf.mxu0
      %v2493 = vadd.f32 %v2344, %v2492
      %2494 = vmatmul.bf16.gmra.mxu0 %v1303
      %v2495 = vpop.f32.mrf.mxu0
      %v2496 = vadd.f32 %v2347, %v2495
      %v2497 = vpop.f32.mrf.mxu0
      %v2498 = vadd.f32 %v2349, %v2497
      %2499 = vmatmul.bf16.gmra.mxu0 %v1310
      %v2500 = vpop.f32.mrf.mxu0
      %v2501 = vadd.f32 %v2352, %v2500
      %v2502 = vpop.f32.mrf.mxu0
      %v2503 = vadd.f32 %v2354, %v2502
      %2504 = vmatmul.bf16.gmra.mxu0 %v1317
      %v2505 = vpop.f32.mrf.mxu0
      %v2506 = vadd.f32 %v2357, %v2505
      %v2507 = vpop.f32.mrf.mxu0
      %v2508 = vadd.f32 %v2359, %v2507
      %2509 = vmatmul.bf16.gmra.mxu0 %v1324
      %v2510 = vpop.f32.mrf.mxu0
      %v2511 = vadd.f32 %v2362, %v2510
      %v2512 = vpop.f32.mrf.mxu0
      %v2513 = vadd.f32 %v2364, %v2512
      %2514 = vmatmul.bf16.gmra.mxu0 %v1331
      %v2515 = vpop.f32.mrf.mxu0
      %v2516 = vadd.f32 %v2367, %v2515
      %v2517 = vpop.f32.mrf.mxu0
      %v2518 = vadd.f32 %v2369, %v2517
      %2519 = vmatmul.bf16.gmra.mxu0 %v1338
      %v2520 = vpop.f32.mrf.mxu0
      %v2521 = vadd.f32 %v2372, %v2520
      %v2522 = vpop.f32.mrf.mxu0
      %v2523 = vadd.f32 %v2374, %v2522
      %2524 = vmatmul.bf16.gmra.mxu0 %v1345
      %v2525 = vpop.f32.mrf.mxu0
      %v2526 = vadd.f32 %v2377, %v2525
      %v2527 = vpop.f32.mrf.mxu0
      %v2528 = vadd.f32 %v2379, %v2527
      %2529 = vmatmul.bf16.gmra.mxu0 %v1352
      %v2530 = vpop.f32.mrf.mxu0
      %v2531 = vadd.f32 %v2382, %v2530
      %v2532 = vpop.f32.mrf.mxu0
      %v2533 = vadd.f32 %v2384, %v2532
      %2534 = vmatmul.bf16.gmra.mxu0 %v1359
      %v2535 = vpop.f32.mrf.mxu0
      %v2536 = vadd.f32 %v2387, %v2535
      %v2537 = vpop.f32.mrf.mxu0
      %v2538 = vadd.f32 %v2389, %v2537
      %2539 = vmatmul.bf16.gmra.mxu0 %v1366
      %v2540 = vpop.f32.mrf.mxu0
      %v2541 = vadd.f32 %v2392, %v2540
      %v2542 = vpop.f32.mrf.mxu0
      %v2543 = vadd.f32 %v2394, %v2542
      %2544 = vmatmul.bf16.gmra.mxu0 %v1373
      %v2545 = vpop.f32.mrf.mxu0
      %v2546 = vadd.f32 %v2397, %v2545
      %v2547 = vpop.f32.mrf.mxu0
      %v2548 = vadd.f32 %v2399, %v2547
      %2549 = vdwg.mxu0
      %2550 = vmatpush.bf16.msra.mxu0 %v1800
      %2551 = vmatpush.bf16.msra.mxu0 %v1799
      %2552 = vmatpush.bf16.msra.mxu0 %v1798
      %2553 = vmatpush.bf16.msra.mxu0 %v1797
      %2554 = vmatpush.bf16.msra.mxu0 %v1796
      %2555 = vmatpush.bf16.msra.mxu0 %v1795
      %2556 = vmatpush.bf16.msra.mxu0 %v1794
      %2557 = vmatpush.bf16.msra.mxu0 %v1793
      %2558 = vmatmul.bf16.gmra.mxu0 %v1185
      %v2559 = vpop.f32.mrf.mxu0
      %v2560 = vadd.f32 %v2411, %v2559
      %v2561 = vpop.f32.mrf.mxu0
      %v2562 = vadd.f32 %v2413, %v2561
      %2563 = vmatmul.bf16.gmra.mxu0 %v1192
      %v2564 = vpop.f32.mrf.mxu0
      %v2565 = vadd.f32 %v2416, %v2564
      %v2566 = vpop.f32.mrf.mxu0
      %v2567 = vadd.f32 %v2418, %v2566
      %2568 = vmatmul.bf16.gmra.mxu0 %v1199
      %v2569 = vpop.f32.mrf.mxu0
      %v2570 = vadd.f32 %v2421, %v2569
      %v2571 = vpop.f32.mrf.mxu0
      %v2572 = vadd.f32 %v2423, %v2571
      %2573 = vmatmul.bf16.gmra.mxu0 %v1206
      %v2574 = vpop.f32.mrf.mxu0
      %v2575 = vadd.f32 %v2426, %v2574
      %v2576 = vpop.f32.mrf.mxu0
      %v2577 = vadd.f32 %v2428, %v2576
      %2578 = vmatmul.bf16.gmra.mxu0 %v1213
      %v2579 = vpop.f32.mrf.mxu0
      %v2580 = vadd.f32 %v2431, %v2579
      %v2581 = vpop.f32.mrf.mxu0
      %v2582 = vadd.f32 %v2433, %v2581
      %2583 = vmatmul.bf16.gmra.mxu0 %v1220
      %v2584 = vpop.f32.mrf.mxu0
      %v2585 = vadd.f32 %v2436, %v2584
      %v2586 = vpop.f32.mrf.mxu0
      %v2587 = vadd.f32 %v2438, %v2586
      %2588 = vmatmul.bf16.gmra.mxu0 %v1227
      %v2589 = vpop.f32.mrf.mxu0
      %v2590 = vadd.f32 %v2441, %v2589
      %v2591 = vpop.f32.mrf.mxu0
      %v2592 = vadd.f32 %v2443, %v2591
      %2593 = vmatmul.bf16.gmra.mxu0 %v1234
      %v2594 = vpop.f32.mrf.mxu0
      %v2595 = vadd.f32 %v2446, %v2594
      %v2596 = vpop.f32.mrf.mxu0
      %v2597 = vadd.f32 %v2448, %v2596
      %2598 = vmatmul.bf16.gmra.mxu0 %v1241
      %v2599 = vpop.f32.mrf.mxu0
      %v2600 = vadd.f32 %v2451, %v2599
      %v2601 = vpop.f32.mrf.mxu0
      %v2602 = vadd.f32 %v2453, %v2601
      %2603 = vmatmul.bf16.gmra.mxu0 %v1248
      %v2604 = vpop.f32.mrf.mxu0
      %v2605 = vadd.f32 %v2456, %v2604
      %v2606 = vpop.f32.mrf.mxu0
      %v2607 = vadd.f32 %v2458, %v2606
      %2608 = vmatmul.bf16.gmra.mxu0 %v1255
      %v2609 = vpop.f32.mrf.mxu0
      %v2610 = vadd.f32 %v2461, %v2609
      %v2611 = vpop.f32.mrf.mxu0
      %v2612 = vadd.f32 %v2463, %v2611
      %2613 = vmatmul.bf16.gmra.mxu0 %v1262
      %v2614 = vpop.f32.mrf.mxu0
      %v2615 = vadd.f32 %v2466, %v2614
      %v2616 = vpop.f32.mrf.mxu0
      %v2617 = vadd.f32 %v2468, %v2616
      %2618 = vmatmul.bf16.gmra.mxu0 %v1269
      %v2619 = vpop.f32.mrf.mxu0
      %v2620 = vadd.f32 %v2471, %v2619
      %v2621 = vpop.f32.mrf.mxu0
      %v2622 = vadd.f32 %v2473, %v2621
      %2623 = vmatmul.bf16.gmra.mxu0 %v1276
      %v2624 = vpop.f32.mrf.mxu0
      %v2625 = vadd.f32 %v2476, %v2624
      %v2626 = vpop.f32.mrf.mxu0
      %v2627 = vadd.f32 %v2478, %v2626
      %2628 = vmatmul.bf16.gmra.mxu0 %v1283
      %v2629 = vpop.f32.mrf.mxu0
      %v2630 = vadd.f32 %v2481, %v2629
      %v2631 = vpop.f32.mrf.mxu0
      %v2632 = vadd.f32 %v2483, %v2631
      %2633 = vmatmul.bf16.gmra.mxu0 %v1290
      %v2634 = vpop.f32.mrf.mxu0
      %v2635 = vadd.f32 %v2486, %v2634
      %v2636 = vpop.f32.mrf.mxu0
      %v2637 = vadd.f32 %v2488, %v2636
      %2638 = vmatmul.bf16.gmra.mxu0 %v1297
      %v2639 = vpop.f32.mrf.mxu0
      %v2640 = vadd.f32 %v2491, %v2639
      %v2641 = vpop.f32.mrf.mxu0
      %v2642 = vadd.f32 %v2493, %v2641
      %2643 = vmatmul.bf16.gmra.mxu0 %v1304
      %v2644 = vpop.f32.mrf.mxu0
      %v2645 = vadd.f32 %v2496, %v2644
      %v2646 = vpop.f32.mrf.mxu0
      %v2647 = vadd.f32 %v2498, %v2646
      %2648 = vmatmul.bf16.gmra.mxu0 %v1311
      %v2649 = vpop.f32.mrf.mxu0
      %v2650 = vadd.f32 %v2501, %v2649
      %v2651 = vpop.f32.mrf.mxu0
      %v2652 = vadd.f32 %v2503, %v2651
      %2653 = vmatmul.bf16.gmra.mxu0 %v1318
      %v2654 = vpop.f32.mrf.mxu0
      %v2655 = vadd.f32 %v2506, %v2654
      %v2656 = vpop.f32.mrf.mxu0
      %v2657 = vadd.f32 %v2508, %v2656
      %2658 = vmatmul.bf16.gmra.mxu0 %v1325
      %v2659 = vpop.f32.mrf.mxu0
      %v2660 = vadd.f32 %v2511, %v2659
      %v2661 = vpop.f32.mrf.mxu0
      %v2662 = vadd.f32 %v2513, %v2661
      %2663 = vmatmul.bf16.gmra.mxu0 %v1332
      %v2664 = vpop.f32.mrf.mxu0
      %v2665 = vadd.f32 %v2516, %v2664
      %v2666 = vpop.f32.mrf.mxu0
      %v2667 = vadd.f32 %v2518, %v2666
      %2668 = vmatmul.bf16.gmra.mxu0 %v1339
      %v2669 = vpop.f32.mrf.mxu0
      %v2670 = vadd.f32 %v2521, %v2669
      %v2671 = vpop.f32.mrf.mxu0
      %v2672 = vadd.f32 %v2523, %v2671
      %2673 = vmatmul.bf16.gmra.mxu0 %v1346
      %v2674 = vpop.f32.mrf.mxu0
      %v2675 = vadd.f32 %v2526, %v2674
      %v2676 = vpop.f32.mrf.mxu0
      %v2677 = vadd.f32 %v2528, %v2676
      %2678 = vmatmul.bf16.gmra.mxu0 %v1353
      %v2679 = vpop.f32.mrf.mxu0
      %v2680 = vadd.f32 %v2531, %v2679
      %v2681 = vpop.f32.mrf.mxu0
      %v2682 = vadd.f32 %v2533, %v2681
      %2683 = vmatmul.bf16.gmra.mxu0 %v1360
      %v2684 = vpop.f32.mrf.mxu0
      %v2685 = vadd.f32 %v2536, %v2684
      %v2686 = vpop.f32.mrf.mxu0
      %v2687 = vadd.f32 %v2538, %v2686
      %2688 = vmatmul.bf16.gmra.mxu0 %v1367
      %v2689 = vpop.f32.mrf.mxu0
      %v2690 = vadd.f32 %v2541, %v2689
      %v2691 = vpop.f32.mrf.mxu0
      %v2692 = vadd.f32 %v2543, %v2691
      %2693 = vmatmul.bf16.gmra.mxu0 %v1374
      %v2694 = vpop.f32.mrf.mxu0
      %v2695 = vadd.f32 %v2546, %v2694
      %v2696 = vpop.f32.mrf.mxu0
      %v2697 = vadd.f32 %v2548, %v2696
      %2698 = vdwg.mxu0
      %2699 = vmatpush.bf16.msra.mxu0 %v1808
      %2700 = vmatpush.bf16.msra.mxu0 %v1807
      %2701 = vmatpush.bf16.msra.mxu0 %v1806
      %2702 = vmatpush.bf16.msra.mxu0 %v1805
      %2703 = vmatpush.bf16.msra.mxu0 %v1804
      %2704 = vmatpush.bf16.msra.mxu0 %v1803
      %2705 = vmatpush.bf16.msra.mxu0 %v1802
      %2706 = vmatpush.bf16.msra.mxu0 %v1801
      %2707 = vmatmul.bf16.gmra.mxu0 %v1186
      %v2708 = vpop.f32.mrf.mxu0
      %v2709 = vadd.f32 %v2560, %v2708
      %v2710 = vpop.f32.mrf.mxu0
      %v2711 = vadd.f32 %v2562, %v2710
      %2712 = vmatmul.bf16.gmra.mxu0 %v1193
      %v2713 = vpop.f32.mrf.mxu0
      %v2714 = vadd.f32 %v2565, %v2713
      %v2715 = vpop.f32.mrf.mxu0
      %v2716 = vadd.f32 %v2567, %v2715
      %2717 = vmatmul.bf16.gmra.mxu0 %v1200
      %v2718 = vpop.f32.mrf.mxu0
      %v2719 = vadd.f32 %v2570, %v2718
      %v2720 = vpop.f32.mrf.mxu0
      %v2721 = vadd.f32 %v2572, %v2720
      %2722 = vmatmul.bf16.gmra.mxu0 %v1207
      %v2723 = vpop.f32.mrf.mxu0
      %v2724 = vadd.f32 %v2575, %v2723
      %v2725 = vpop.f32.mrf.mxu0
      %v2726 = vadd.f32 %v2577, %v2725
      %2727 = vmatmul.bf16.gmra.mxu0 %v1214
      %v2728 = vpop.f32.mrf.mxu0
      %v2729 = vadd.f32 %v2580, %v2728
      %v2730 = vpop.f32.mrf.mxu0
      %v2731 = vadd.f32 %v2582, %v2730
      %2732 = vmatmul.bf16.gmra.mxu0 %v1221
      %v2733 = vpop.f32.mrf.mxu0
      %v2734 = vadd.f32 %v2585, %v2733
      %v2735 = vpop.f32.mrf.mxu0
      %v2736 = vadd.f32 %v2587, %v2735
      %2737 = vmatmul.bf16.gmra.mxu0 %v1228
      %v2738 = vpop.f32.mrf.mxu0
      %v2739 = vadd.f32 %v2590, %v2738
      %v2740 = vpop.f32.mrf.mxu0
      %v2741 = vadd.f32 %v2592, %v2740
      %2742 = vmatmul.bf16.gmra.mxu0 %v1235
      %v2743 = vpop.f32.mrf.mxu0
      %v2744 = vadd.f32 %v2595, %v2743
      %v2745 = vpop.f32.mrf.mxu0
      %v2746 = vadd.f32 %v2597, %v2745
      %2747 = vmatmul.bf16.gmra.mxu0 %v1242
      %v2748 = vpop.f32.mrf.mxu0
      %v2749 = vadd.f32 %v2600, %v2748
      %v2750 = vpop.f32.mrf.mxu0
      %v2751 = vadd.f32 %v2602, %v2750
      %2752 = vmatmul.bf16.gmra.mxu0 %v1249
      %v2753 = vpop.f32.mrf.mxu0
      %v2754 = vadd.f32 %v2605, %v2753
      %v2755 = vpop.f32.mrf.mxu0
      %v2756 = vadd.f32 %v2607, %v2755
      %2757 = vmatmul.bf16.gmra.mxu0 %v1256
      %v2758 = vpop.f32.mrf.mxu0
      %v2759 = vadd.f32 %v2610, %v2758
      %v2760 = vpop.f32.mrf.mxu0
      %v2761 = vadd.f32 %v2612, %v2760
      %2762 = vmatmul.bf16.gmra.mxu0 %v1263
      %v2763 = vpop.f32.mrf.mxu0
      %v2764 = vadd.f32 %v2615, %v2763
      %v2765 = vpop.f32.mrf.mxu0
      %v2766 = vadd.f32 %v2617, %v2765
      %2767 = vmatmul.bf16.gmra.mxu0 %v1270
      %v2768 = vpop.f32.mrf.mxu0
      %v2769 = vadd.f32 %v2620, %v2768
      %v2770 = vpop.f32.mrf.mxu0
      %v2771 = vadd.f32 %v2622, %v2770
      %2772 = vmatmul.bf16.gmra.mxu0 %v1277
      %v2773 = vpop.f32.mrf.mxu0
      %v2774 = vadd.f32 %v2625, %v2773
      %v2775 = vpop.f32.mrf.mxu0
      %v2776 = vadd.f32 %v2627, %v2775
      %2777 = vmatmul.bf16.gmra.mxu0 %v1284
      %v2778 = vpop.f32.mrf.mxu0
      %v2779 = vadd.f32 %v2630, %v2778
      %v2780 = vpop.f32.mrf.mxu0
      %v2781 = vadd.f32 %v2632, %v2780
      %2782 = vmatmul.bf16.gmra.mxu0 %v1291
      %v2783 = vpop.f32.mrf.mxu0
      %v2784 = vadd.f32 %v2635, %v2783
      %v2785 = vpop.f32.mrf.mxu0
      %v2786 = vadd.f32 %v2637, %v2785
      %2787 = vmatmul.bf16.gmra.mxu0 %v1298
      %v2788 = vpop.f32.mrf.mxu0
      %v2789 = vadd.f32 %v2640, %v2788
      %v2790 = vpop.f32.mrf.mxu0
      %v2791 = vadd.f32 %v2642, %v2790
      %2792 = vmatmul.bf16.gmra.mxu0 %v1305
      %v2793 = vpop.f32.mrf.mxu0
      %v2794 = vadd.f32 %v2645, %v2793
      %v2795 = vpop.f32.mrf.mxu0
      %v2796 = vadd.f32 %v2647, %v2795
      %2797 = vmatmul.bf16.gmra.mxu0 %v1312
      %v2798 = vpop.f32.mrf.mxu0
      %v2799 = vadd.f32 %v2650, %v2798
      %v2800 = vpop.f32.mrf.mxu0
      %v2801 = vadd.f32 %v2652, %v2800
      %2802 = vmatmul.bf16.gmra.mxu0 %v1319
      %v2803 = vpop.f32.mrf.mxu0
      %v2804 = vadd.f32 %v2655, %v2803
      %v2805 = vpop.f32.mrf.mxu0
      %v2806 = vadd.f32 %v2657, %v2805
      %2807 = vmatmul.bf16.gmra.mxu0 %v1326
      %v2808 = vpop.f32.mrf.mxu0
      %v2809 = vadd.f32 %v2660, %v2808
      %v2810 = vpop.f32.mrf.mxu0
      %v2811 = vadd.f32 %v2662, %v2810
      %2812 = vmatmul.bf16.gmra.mxu0 %v1333
      %v2813 = vpop.f32.mrf.mxu0
      %v2814 = vadd.f32 %v2665, %v2813
      %v2815 = vpop.f32.mrf.mxu0
      %v2816 = vadd.f32 %v2667, %v2815
      %2817 = vmatmul.bf16.gmra.mxu0 %v1340
      %v2818 = vpop.f32.mrf.mxu0
      %v2819 = vadd.f32 %v2670, %v2818
      %v2820 = vpop.f32.mrf.mxu0
      %v2821 = vadd.f32 %v2672, %v2820
      %2822 = vmatmul.bf16.gmra.mxu0 %v1347
      %v2823 = vpop.f32.mrf.mxu0
      %v2824 = vadd.f32 %v2675, %v2823
      %v2825 = vpop.f32.mrf.mxu0
      %v2826 = vadd.f32 %v2677, %v2825
      %2827 = vmatmul.bf16.gmra.mxu0 %v1354
      %v2828 = vpop.f32.mrf.mxu0
      %v2829 = vadd.f32 %v2680, %v2828
      %v2830 = vpop.f32.mrf.mxu0
      %v2831 = vadd.f32 %v2682, %v2830
      %2832 = vmatmul.bf16.gmra.mxu0 %v1361
      %v2833 = vpop.f32.mrf.mxu0
      %v2834 = vadd.f32 %v2685, %v2833
      %v2835 = vpop.f32.mrf.mxu0
      %v2836 = vadd.f32 %v2687, %v2835
      %2837 = vmatmul.bf16.gmra.mxu0 %v1368
      %v2838 = vpop.f32.mrf.mxu0
      %v2839 = vadd.f32 %v2690, %v2838
      %v2840 = vpop.f32.mrf.mxu0
      %v2841 = vadd.f32 %v2692, %v2840
      %2842 = vmatmul.bf16.gmra.mxu0 %v1375
      %v2843 = vpop.f32.mrf.mxu0
      %v2844 = vadd.f32 %v2695, %v2843
      %v2845 = vpop.f32.mrf.mxu0
      %v2846 = vadd.f32 %v2697, %v2845
      %2847 = vdwg.mxu0
      %2848 = vmatpush.bf16.msra.mxu0 0
      %2849 = vmatpush.bf16.msra.mxu0 0
      %2850 = vmatpush.bf16.msra.mxu0 %v1814
      %2851 = vmatpush.bf16.msra.mxu0 %v1813
      %2852 = vmatpush.bf16.msra.mxu0 %v1812
      %2853 = vmatpush.bf16.msra.mxu0 %v1811
      %2854 = vmatpush.bf16.msra.mxu0 %v1810
      %2855 = vmatpush.bf16.msra.mxu0 %v1809
      %2856 = vmatmul.bf16.gmra.mxu0 %v1871
      %v2857 = vpop.f32.mrf.mxu0
      %v2858 = vadd.f32 %v2709, %v2857
      %v2859 = vpop.f32.mrf.mxu0
      %v2860 = vadd.f32 %v2711, %v2859
      %2861 = vmatmul.bf16.gmra.mxu0 %v1874
      %v2862 = vpop.f32.mrf.mxu0
      %v2863 = vadd.f32 %v2714, %v2862
      %v2864 = vpop.f32.mrf.mxu0
      %v2865 = vadd.f32 %v2716, %v2864
      %2866 = vmatmul.bf16.gmra.mxu0 %v1877
      %v2867 = vpop.f32.mrf.mxu0
      %v2868 = vadd.f32 %v2719, %v2867
      %v2869 = vpop.f32.mrf.mxu0
      %v2870 = vadd.f32 %v2721, %v2869
      %2871 = vmatmul.bf16.gmra.mxu0 %v1880
      %v2872 = vpop.f32.mrf.mxu0
      %v2873 = vadd.f32 %v2724, %v2872
      %v2874 = vpop.f32.mrf.mxu0
      %v2875 = vadd.f32 %v2726, %v2874
      %2876 = vmatmul.bf16.gmra.mxu0 %v1883
      %v2877 = vpop.f32.mrf.mxu0
      %v2878 = vadd.f32 %v2729, %v2877
      %v2879 = vpop.f32.mrf.mxu0
      %v2880 = vadd.f32 %v2731, %v2879
      %2881 = vmatmul.bf16.gmra.mxu0 %v1886
      %v2882 = vpop.f32.mrf.mxu0
      %v2883 = vadd.f32 %v2734, %v2882
      %v2884 = vpop.f32.mrf.mxu0
      %v2885 = vadd.f32 %v2736, %v2884
      %2886 = vmatmul.bf16.gmra.mxu0 %v1889
      %v2887 = vpop.f32.mrf.mxu0
      %v2888 = vadd.f32 %v2739, %v2887
      %v2889 = vpop.f32.mrf.mxu0
      %v2890 = vadd.f32 %v2741, %v2889
      %2891 = vmatmul.bf16.gmra.mxu0 %v1892
      %v2892 = vpop.f32.mrf.mxu0
      %v2893 = vadd.f32 %v2744, %v2892
      %v2894 = vpop.f32.mrf.mxu0
      %v2895 = vadd.f32 %v2746, %v2894
      %2896 = vmatmul.bf16.gmra.mxu0 %v1895
      %v2897 = vpop.f32.mrf.mxu0
      %v2898 = vadd.f32 %v2749, %v2897
      %v2899 = vpop.f32.mrf.mxu0
      %v2900 = vadd.f32 %v2751, %v2899
      %2901 = vmatmul.bf16.gmra.mxu0 %v1898
      %v2902 = vpop.f32.mrf.mxu0
      %v2903 = vadd.f32 %v2754, %v2902
      %v2904 = vpop.f32.mrf.mxu0
      %v2905 = vadd.f32 %v2756, %v2904
      %2906 = vmatmul.bf16.gmra.mxu0 %v1901
      %v2907 = vpop.f32.mrf.mxu0
      %v2908 = vadd.f32 %v2759, %v2907
      %v2909 = vpop.f32.mrf.mxu0
      %v2910 = vadd.f32 %v2761, %v2909
      %2911 = vmatmul.bf16.gmra.mxu0 %v1904
      %v2912 = vpop.f32.mrf.mxu0
      %v2913 = vadd.f32 %v2764, %v2912
      %v2914 = vpop.f32.mrf.mxu0
      %v2915 = vadd.f32 %v2766, %v2914
      %2916 = vmatmul.bf16.gmra.mxu0 %v1907
      %v2917 = vpop.f32.mrf.mxu0
      %v2918 = vadd.f32 %v2769, %v2917
      %v2919 = vpop.f32.mrf.mxu0
      %v2920 = vadd.f32 %v2771, %v2919
      %2921 = vmatmul.bf16.gmra.mxu0 %v1910
      %v2922 = vpop.f32.mrf.mxu0
      %v2923 = vadd.f32 %v2774, %v2922
      %v2924 = vpop.f32.mrf.mxu0
      %v2925 = vadd.f32 %v2776, %v2924
      %2926 = vmatmul.bf16.gmra.mxu0 %v1913
      %v2927 = vpop.f32.mrf.mxu0
      %v2928 = vadd.f32 %v2779, %v2927
      %v2929 = vpop.f32.mrf.mxu0
      %v2930 = vadd.f32 %v2781, %v2929
      %2931 = vmatmul.bf16.gmra.mxu0 %v1916
      %v2932 = vpop.f32.mrf.mxu0
      %v2933 = vadd.f32 %v2784, %v2932
      %v2934 = vpop.f32.mrf.mxu0
      %v2935 = vadd.f32 %v2786, %v2934
      %2936 = vmatmul.bf16.gmra.mxu0 %v1919
      %v2937 = vpop.f32.mrf.mxu0
      %v2938 = vadd.f32 %v2789, %v2937
      %v2939 = vpop.f32.mrf.mxu0
      %v2940 = vadd.f32 %v2791, %v2939
      %2941 = vmatmul.bf16.gmra.mxu0 %v1922
      %v2942 = vpop.f32.mrf.mxu0
      %v2943 = vadd.f32 %v2794, %v2942
      %v2944 = vpop.f32.mrf.mxu0
      %v2945 = vadd.f32 %v2796, %v2944
      %2946 = vmatmul.bf16.gmra.mxu0 %v1925
      %v2947 = vpop.f32.mrf.mxu0
      %v2948 = vadd.f32 %v2799, %v2947
      %v2949 = vpop.f32.mrf.mxu0
      %v2950 = vadd.f32 %v2801, %v2949
      %2951 = vmatmul.bf16.gmra.mxu0 %v1928
      %v2952 = vpop.f32.mrf.mxu0
      %v2953 = vadd.f32 %v2804, %v2952
      %v2954 = vpop.f32.mrf.mxu0
      %v2955 = vadd.f32 %v2806, %v2954
      %2956 = vmatmul.bf16.gmra.mxu0 %v1931
      %v2957 = vpop.f32.mrf.mxu0
      %v2958 = vadd.f32 %v2809, %v2957
      %v2959 = vpop.f32.mrf.mxu0
      %v2960 = vadd.f32 %v2811, %v2959
      %2961 = vmatmul.bf16.gmra.mxu0 %v1934
      %v2962 = vpop.f32.mrf.mxu0
      %v2963 = vadd.f32 %v2814, %v2962
      %v2964 = vpop.f32.mrf.mxu0
      %v2965 = vadd.f32 %v2816, %v2964
      %2966 = vmatmul.bf16.gmra.mxu0 %v1937
      %v2967 = vpop.f32.mrf.mxu0
      %v2968 = vadd.f32 %v2819, %v2967
      %v2969 = vpop.f32.mrf.mxu0
      %v2970 = vadd.f32 %v2821, %v2969
      %2971 = vmatmul.bf16.gmra.mxu0 %v1940
      %v2972 = vpop.f32.mrf.mxu0
      %v2973 = vadd.f32 %v2824, %v2972
      %v2974 = vpop.f32.mrf.mxu0
      %v2975 = vadd.f32 %v2826, %v2974
      %2976 = vmatmul.bf16.gmra.mxu0 %v1943
      %v2977 = vpop.f32.mrf.mxu0
      %v2978 = vadd.f32 %v2829, %v2977
      %v2979 = vpop.f32.mrf.mxu0
      %v2980 = vadd.f32 %v2831, %v2979
      %2981 = vmatmul.bf16.gmra.mxu0 %v1946
      %v2982 = vpop.f32.mrf.mxu0
      %v2983 = vadd.f32 %v2834, %v2982
      %v2984 = vpop.f32.mrf.mxu0
      %v2985 = vadd.f32 %v2836, %v2984
      %2986 = vmatmul.bf16.gmra.mxu0 %v1949
      %v2987 = vpop.f32.mrf.mxu0
      %v2988 = vadd.f32 %v2839, %v2987
      %v2989 = vpop.f32.mrf.mxu0
      %v2990 = vadd.f32 %v2841, %v2989
      %2991 = vmatmul.bf16.gmra.mxu0 %v1952
      %v2992 = vpop.f32.mrf.mxu0
      %v2993 = vadd.f32 %v2844, %v2992
      %v2994 = vpop.f32.mrf.mxu0
      %v2995 = vadd.f32 %v2846, %v2994
      %2996 = vdwg.mxu0
      %v2997 = vmax.f32 %v2858, 0.0
      %v2998 = vmax.f32 %v2860, 0.0
      %v2999 = vmax.f32 %v2863, 0.0
      %v3000 = vmax.f32 %v2865, 0.0
      %v3001 = vmax.f32 %v2868, 0.0
      %v3002 = vmax.f32 %v2870, 0.0
      %v3003 = vmax.f32 %v2873, 0.0
      %v3004 = vmax.f32 %v2875, 0.0
      %v3005 = vmax.f32 %v2878, 0.0
      %v3006 = vmax.f32 %v2880, 0.0
      %v3007 = vmax.f32 %v2883, 0.0
      %v3008 = vmax.f32 %v2885, 0.0
      %v3009 = vmax.f32 %v2888, 0.0
      %v3010 = vmax.f32 %v2890, 0.0
      %v3011 = vmax.f32 %v2893, 0.0
      %v3012 = vmax.f32 %v2895, 0.0
      %v3013 = vmax.f32 %v2898, 0.0
      %v3014 = vmax.f32 %v2900, 0.0
      %v3015 = vmax.f32 %v2903, 0.0
      %v3016 = vmax.f32 %v2905, 0.0
      %v3017 = vmax.f32 %v2908, 0.0
      %v3018 = vmax.f32 %v2910, 0.0
      %v3019 = vmax.f32 %v2913, 0.0
      %v3020 = vmax.f32 %v2915, 0.0
      %v3021 = vmax.f32 %v2918, 0.0
      %v3022 = vmax.f32 %v2920, 0.0
      %v3023 = vmax.f32 %v2923, 0.0
      %v3024 = vmax.f32 %v2925, 0.0
      %v3025 = vmax.f32 %v2928, 0.0
      %v3026 = vmax.f32 %v2930, 0.0
      %v3027 = vmax.f32 %v2933, 0.0
      %v3028 = vmax.f32 %v2935, 0.0
      %v3029 = vmax.f32 %v2938, 0.0
      %v3030 = vmax.f32 %v2940, 0.0
      %v3031 = vmax.f32 %v2943, 0.0
      %v3032 = vmax.f32 %v2945, 0.0
      %v3033 = vmax.f32 %v2948, 0.0
      %v3034 = vmax.f32 %v2950, 0.0
      %v3035 = vmax.f32 %v2953, 0.0
      %v3036 = vmax.f32 %v2955, 0.0
      %v3037 = vmax.f32 %v2958, 0.0
      %v3038 = vmax.f32 %v2960, 0.0
      %v3039 = vmax.f32 %v2963, 0.0
      %v3040 = vmax.f32 %v2965, 0.0
      %v3041 = vmax.f32 %v2968, 0.0
      %v3042 = vmax.f32 %v2970, 0.0
      %v3043 = vmax.f32 %v2973, 0.0
      %v3044 = vmax.f32 %v2975, 0.0
      %v3045 = vmax.f32 %v2978, 0.0
      %v3046 = vmax.f32 %v2980, 0.0
      %v3047 = vmax.f32 %v2983, 0.0
      %v3048 = vmax.f32 %v2985, 0.0
      %v3049 = vmax.f32 %v2988, 0.0
      %v3050 = vmax.f32 %v2990, 0.0
      %v3051 = vmax.f32 %v2993, 0.0
      %v3052 = vmax.f32 %v2995, 0.0
      %3053 = vst [vmem:[%s226] sm:$0xff] %v2997
      %3054 = vst [vmem:[%s226 + $0x8] sm:$0xff] %v2998
      %3055 = vst [vmem:[%s226 + $0x10] sm:$0xff] %v2999
      %3056 = vst [vmem:[%s226 + $0x18] sm:$0xff] %v3000
      %3057 = vst [vmem:[%s226 + $0x20] sm:$0xff] %v3001
      %3058 = vst [vmem:[%s226 + $0x28] sm:$0xff] %v3002
      %3059 = vst [vmem:[%s226 + $0x30] sm:$0xff] %v3003
      %3060 = vst [vmem:[%s226 + $0x38] sm:$0xff] %v3004
      %3061 = vst [vmem:[%s226 + $0x40] sm:$0xff] %v3005
      %3062 = vst [vmem:[%s226 + $0x48] sm:$0xff] %v3006
      %3063 = vst [vmem:[%s226 + $0x50] sm:$0xff] %v3007
      %3064 = vst [vmem:[%s226 + $0x58] sm:$0xff] %v3008
      %3065 = vst [vmem:[%s226 + $0x60] sm:$0xff] %v3009
      %3066 = vst [vmem:[%s226 + $0x68] sm:$0xff] %v3010
      %3067 = vst [vmem:[%s226 + $0x70] sm:$0xff] %v3011
      %3068 = vst [vmem:[%s226 + $0x78] sm:$0xff] %v3012
      %3069 = vst [vmem:[%s226 + $0x80] sm:$0xff] %v3013
      %3070 = vst [vmem:[%s226 + $0x88] sm:$0xff] %v3014
      %3071 = vst [vmem:[%s226 + $0x90] sm:$0xff] %v3015
      %3072 = vst [vmem:[%s226 + $0x98] sm:$0xff] %v3016
      %3073 = vst [vmem:[%s226 + $0xa0] sm:$0xff] %v3017
      %3074 = vst [vmem:[%s226 + $0xa8] sm:$0xff] %v3018
      %3075 = vst [vmem:[%s226 + $0xb0] sm:$0xff] %v3019
      %3076 = vst [vmem:[%s226 + $0xb8] sm:$0xff] %v3020
      %3077 = vst [vmem:[%s226 + $0xc0] sm:$0xff] %v3021
      %3078 = vst [vmem:[%s226 + $0xc8] sm:$0xff] %v3022
      %3079 = vst [vmem:[%s226 + $0xd0] sm:$0xff] %v3023
      %3080 = vst [vmem:[%s226 + $0xd8] sm:$0xff] %v3024
      %3081 = vst [vmem:[%s226 + $0xe0] sm:$0xff] %v3025
      %3082 = vst [vmem:[%s226 + $0xe8] sm:$0xff] %v3026
      %3083 = vst [vmem:[%s226 + $0xf0] sm:$0xff] %v3027
      %3084 = vst [vmem:[%s226 + $0xf8] sm:$0xff] %v3028
      %3085 = vst [vmem:[%s226 + $0x100] sm:$0xff] %v3029
      %3086 = vst [vmem:[%s226 + $0x108] sm:$0xff] %v3030
      %3087 = vst [vmem:[%s226 + $0x110] sm:$0xff] %v3031
      %3088 = vst [vmem:[%s226 + $0x118] sm:$0xff] %v3032
      %3089 = vst [vmem:[%s226 + $0x120] sm:$0xff] %v3033
      %3090 = vst [vmem:[%s226 + $0x128] sm:$0xff] %v3034
      %3091 = vst [vmem:[%s226 + $0x130] sm:$0xff] %v3035
      %3092 = vst [vmem:[%s226 + $0x138] sm:$0xff] %v3036
      %3093 = vst [vmem:[%s226 + $0x140] sm:$0xff] %v3037
      %3094 = vst [vmem:[%s226 + $0x148] sm:$0xff] %v3038
      %3095 = vst [vmem:[%s226 + $0x150] sm:$0xff] %v3039
      %3096 = vst [vmem:[%s226 + $0x158] sm:$0xff] %v3040
      %3097 = vst [vmem:[%s226 + $0x160] sm:$0xff] %v3041
      %3098 = vst [vmem:[%s226 + $0x168] sm:$0xff] %v3042
      %3099 = vst [vmem:[%s226 + $0x170] sm:$0xff] %v3043
      %3100 = vst [vmem:[%s226 + $0x178] sm:$0xff] %v3044
      %3101 = vst [vmem:[%s226 + $0x180] sm:$0xff] %v3045
      %3102 = vst [vmem:[%s226 + $0x188] sm:$0xff] %v3046
      %3103 = vst [vmem:[%s226 + $0x190] sm:$0xff] %v3047
      %3104 = vst [vmem:[%s226 + $0x198] sm:$0xff] %v3048
      %3105 = vst [vmem:[%s226 + $0x1a0] sm:$0xff] %v3049
      %3106 = vst [vmem:[%s226 + $0x1a8] sm:$0xff] %v3050
      %3107 = vst [vmem:[%s226 + $0x1b0] sm:$0xff] %v3051
      %3108 = vst [vmem:[%s226 + $0x1b8] sm:$0xff] %v3052
      %s3109 = smul.u32 56, %s18
      %p3110 = scmp.lt.s32.totalorder %s3109, 671
      %s3111 = scalar_select %p3110, %s3109, 671
      %p3112 = scmp.lt.s32.totalorder %s19, 0
      %s3113 = scalar_select %p3112, %s19, 0
      %s3114 = sadd.s32 %s3113, %s3111
      %s3115 = smul.addr %s3114, 8
      %s3116 = scalar_lea.vmem %s3, %s3115
      // Predicated region
      $region33: #{voxel2d_forward.3} parent=31 // pred_check
        %p3117 = pneg %p124
      $region34: #{voxel2d_forward.3} parent=31 // pred_check_branch
        %3119 = sbr.rel (%p3117) target = $region36
      $region35: #{voxel2d_forward.3} parent=31 // pred_region
        %s3120 = smul.u32 56, %s18
      $region36: #{voxel2d_forward.3} parent=31 // pred_fallthru
        _
    $region32: #{voxel2d_forward.3} parent=5 // pred_fallthru
      _
    %p3121 = scmp.le.s32.totalorder 2, %s9
    // Predicated region
    $region37: #{voxel2d_forward.3} parent=5 // pred_check
      %p3122 = pneg %p3121
    $region38: #{voxel2d_forward.3} parent=5 // pred_check_branch
      %3124 = sbr.rel (%p3122) target = $region40
    $region39: #{voxel2d_forward.3} parent=5 // pred_region
      %s3125 = ssub.s32 %s9, 2
      // Predicated region
      $region41: #{voxel2d_forward.3} parent=39 // pred_check
        %p3126 = pneg %p130
      $region42: #{voxel2d_forward.3} parent=39 // pred_check_branch
        %3128 = sbr.rel (%p3126) target = $region44
      $region43: #{voxel2d_forward.3} parent=39 // pred_region
        %s3129 = smul.u32 56, %s20
        %p3130 = scmp.lt.s32.totalorder %s3129, 671
        %s3131 = scalar_select %p3130, %s3129, 671
        %p3132 = scmp.lt.s32.totalorder %s21, 0
        %s3133 = scalar_select %p3132, %s21, 0
        %s3134 = sadd.s32 %s3133, %s3131
        %s3135 = smul.addr %s3134, 8
        %s3136 = scalar_lea.vmem %s3, %s3135
      $region44: #{voxel2d_forward.3} parent=39 // pred_fallthru
        _
    $region40: #{voxel2d_forward.3} parent=5 // pred_fallthru
      _
  $region6: #{voxel2d_forward.3} parent=0 // loop_footer
    %s13 = sadd.s32 1, %s9
  $region7: #{voxel2d_forward.3} parent=0 // loop_footer_branch
    %8 = sbr.rel target = $region3
  $region8: #{voxel2d_forward.3} parent=0 // loop_exit
    _

</llo_original>
